<compile_context>
chip_gen: v7x
topology: tpu7x:2x2x1
jax: 0.10.0
libtpu: 0.0.40
codegen_flags: <defaults>
</compile_context>

<pallas_src>
import functools

import jax
import jax.numpy as jnp
from jax import lax
from jax.experimental import pallas as pl
from jax.experimental.pallas import tpu as pltpu


def _round_up(v, m):
    return ((v + m - 1) // m) * m


# ----------------------------- Pallas kernel --------------------------------


def _fused_conv_kernel(*refs, group_cfg, extra_mode, apply_relu):
    """One output M-tile of  sum_g sum_t act_g[m + off_{g,t}] @ W_{g,t}
       (+ optional residual / fused 1x1-conv term)
       -> + BN shift -> [ReLU] -> * interior-mask -> store.

    Ref order (built by _fused_conv):
      per group: n_blocks consecutive (tm, C) window refs, then (T, C, Cout)
      weight ref; optional extra refs; shift (1, Cout); mask (tm, 1);
      out (tm, Cout).
    """
    refs = list(refs)
    out_ref = refs.pop()
    mask_ref = refs.pop()
    shift_ref = refs.pop()
    tm = out_ref.shape[0]

    idx = 0
    acc = None
    for n_blocks, starts in group_cfg:
        blocks = [refs[idx + k][...] for k in range(n_blocks)]
        w_ref = refs[idx + n_blocks]
        idx += n_blocks + 1
        slab = blocks[0] if n_blocks == 1 else jnp.concatenate(blocks, axis=0)
        for t, s in enumerate(starts):
            contrib = jnp.dot(slab[s:s + tm, :], w_ref[t],
                              preferred_element_type=jnp.float32)
            acc = contrib if acc is None else acc + contrib

    if extra_mode == "identity":
        acc = acc + refs[idx][...].astype(jnp.float32)
    elif extra_mode == "matmul":
        acc = acc + jnp.dot(refs[idx][...], refs[idx + 1][...],
                            preferred_element_type=jnp.float32)

    out = acc + shift_ref[...]
    if apply_relu:
        out = jnp.maximum(out, 0.0)
    out_ref[...] = (out * mask_ref[...]).astype(out_ref.dtype)


def _fused_conv(groups, extra, shift_padded, mask, *, tm, m_pad, cout_pad,
                apply_relu, out_dtype):
    """groups: list of (act_store, n_blocks, first_block, slab_base, offsets,
    w_taps).  act_store is in the guarded padded-flat layout: tm zero/garbage
    guard rows, then m_pad image rows, then tm guard rows."""
    n_steps = m_pad // tm
    inputs, in_specs, group_cfg = [], [], []
    for act, n_blocks, first_blk, slab_base, offsets, w_taps in groups:
        c = act.shape[1]
        for k in range(n_blocks):
            inputs.append(act)
            in_specs.append(
                pl.BlockSpec((tm, c), lambda i, _b=first_blk + k: (i + _b, 0)))
        inputs.append(w_taps)                                  # resident weights
        in_specs.append(pl.BlockSpec(w_taps.shape, lambda i: (0, 0, 0)))
        group_cfg.append((n_blocks, tuple(slab_base + o for o in offsets)))

    extra_mode = None
    if extra is not None:
        extra_mode = extra[0]
        if extra_mode == "identity":
            res = extra[1]
            inputs.append(res)
            in_specs.append(pl.BlockSpec((tm, res.shape[1]),
                                         lambda i: (i + 1, 0)))
        else:  # "matmul": fused 1x1-conv right branch
            r_in, wr = extra[1], extra[2]
            inputs.append(r_in)
            in_specs.append(pl.BlockSpec((tm, r_in.shape[1]),
                                         lambda i: (i + 1, 0)))
            inputs.append(wr)                                  # resident weight
            in_specs.append(pl.BlockSpec(wr.shape, lambda i: (0, 0)))

    inputs.append(shift_padded.reshape(1, cout_pad).astype(jnp.float32))
    in_specs.append(pl.BlockSpec((1, cout_pad), lambda i: (0, 0)))
    inputs.append(mask)
    in_specs.append(pl.BlockSpec((tm, 1), lambda i: (i, 0)))

    kernel = functools.partial(_fused_conv_kernel, group_cfg=tuple(group_cfg),
                               extra_mode=extra_mode, apply_relu=apply_relu)
    return pl.pallas_call(
        kernel,
        out_shape=jax.ShapeDtypeStruct((m_pad + 2 * tm, cout_pad), out_dtype),
        grid_spec=pltpu.PrefetchScalarGridSpec(
            num_scalar_prefetch=0,
            grid=(n_steps,),
            in_specs=in_specs,
            out_specs=pl.BlockSpec((tm, cout_pad), lambda i: (i + 1, 0)),
            scratch_shapes=[],
        ),
        compiler_params=pltpu.CompilerParams(
            dimension_semantics=("parallel",),
            vmem_limit_bytes=32 * 1024 * 1024,
        ),
    )(*inputs)


# ------------------------------ host-side glue -------------------------------


def _pick_tm(m_rows, min_tm):
    """Minimize M-padding waste, then keep >=2 parallel tiles (v7x megacore),
    then prefer the biggest tile."""
    cands = [c for c in (512, 384, 256, 128) if c >= min_tm]
    if not cands:
        return _round_up(min_tm, 128)

    def key(c):
        mp = _round_up(m_rows, c)
        return (mp, 0 if mp // c >= 2 else 1, -c)

    return min(cands, key=key)


def _guarded_flat(padded_nhwc, tm, m, m_pad):
    flat = padded_nhwc.reshape(m, padded_nhwc.shape[-1])
    return jnp.pad(flat, ((tm, m_pad - m + tm), (0, 0)))


def _to_padded_flat(x_nhwc, tm, c_pad):
    n, h, w, c = x_nhwc.shape
    hp, wp = h + 2, w + 2
    m = n * hp * wp
    m_pad = _round_up(m, tm)
    xp = jnp.pad(x_nhwc, ((0, 0), (1, 1), (1, 1), (0, c_pad - c))
                 ).astype(jnp.bfloat16)
    return _guarded_flat(xp, tm, m, m_pad), m, m_pad, hp, wp


def _polyphase_planes(x_nhwc, ho, wo, tm, c_pad):
    """Split x (3x3 conv, pad=1, stride=2) into its 4 stride-2 polyphase
    planes, each stored in the guarded padded-flat layout of the *output*
    spatial grid (ho+2, wo+2), image data at offset (1, 1)."""
    n, h, w, c = x_nhwc.shape
    pb = max(1, 2 * ho + 1 - h)     # bottom/right pad so strided slices exist
    pr = max(1, 2 * wo + 1 - w)
    xp = jnp.pad(x_nhwc, ((0, 0), (1, pb), (1, pr), (0, c_pad - c))
                 ).astype(jnp.bfloat16)
    hop, wop = ho + 2, wo + 2
    m = n * hop * wop
    m_pad = _round_up(m, tm)
    planes = {}
    for pi in (0, 1):
        for pj in (0, 1):
            sub = xp[:, pi:pi + 2 * ho + 1:2, pj:pj + 2 * wo + 1:2, :]
            sub = jnp.pad(sub, ((0, 0), (1, 0), (1, 0), (0, 0)))
            planes[(pi, pj)] = _guarded_flat(sub, tm, m, m_pad)
    return planes, m, m_pad, hop, wop


def _interior_mask(n, hp, wp, m_pad):
    row = (jnp.arange(hp) >= 1) & (jnp.arange(hp) <= hp - 2)
    col = (jnp.arange(wp) >= 1) & (jnp.arange(wp) <= wp - 2)
    m2d = (row[:, None] & col[None, :]).astype(jnp.float32)
    m = jnp.broadcast_to(m2d[None], (n, hp, wp)).reshape(n * hp * wp, 1)
    return jnp.pad(m, ((0, m_pad - n * hp * wp), (0, 0)))


def _fold_bn(bn, eps=1e-5):
    scale = bn["weight"] / jnp.sqrt(bn["running_var"] + eps)
    shift = bn["bias"] - bn["running_mean"] * scale
    return scale, shift


def _tap_weights(w_oihw, scale, taps, cin_pad, cout_pad):
    """(Cout, Cin, 3, 3) -> (len(taps), cin_pad, cout_pad) bf16, BN-scaled."""
    cout, cin = w_oihw.shape[:2]
    mats = [jnp.transpose(w_oihw[:, :, di, dj] * scale[:, None], (1, 0))
            for di, dj in taps]
    wt = jnp.stack(mats, axis=0)
    wt = jnp.pad(wt, ((0, 0), (0, cin_pad - cin), (0, cout_pad - cout)))
    return wt.astype(jnp.bfloat16)


# ------------------------------ forward pass ---------------------------------


@functools.partial(jax.jit, static_argnums=2)
def residual_block_forward(x_nchw, params, first_stride):
    """x: (N, in_feats, H, W) -> (N, out_feats, H/stride, W/stride)."""
    assert first_stride in (1, 2), "only first_stride in {1, 2} supported"
    x = jnp.transpose(x_nchw, (0, 2, 3, 1))          # NCHW -> NHWC
    n, h, w, cin = x.shape
    cout = params["conv1_w"].shape[0]
    cin_pad = _round_up(cin, 128)
    cout_pad = _round_up(cout, 128)

    s1, b1 = _fold_bn(params["bn1"])
    s2, b2 = _fold_bn(params["bn2"])
    b1p = jnp.pad(b1, (0, cout_pad - cout))
    b2p = jnp.pad(b2, (0, cout_pad - cout))
    taps9 = [(di, dj) for di in range(3) for dj in range(3)]

    if first_stride == 1:
        assert cin == cout, "identity residual requires in_feats == out_feats"
        hp, wp = h + 2, w + 2
        tm = _pick_tm(n * hp * wp, wp + 1)
        x_flat, m, m_pad, hp, wp = _to_padded_flat(x, tm, cin_pad)
        mask = _interior_mask(n, hp, wp, m_pad)
        off9 = [(di - 1) * wp + (dj - 1) for di, dj in taps9]

        w1 = _tap_weights(params["conv1_w"], s1, taps9, cin_pad, cout_pad)
        y1 = _fused_conv([(x_flat, 3, 0, tm, off9, w1)], None, b1p, mask,
                         tm=tm, m_pad=m_pad, cout_pad=cout_pad,
                         apply_relu=True, out_dtype=jnp.bfloat16)

        w2 = _tap_weights(params["conv2_w"], s2, taps9, cout_pad, cout_pad)
        out_store = _fused_conv([(y1, 3, 0, tm, off9, w2)],
                                ("identity", x_flat), b2p, mask,
                                tm=tm, m_pad=m_pad, cout_pad=cout_pad,
                                apply_relu=True, out_dtype=jnp.float32)
        hop, wop = hp, wp
    else:
        ho = (h - 1) // 2 + 1
        wo = (w - 1) // 2 + 1
        hop, wop = ho + 2, wo + 2
        tm = _pick_tm(n * hop * wop, wop + 1)
        planes, m, m_pad, hop, wop = _polyphase_planes(x, ho, wo, tm, cin_pad)
        mask = _interior_mask(n, hop, wop, m_pad)

        # conv1 (3x3, stride 2, pad 1) via 4 polyphase planes, 9 taps total.
        groups1 = []
        for (pi, pj), arr in planes.items():
            taps = [(di, dj) for di, dj in taps9
                    if di % 2 == pi and dj % 2 == pj]
            offs = [(di // 2) * wop + (dj // 2) for di, dj in taps]
            wg = _tap_weights(params["conv1_w"], s1, taps, cin_pad, cout_pad)
            groups1.append((arr, 2, 1, 0, offs, wg))
        y1 = _fused_conv(groups1, None, b1p, mask,
                         tm=tm, m_pad=m_pad, cout_pad=cout_pad,
                         apply_relu=True, out_dtype=jnp.bfloat16)

        # conv2 (3x3, stride 1) + fused right branch (1x1 s2 conv + BN) that
        # reads the (1,1) polyphase plane of x directly -- no concatenation.
        sr, br = _fold_bn(params["bn_r"])
        wr = jnp.transpose(params["conv_r_w"][:, :, 0, 0] * sr[:, None], (1, 0))
        wr = jnp.pad(wr, ((0, cin_pad - cin), (0, cout_pad - cout))
                     ).astype(jnp.bfloat16)
        brp = jnp.pad(br, (0, cout_pad - cout))

        off9 = [(di - 1) * wop + (dj - 1) for di, dj in taps9]
        w2 = _tap_weights(params["conv2_w"], s2, taps9, cout_pad, cout_pad)
        out_store = _fused_conv([(y1, 3, 0, tm, off9, w2)],
                                ("matmul", planes[(1, 1)], wr), b2p + brp, mask,
                                tm=tm, m_pad=m_pad, cout_pad=cout_pad,
                                apply_relu=True, out_dtype=jnp.float32)

    out = out_store[tm:tm + n * hop * wop, :cout]
    out = out.reshape(n, hop, wop, cout)[:, 1:hop - 1, 1:wop - 1, :]
    return jnp.transpose(out, (0, 3, 1, 2))          # NHWC -> NCHW


# --------------------- deterministic parameter init --------------------------


def init_params(key, in_feats, out_feats, first_stride):
    ks = jax.random.split(key, 16)

    def conv_w(k, co, ci, kh, kw):
        fan_in = ci * kh * kw
        bound = 1.0 / (fan_in ** 0.5)
        return jax.random.uniform(k, (co, ci, kh, kw), jnp.float32, -bound, bound)

    def bn_params(k0, k1, k2, k3, c):
        return {
            "weight": 1.0 + 0.1 * jax.random.normal(k0, (c,), jnp.float32),
            "bias": 0.1 * jax.random.normal(k1, (c,), jnp.float32),
            "running_mean": 0.1 * jax.random.normal(k2, (c,), jnp.float32),
            "running_var": jax.random.uniform(k3, (c,), jnp.float32, 0.5, 1.5),
        }

    params = {
        "conv1_w": conv_w(ks[0], out_feats, in_feats, 3, 3),
        "bn1": bn_params(ks[1], ks[2], ks[3], ks[4], out_feats),
        "conv2_w": conv_w(ks[5], out_feats, out_feats, 3, 3),
        "bn2": bn_params(ks[6], ks[7], ks[8], ks[9], out_feats),
    }
    if first_stride > 1:
        params["conv_r_w"] = conv_w(ks[10], out_feats, in_feats, 1, 1)
        params["bn_r"] = bn_params(ks[11], ks[12], ks[13], ks[14], out_feats)
    return params


# ------------------------- plain-JAX reference -------------------------------


def reference_forward(x, params, first_stride, eps=1e-5):
    def conv(x, w, stride, pad):
        return lax.conv_general_dilated(
            x, w, (stride, stride), [(pad, pad), (pad, pad)],
            dimension_numbers=("NCHW", "OIHW", "NCHW"))

    def bn(x, p):
        sc = p["weight"] / jnp.sqrt(p["running_var"] + eps)
        sh = p["bias"] - p["running_mean"] * sc
        return x * sc[None, :, None, None] + sh[None, :, None, None]

    left = jnp.maximum(bn(conv(x, params["conv1_w"], first_stride, 1),
                          params["bn1"]), 0.0)
    left = bn(conv(left, params["conv2_w"], 1, 1), params["bn2"])
    if first_stride > 1:
        right = bn(conv(x, params["conv_r_w"], first_stride, 0), params["bn_r"])
    else:
        right = x
    return jnp.maximum(left + right, 0.0)


# --------------------------------- main ---------------------------------------


if __name__ == "__main__":
    key = jax.random.PRNGKey(0)
    k_x, k_p1, k_p2, k_p3 = jax.random.split(key, 4)

    # bf16 MXU operands / bf16 inter-conv activation -> loosened tolerance.
    RTOL = ATOL = 5e-2

    # Case 1: downsampling block (first_stride=2, fused 1x1-conv right branch).
    N, in_feats, out_feats, H, W, stride = 2, 4, 8, 16, 16, 2
    x = jax.random.normal(k_x, (N, in_feats, H, W), jnp.float32)
    params = init_params(k_p1, in_feats, out_feats, stride)
    out = jax.block_until_ready(residual_block_forward(x, params, stride))
    assert out.shape == (N, out_feats, H // stride, W // stride), out.shape
    ref = reference_forward(x, params, stride)
    assert jnp.allclose(out, ref, rtol=RTOL, atol=ATOL), \
        float(jnp.max(jnp.abs(out - ref)))

    # Case 2: identity right branch (first_stride=1, in_feats == out_feats).
    params_id = init_params(k_p2, out_feats, out_feats, 1)
    x2 = jax.random.normal(k_x, (N, out_feats, H, W), jnp.float32)
    out2 = jax.block_until_ready(residual_block_forward(x2, params_id, 1))
    ref2 = reference_forward(x2, params_id, 1)
    assert out2.shape == (N, out_feats, H, W)
    assert jnp.allclose(out2, ref2, rtol=RTOL, atol=ATOL), \
        float(jnp.max(jnp.abs(out2 - ref2)))

    # Case 3: wider block (multi-128 Cout, multiple M tiles, stride 2).
    in3, out3 = 32, 160
    params3 = init_params(k_p3, in3, out3, 2)
    x3 = jax.random.normal(k_x, (N, in3, H, W), jnp.float32)
    out3_arr = jax.block_until_ready(residual_block_forward(x3, params3, 2))
    ref3 = reference_forward(x3, params3, 2)
    assert out3_arr.shape == (N, out3, H // 2, W // 2)
    assert jnp.allclose(out3_arr, ref3, rtol=RTOL, atol=ATOL), \
        float(jnp.max(jnp.abs(out3_arr - ref3)))

    print("KERNEL_OK")
</pallas_src>

<mosaic_0001>
module attributes {stable_mosaic.version = 11 : i64} {
  func.func @_fused_conv_kernel(%arg0: i32, %arg1: memref<128x128xbf16, #tpu.memory_space<vmem>>, %arg2: memref<128x128xbf16, #tpu.memory_space<vmem>>, %arg3: memref<4x128x128xbf16, #tpu.memory_space<vmem>>, %arg4: memref<128x128xbf16, #tpu.memory_space<vmem>>, %arg5: memref<128x128xbf16, #tpu.memory_space<vmem>>, %arg6: memref<2x128x128xbf16, #tpu.memory_space<vmem>>, %arg7: memref<128x128xbf16, #tpu.memory_space<vmem>>, %arg8: memref<128x128xbf16, #tpu.memory_space<vmem>>, %arg9: memref<2x128x128xbf16, #tpu.memory_space<vmem>>, %arg10: memref<128x128xbf16, #tpu.memory_space<vmem>>, %arg11: memref<128x128xbf16, #tpu.memory_space<vmem>>, %arg12: memref<1x128x128xbf16, #tpu.memory_space<vmem>>, %arg13: memref<1x128xf32, #tpu.memory_space<vmem>>, %arg14: memref<128x1xf32, #tpu.memory_space<vmem>>, %arg15: memref<128x128xbf16, #tpu.memory_space<vmem>>) attributes {dimension_semantics = [#tpu.dimension_semantics<parallel>], iteration_bounds = array<i64: 2>, scalar_prefetch = 0 : i64, scratch_operands = 0 : i64, tpu.core_type = #tpu.core_type<tc>, window_params = [{transform_indices = @transform_0, window_bounds = array<i64: 128, 128>}, {transform_indices = @transform_1, window_bounds = array<i64: 128, 128>}, {pipeline_mode = #tpu.pipeline_mode<synchronous>, transform_indices = @transform_2, window_bounds = array<i64: 4, 128, 128>}, {transform_indices = @transform_3, window_bounds = array<i64: 128, 128>}, {transform_indices = @transform_4, window_bounds = array<i64: 128, 128>}, {pipeline_mode = #tpu.pipeline_mode<synchronous>, transform_indices = @transform_5, window_bounds = array<i64: 2, 128, 128>}, {transform_indices = @transform_6, window_bounds = array<i64: 128, 128>}, {transform_indices = @transform_7, window_bounds = array<i64: 128, 128>}, {pipeline_mode = #tpu.pipeline_mode<synchronous>, transform_indices = @transform_8, window_bounds = array<i64: 2, 128, 128>}, {transform_indices = @transform_9, window_bounds = array<i64: 128, 128>}, {transform_indices = @transform_10, window_bounds = array<i64: 128, 128>}, {pipeline_mode = #tpu.pipeline_mode<synchronous>, transform_indices = @transform_11, window_bounds = array<i64: 1, 128, 128>}, {pipeline_mode = #tpu.pipeline_mode<synchronous>, transform_indices = @transform_12, window_bounds = array<i64: 1, 128>}, {transform_indices = @transform_13, window_bounds = array<i64: 128, 1>}, {transform_indices = @transform_14, window_bounds = array<i64: 128, 128>}]} {
    %c0 = arith.constant 0 : index
    %c0_0 = arith.constant 0 : index
    %0 = vector.load %arg1[%c0, %c0_0] : memref<128x128xbf16, #tpu.memory_space<vmem>>, vector<128x128xbf16>
    %c0_1 = arith.constant 0 : index
    %c0_2 = arith.constant 0 : index
    %1 = vector.load %arg2[%c0_1, %c0_2] : memref<128x128xbf16, #tpu.memory_space<vmem>>, vector<128x128xbf16>
    %2 = tpu.concatenate %0, %1 in 0 : vector<128x128xbf16>, vector<128x128xbf16> -> vector<256x128xbf16>
    %3 = vector.extract_strided_slice %2 {offsets = [0, 0], sizes = [128, 128], strides = [1, 1]} : vector<256x128xbf16> to vector<128x128xbf16>
    %c0_3 = arith.constant 0 : index
    %c0_4 = arith.constant 0 : index
    %c0_5 = arith.constant 0 : index
    %4 = vector.load %arg3[%c0_3, %c0_4, %c0_5] : memref<4x128x128xbf16, #tpu.memory_space<vmem>>, vector<1x128x128xbf16>
    %5 = vector.shape_cast %4 : vector<1x128x128xbf16> to vector<128x128xbf16>
    %cst = arith.constant dense<0.000000e+00> : vector<128x128xf32>
    %6 = tpu.matmul %3, %5, %cst {dimension_numbers = #tpu.dot_dimension_numbers<[1], [0], [0], [1], [0, 0, 1, 1], [], []>} : vector<128x128xbf16>, vector<128x128xbf16>, vector<128x128xf32> -> vector<128x128xf32>
    %7 = vector.extract_strided_slice %2 {offsets = [1, 0], sizes = [128, 128], strides = [1, 1]} : vector<256x128xbf16> to vector<128x128xbf16>
    %c1 = arith.constant 1 : index
    %c0_6 = arith.constant 0 : index
    %c0_7 = arith.constant 0 : index
    %8 = vector.load %arg3[%c1, %c0_6, %c0_7] : memref<4x128x128xbf16, #tpu.memory_space<vmem>>, vector<1x128x128xbf16>
    %9 = vector.shape_cast %8 : vector<1x128x128xbf16> to vector<128x128xbf16>
    %cst_8 = arith.constant dense<0.000000e+00> : vector<128x128xf32>
    %10 = tpu.matmul %7, %9, %cst_8 {dimension_numbers = #tpu.dot_dimension_numbers<[1], [0], [0], [1], [0, 0, 1, 1], [], []>} : vector<128x128xbf16>, vector<128x128xbf16>, vector<128x128xf32> -> vector<128x128xf32>
    %11 = arith.addf %6, %10 : vector<128x128xf32>
    %12 = vector.extract_strided_slice %2 {offsets = [10, 0], sizes = [128, 128], strides = [1, 1]} : vector<256x128xbf16> to vector<128x128xbf16>
    %c2 = arith.constant 2 : index
    %c0_9 = arith.constant 0 : index
    %c0_10 = arith.constant 0 : index
    %13 = vector.load %arg3[%c2, %c0_9, %c0_10] : memref<4x128x128xbf16, #tpu.memory_space<vmem>>, vector<1x128x128xbf16>
    %14 = vector.shape_cast %13 : vector<1x128x128xbf16> to vector<128x128xbf16>
    %cst_11 = arith.constant dense<0.000000e+00> : vector<128x128xf32>
    %15 = tpu.matmul %12, %14, %cst_11 {dimension_numbers = #tpu.dot_dimension_numbers<[1], [0], [0], [1], [0, 0, 1, 1], [], []>} : vector<128x128xbf16>, vector<128x128xbf16>, vector<128x128xf32> -> vector<128x128xf32>
    %16 = arith.addf %11, %15 : vector<128x128xf32>
    %17 = vector.extract_strided_slice %2 {offsets = [11, 0], sizes = [128, 128], strides = [1, 1]} : vector<256x128xbf16> to vector<128x128xbf16>
    %c3 = arith.constant 3 : index
    %c0_12 = arith.constant 0 : index
    %c0_13 = arith.constant 0 : index
    %18 = vector.load %arg3[%c3, %c0_12, %c0_13] : memref<4x128x128xbf16, #tpu.memory_space<vmem>>, vector<1x128x128xbf16>
    %19 = vector.shape_cast %18 : vector<1x128x128xbf16> to vector<128x128xbf16>
    %cst_14 = arith.constant dense<0.000000e+00> : vector<128x128xf32>
    %20 = tpu.matmul %17, %19, %cst_14 {dimension_numbers = #tpu.dot_dimension_numbers<[1], [0], [0], [1], [0, 0, 1, 1], [], []>} : vector<128x128xbf16>, vector<128x128xbf16>, vector<128x128xf32> -> vector<128x128xf32>
    %21 = arith.addf %16, %20 : vector<128x128xf32>
    %c0_15 = arith.constant 0 : index
    %c0_16 = arith.constant 0 : index
    %22 = vector.load %arg4[%c0_15, %c0_16] : memref<128x128xbf16, #tpu.memory_space<vmem>>, vector<128x128xbf16>
    %c0_17 = arith.constant 0 : index
    %c0_18 = arith.constant 0 : index
    %23 = vector.load %arg5[%c0_17, %c0_18] : memref<128x128xbf16, #tpu.memory_space<vmem>>, vector<128x128xbf16>
    %24 = tpu.concatenate %22, %23 in 0 : vector<128x128xbf16>, vector<128x128xbf16> -> vector<256x128xbf16>
    %25 = vector.extract_strided_slice %24 {offsets = [0, 0], sizes = [128, 128], strides = [1, 1]} : vector<256x128xbf16> to vector<128x128xbf16>
    %c0_19 = arith.constant 0 : index
    %c0_20 = arith.constant 0 : index
    %c0_21 = arith.constant 0 : index
    %26 = vector.load %arg6[%c0_19, %c0_20, %c0_21] : memref<2x128x128xbf16, #tpu.memory_space<vmem>>, vector<1x128x128xbf16>
    %27 = vector.shape_cast %26 : vector<1x128x128xbf16> to vector<128x128xbf16>
    %cst_22 = arith.constant dense<0.000000e+00> : vector<128x128xf32>
    %28 = tpu.matmul %25, %27, %cst_22 {dimension_numbers = #tpu.dot_dimension_numbers<[1], [0], [0], [1], [0, 0, 1, 1], [], []>} : vector<128x128xbf16>, vector<128x128xbf16>, vector<128x128xf32> -> vector<128x128xf32>
    %29 = arith.addf %21, %28 : vector<128x128xf32>
    %30 = vector.extract_strided_slice %24 {offsets = [10, 0], sizes = [128, 128], strides = [1, 1]} : vector<256x128xbf16> to vector<128x128xbf16>
    %c1_23 = arith.constant 1 : index
    %c0_24 = arith.constant 0 : index
    %c0_25 = arith.constant 0 : index
    %31 = vector.load %arg6[%c1_23, %c0_24, %c0_25] : memref<2x128x128xbf16, #tpu.memory_space<vmem>>, vector<1x128x128xbf16>
    %32 = vector.shape_cast %31 : vector<1x128x128xbf16> to vector<128x128xbf16>
    %cst_26 = arith.constant dense<0.000000e+00> : vector<128x128xf32>
    %33 = tpu.matmul %30, %32, %cst_26 {dimension_numbers = #tpu.dot_dimension_numbers<[1], [0], [0], [1], [0, 0, 1, 1], [], []>} : vector<128x128xbf16>, vector<128x128xbf16>, vector<128x128xf32> -> vector<128x128xf32>
    %34 = arith.addf %29, %33 : vector<128x128xf32>
    %c0_27 = arith.constant 0 : index
    %c0_28 = arith.constant 0 : index
    %35 = vector.load %arg7[%c0_27, %c0_28] : memref<128x128xbf16, #tpu.memory_space<vmem>>, vector<128x128xbf16>
    %c0_29 = arith.constant 0 : index
    %c0_30 = arith.constant 0 : index
    %36 = vector.load %arg8[%c0_29, %c0_30] : memref<128x128xbf16, #tpu.memory_space<vmem>>, vector<128x128xbf16>
    %37 = tpu.concatenate %35, %36 in 0 : vector<128x128xbf16>, vector<128x128xbf16> -> vector<256x128xbf16>
    %38 = vector.extract_strided_slice %37 {offsets = [0, 0], sizes = [128, 128], strides = [1, 1]} : vector<256x128xbf16> to vector<128x128xbf16>
    %c0_31 = arith.constant 0 : index
    %c0_32 = arith.constant 0 : index
    %c0_33 = arith.constant 0 : index
    %39 = vector.load %arg9[%c0_31, %c0_32, %c0_33] : memref<2x128x128xbf16, #tpu.memory_space<vmem>>, vector<1x128x128xbf16>
    %40 = vector.shape_cast %39 : vector<1x128x128xbf16> to vector<128x128xbf16>
    %cst_34 = arith.constant dense<0.000000e+00> : vector<128x128xf32>
    %41 = tpu.matmul %38, %40, %cst_34 {dimension_numbers = #tpu.dot_dimension_numbers<[1], [0], [0], [1], [0, 0, 1, 1], [], []>} : vector<128x128xbf16>, vector<128x128xbf16>, vector<128x128xf32> -> vector<128x128xf32>
    %42 = arith.addf %34, %41 : vector<128x128xf32>
    %43 = vector.extract_strided_slice %37 {offsets = [1, 0], sizes = [128, 128], strides = [1, 1]} : vector<256x128xbf16> to vector<128x128xbf16>
    %c1_35 = arith.constant 1 : index
    %c0_36 = arith.constant 0 : index
    %c0_37 = arith.constant 0 : index
    %44 = vector.load %arg9[%c1_35, %c0_36, %c0_37] : memref<2x128x128xbf16, #tpu.memory_space<vmem>>, vector<1x128x128xbf16>
    %45 = vector.shape_cast %44 : vector<1x128x128xbf16> to vector<128x128xbf16>
    %cst_38 = arith.constant dense<0.000000e+00> : vector<128x128xf32>
    %46 = tpu.matmul %43, %45, %cst_38 {dimension_numbers = #tpu.dot_dimension_numbers<[1], [0], [0], [1], [0, 0, 1, 1], [], []>} : vector<128x128xbf16>, vector<128x128xbf16>, vector<128x128xf32> -> vector<128x128xf32>
    %47 = arith.addf %42, %46 : vector<128x128xf32>
    %c0_39 = arith.constant 0 : index
    %c0_40 = arith.constant 0 : index
    %48 = vector.load %arg10[%c0_39, %c0_40] : memref<128x128xbf16, #tpu.memory_space<vmem>>, vector<128x128xbf16>
    %c0_41 = arith.constant 0 : index
    %c0_42 = arith.constant 0 : index
    %49 = vector.load %arg11[%c0_41, %c0_42] : memref<128x128xbf16, #tpu.memory_space<vmem>>, vector<128x128xbf16>
    %50 = tpu.concatenate %48, %49 in 0 : vector<128x128xbf16>, vector<128x128xbf16> -> vector<256x128xbf16>
    %51 = vector.extract_strided_slice %50 {offsets = [0, 0], sizes = [128, 128], strides = [1, 1]} : vector<256x128xbf16> to vector<128x128xbf16>
    %c0_43 = arith.constant 0 : index
    %c0_44 = arith.constant 0 : index
    %c0_45 = arith.constant 0 : index
    %52 = vector.load %arg12[%c0_43, %c0_44, %c0_45] : memref<1x128x128xbf16, #tpu.memory_space<vmem>>, vector<1x128x128xbf16>
    %53 = vector.shape_cast %52 : vector<1x128x128xbf16> to vector<128x128xbf16>
    %cst_46 = arith.constant dense<0.000000e+00> : vector<128x128xf32>
    %54 = tpu.matmul %51, %53, %cst_46 {dimension_numbers = #tpu.dot_dimension_numbers<[1], [0], [0], [1], [0, 0, 1, 1], [], []>} : vector<128x128xbf16>, vector<128x128xbf16>, vector<128x128xf32> -> vector<128x128xf32>
    %55 = arith.addf %47, %54 : vector<128x128xf32>
    %c0_47 = arith.constant 0 : index
    %c0_48 = arith.constant 0 : index
    %56 = vector.load %arg13[%c0_47, %c0_48] : memref<1x128xf32, #tpu.memory_space<vmem>>, vector<1x128xf32>
    %57 = vector.broadcast %56 : vector<1x128xf32> to vector<128x128xf32>
    %58 = arith.addf %55, %57 : vector<128x128xf32>
    %cst_49 = arith.constant 0.000000e+00 : f32
    %59 = vector.broadcast %cst_49 : f32 to vector<128x128xf32>
    %60 = arith.maximumf %58, %59 : vector<128x128xf32>
    %c0_50 = arith.constant 0 : index
    %c0_51 = arith.constant 0 : index
    %61 = vector.load %arg14[%c0_50, %c0_51] : memref<128x1xf32, #tpu.memory_space<vmem>>, vector<128x1xf32>
    %62 = vector.broadcast %61 : vector<128x1xf32> to vector<128x128xf32>
    %63 = arith.mulf %60, %62 : vector<128x128xf32>
    %64 = arith.truncf %63 : vector<128x128xf32> to vector<128x128xbf16>
    %c0_52 = arith.constant 0 : index
    %c0_53 = arith.constant 0 : index
    %65 = vector.load %arg15[%c0_52, %c0_53] : memref<128x128xbf16, #tpu.memory_space<vmem>>, vector<128x128xbf16>
    tpu.vector_store %arg15[%c0_52, %c0_53], %64 {strides = array<i32>} : memref<128x128xbf16, #tpu.memory_space<vmem>>, vector<128x128xbf16>,
    return
  }
  func.func @transform_0(%arg0: i32) -> (i32, i32) {
    %c1_i32 = arith.constant 1 : i32
    %0 = arith.addi %arg0, %c1_i32 : i32
    %c0_i32 = arith.constant 0 : i32
    %c0_i32_0 = arith.constant 0 : i32
    return %0, %c0_i32 : i32, i32
  }
  func.func @transform_1(%arg0: i32) -> (i32, i32) {
    %c2_i32 = arith.constant 2 : i32
    %0 = arith.addi %arg0, %c2_i32 : i32
    %c0_i32 = arith.constant 0 : i32
    %c0_i32_0 = arith.constant 0 : i32
    return %0, %c0_i32 : i32, i32
  }
  func.func @transform_2(%arg0: i32) -> (i32, i32, i32) {
    %c0_i32 = arith.constant 0 : i32
    %c0_i32_0 = arith.constant 0 : i32
    %c0_i32_1 = arith.constant 0 : i32
    %c0_i32_2 = arith.constant 0 : i32
    return %c0_i32, %c0_i32_0, %c0_i32_1 : i32, i32, i32
  }
  func.func @transform_3(%arg0: i32) -> (i32, i32) {
    %c1_i32 = arith.constant 1 : i32
    %0 = arith.addi %arg0, %c1_i32 : i32
    %c0_i32 = arith.constant 0 : i32
    %c0_i32_0 = arith.constant 0 : i32
    return %0, %c0_i32 : i32, i32
  }
  func.func @transform_4(%arg0: i32) -> (i32, i32) {
    %c2_i32 = arith.constant 2 : i32
    %0 = arith.addi %arg0, %c2_i32 : i32
    %c0_i32 = arith.constant 0 : i32
    %c0_i32_0 = arith.constant 0 : i32
    return %0, %c0_i32 : i32, i32
  }
  func.func @transform_5(%arg0: i32) -> (i32, i32, i32) {
    %c0_i32 = arith.constant 0 : i32
    %c0_i32_0 = arith.constant 0 : i32
    %c0_i32_1 = arith.constant 0 : i32
    %c0_i32_2 = arith.constant 0 : i32
    return %c0_i32, %c0_i32_0, %c0_i32_1 : i32, i32, i32
  }
  func.func @transform_6(%arg0: i32) -> (i32, i32) {
    %c1_i32 = arith.constant 1 : i32
    %0 = arith.addi %arg0, %c1_i32 : i32
    %c0_i32 = arith.constant 0 : i32
    %c0_i32_0 = arith.constant 0 : i32
    return %0, %c0_i32 : i32, i32
  }
  func.func @transform_7(%arg0: i32) -> (i32, i32) {
    %c2_i32 = arith.constant 2 : i32
    %0 = arith.addi %arg0, %c2_i32 : i32
    %c0_i32 = arith.constant 0 : i32
    %c0_i32_0 = arith.constant 0 : i32
    return %0, %c0_i32 : i32, i32
  }
  func.func @transform_8(%arg0: i32) -> (i32, i32, i32) {
    %c0_i32 = arith.constant 0 : i32
    %c0_i32_0 = arith.constant 0 : i32
    %c0_i32_1 = arith.constant 0 : i32
    %c0_i32_2 = arith.constant 0 : i32
    return %c0_i32, %c0_i32_0, %c0_i32_1 : i32, i32, i32
  }
  func.func @transform_9(%arg0: i32) -> (i32, i32) {
    %c1_i32 = arith.constant 1 : i32
    %0 = arith.addi %arg0, %c1_i32 : i32
    %c0_i32 = arith.constant 0 : i32
    %c0_i32_0 = arith.constant 0 : i32
    return %0, %c0_i32 : i32, i32
  }
  func.func @transform_10(%arg0: i32) -> (i32, i32) {
    %c2_i32 = arith.constant 2 : i32
    %0 = arith.addi %arg0, %c2_i32 : i32
    %c0_i32 = arith.constant 0 : i32
    %c0_i32_0 = arith.constant 0 : i32
    return %0, %c0_i32 : i32, i32
  }
  func.func @transform_11(%arg0: i32) -> (i32, i32, i32) {
    %c0_i32 = arith.constant 0 : i32
    %c0_i32_0 = arith.constant 0 : i32
    %c0_i32_1 = arith.constant 0 : i32
    %c0_i32_2 = arith.constant 0 : i32
    return %c0_i32, %c0_i32_0, %c0_i32_1 : i32, i32, i32
  }
  func.func @transform_12(%arg0: i32) -> (i32, i32) {
    %c0_i32 = arith.constant 0 : i32
    %c0_i32_0 = arith.constant 0 : i32
    %c0_i32_1 = arith.constant 0 : i32
    return %c0_i32, %c0_i32_0 : i32, i32
  }
  func.func @transform_13(%arg0: i32) -> (i32, i32) {
    %c0_i32 = arith.constant 0 : i32
    %c0_i32_0 = arith.constant 0 : i32
    return %arg0, %c0_i32 : i32, i32
  }
  func.func @transform_14(%arg0: i32) -> (i32, i32) {
    %c1_i32 = arith.constant 1 : i32
    %0 = arith.addi %arg0, %c1_i32 : i32
    %c0_i32 = arith.constant 0 : i32
    %c0_i32_0 = arith.constant 0 : i32
    return %0, %c0_i32 : i32, i32
  }
}

module attributes {stable_mosaic.version = 11 : i64} {
  func.func @_fused_conv_kernel(%arg0: i32, %arg1: memref<128x128xbf16, #tpu.memory_space<vmem>>, %arg2: memref<128x128xbf16, #tpu.memory_space<vmem>>, %arg3: memref<128x128xbf16, #tpu.memory_space<vmem>>, %arg4: memref<9x128x128xbf16, #tpu.memory_space<vmem>>, %arg5: memref<128x128xbf16, #tpu.memory_space<vmem>>, %arg6: memref<128x128xbf16, #tpu.memory_space<vmem>>, %arg7: memref<1x128xf32, #tpu.memory_space<vmem>>, %arg8: memref<128x1xf32, #tpu.memory_space<vmem>>, %arg9: memref<128x128xf32, #tpu.memory_space<vmem>>) attributes {dimension_semantics = [#tpu.dimension_semantics<parallel>], iteration_bounds = array<i64: 2>, scalar_prefetch = 0 : i64, scratch_operands = 0 : i64, tpu.core_type = #tpu.core_type<tc>, window_params = [{transform_indices = @transform_0, window_bounds = array<i64: 128, 128>}, {transform_indices = @transform_1, window_bounds = array<i64: 128, 128>}, {transform_indices = @transform_2, window_bounds = array<i64: 128, 128>}, {pipeline_mode = #tpu.pipeline_mode<synchronous>, transform_indices = @transform_3, window_bounds = array<i64: 9, 128, 128>}, {transform_indices = @transform_4, window_bounds = array<i64: 128, 128>}, {pipeline_mode = #tpu.pipeline_mode<synchronous>, transform_indices = @transform_5, window_bounds = array<i64: 128, 128>}, {pipeline_mode = #tpu.pipeline_mode<synchronous>, transform_indices = @transform_6, window_bounds = array<i64: 1, 128>}, {transform_indices = @transform_7, window_bounds = array<i64: 128, 1>}, {transform_indices = @transform_8, window_bounds = array<i64: 128, 128>}]} {
    %c0 = arith.constant 0 : index
    %c0_0 = arith.constant 0 : index
    %0 = vector.load %arg1[%c0, %c0_0] : memref<128x128xbf16, #tpu.memory_space<vmem>>, vector<128x128xbf16>
    %c0_1 = arith.constant 0 : index
    %c0_2 = arith.constant 0 : index
    %1 = vector.load %arg2[%c0_1, %c0_2] : memref<128x128xbf16, #tpu.memory_space<vmem>>, vector<128x128xbf16>
    %c0_3 = arith.constant 0 : index
    %c0_4 = arith.constant 0 : index
    %2 = vector.load %arg3[%c0_3, %c0_4] : memref<128x128xbf16, #tpu.memory_space<vmem>>, vector<128x128xbf16>
    %3 = tpu.concatenate %0, %1, %2 in 0 : vector<128x128xbf16>, vector<128x128xbf16>, vector<128x128xbf16> -> vector<384x128xbf16>
    %4 = vector.extract_strided_slice %3 {offsets = [117, 0], sizes = [128, 128], strides = [1, 1]} : vector<384x128xbf16> to vector<128x128xbf16>
    %c0_5 = arith.constant 0 : index
    %c0_6 = arith.constant 0 : index
    %c0_7 = arith.constant 0 : index
    %5 = vector.load %arg4[%c0_5, %c0_6, %c0_7] : memref<9x128x128xbf16, #tpu.memory_space<vmem>>, vector<1x128x128xbf16>
    %6 = vector.shape_cast %5 : vector<1x128x128xbf16> to vector<128x128xbf16>
    %cst = arith.constant dense<0.000000e+00> : vector<128x128xf32>
    %7 = tpu.matmul %4, %6, %cst {dimension_numbers = #tpu.dot_dimension_numbers<[1], [0], [0], [1], [0, 0, 1, 1], [], []>} : vector<128x128xbf16>, vector<128x128xbf16>, vector<128x128xf32> -> vector<128x128xf32>
    %8 = vector.extract_strided_slice %3 {offsets = [118, 0], sizes = [128, 128], strides = [1, 1]} : vector<384x128xbf16> to vector<128x128xbf16>
    %c1 = arith.constant 1 : index
    %c0_8 = arith.constant 0 : index
    %c0_9 = arith.constant 0 : index
    %9 = vector.load %arg4[%c1, %c0_8, %c0_9] : memref<9x128x128xbf16, #tpu.memory_space<vmem>>, vector<1x128x128xbf16>
    %10 = vector.shape_cast %9 : vector<1x128x128xbf16> to vector<128x128xbf16>
    %cst_10 = arith.constant dense<0.000000e+00> : vector<128x128xf32>
    %11 = tpu.matmul %8, %10, %cst_10 {dimension_numbers = #tpu.dot_dimension_numbers<[1], [0], [0], [1], [0, 0, 1, 1], [], []>} : vector<128x128xbf16>, vector<128x128xbf16>, vector<128x128xf32> -> vector<128x128xf32>
    %12 = arith.addf %7, %11 : vector<128x128xf32>
    %13 = vector.extract_strided_slice %3 {offsets = [119, 0], sizes = [128, 128], strides = [1, 1]} : vector<384x128xbf16> to vector<128x128xbf16>
    %c2 = arith.constant 2 : index
    %c0_11 = arith.constant 0 : index
    %c0_12 = arith.constant 0 : index
    %14 = vector.load %arg4[%c2, %c0_11, %c0_12] : memref<9x128x128xbf16, #tpu.memory_space<vmem>>, vector<1x128x128xbf16>
    %15 = vector.shape_cast %14 : vector<1x128x128xbf16> to vector<128x128xbf16>
    %cst_13 = arith.constant dense<0.000000e+00> : vector<128x128xf32>
    %16 = tpu.matmul %13, %15, %cst_13 {dimension_numbers = #tpu.dot_dimension_numbers<[1], [0], [0], [1], [0, 0, 1, 1], [], []>} : vector<128x128xbf16>, vector<128x128xbf16>, vector<128x128xf32> -> vector<128x128xf32>
    %17 = arith.addf %12, %16 : vector<128x128xf32>
    %18 = vector.extract_strided_slice %3 {offsets = [127, 0], sizes = [128, 128], strides = [1, 1]} : vector<384x128xbf16> to vector<128x128xbf16>
    %c3 = arith.constant 3 : index
    %c0_14 = arith.constant 0 : index
    %c0_15 = arith.constant 0 : index
    %19 = vector.load %arg4[%c3, %c0_14, %c0_15] : memref<9x128x128xbf16, #tpu.memory_space<vmem>>, vector<1x128x128xbf16>
    %20 = vector.shape_cast %19 : vector<1x128x128xbf16> to vector<128x128xbf16>
    %cst_16 = arith.constant dense<0.000000e+00> : vector<128x128xf32>
    %21 = tpu.matmul %18, %20, %cst_16 {dimension_numbers = #tpu.dot_dimension_numbers<[1], [0], [0], [1], [0, 0, 1, 1], [], []>} : vector<128x128xbf16>, vector<128x128xbf16>, vector<128x128xf32> -> vector<128x128xf32>
    %22 = arith.addf %17, %21 : vector<128x128xf32>
    %23 = vector.extract_strided_slice %3 {offsets = [128, 0], sizes = [128, 128], strides = [1, 1]} : vector<384x128xbf16> to vector<128x128xbf16>
    %c4 = arith.constant 4 : index
    %c0_17 = arith.constant 0 : index
    %c0_18 = arith.constant 0 : index
    %24 = vector.load %arg4[%c4, %c0_17, %c0_18] : memref<9x128x128xbf16, #tpu.memory_space<vmem>>, vector<1x128x128xbf16>
    %25 = vector.shape_cast %24 : vector<1x128x128xbf16> to vector<128x128xbf16>
    %cst_19 = arith.constant dense<0.000000e+00> : vector<128x128xf32>
    %26 = tpu.matmul %23, %25, %cst_19 {dimension_numbers = #tpu.dot_dimension_numbers<[1], [0], [0], [1], [0, 0, 1, 1], [], []>} : vector<128x128xbf16>, vector<128x128xbf16>, vector<128x128xf32> -> vector<128x128xf32>
    %27 = arith.addf %22, %26 : vector<128x128xf32>
    %28 = vector.extract_strided_slice %3 {offsets = [129, 0], sizes = [128, 128], strides = [1, 1]} : vector<384x128xbf16> to vector<128x128xbf16>
    %c5 = arith.constant 5 : index
    %c0_20 = arith.constant 0 : index
    %c0_21 = arith.constant 0 : index
    %29 = vector.load %arg4[%c5, %c0_20, %c0_21] : memref<9x128x128xbf16, #tpu.memory_space<vmem>>, vector<1x128x128xbf16>
    %30 = vector.shape_cast %29 : vector<1x128x128xbf16> to vector<128x128xbf16>
    %cst_22 = arith.constant dense<0.000000e+00> : vector<128x128xf32>
    %31 = tpu.matmul %28, %30, %cst_22 {dimension_numbers = #tpu.dot_dimension_numbers<[1], [0], [0], [1], [0, 0, 1, 1], [], []>} : vector<128x128xbf16>, vector<128x128xbf16>, vector<128x128xf32> -> vector<128x128xf32>
    %32 = arith.addf %27, %31 : vector<128x128xf32>
    %33 = vector.extract_strided_slice %3 {offsets = [137, 0], sizes = [128, 128], strides = [1, 1]} : vector<384x128xbf16> to vector<128x128xbf16>
    %c6 = arith.constant 6 : index
    %c0_23 = arith.constant 0 : index
    %c0_24 = arith.constant 0 : index
    %34 = vector.load %arg4[%c6, %c0_23, %c0_24] : memref<9x128x128xbf16, #tpu.memory_space<vmem>>, vector<1x128x128xbf16>
    %35 = vector.shape_cast %34 : vector<1x128x128xbf16> to vector<128x128xbf16>
    %cst_25 = arith.constant dense<0.000000e+00> : vector<128x128xf32>
    %36 = tpu.matmul %33, %35, %cst_25 {dimension_numbers = #tpu.dot_dimension_numbers<[1], [0], [0], [1], [0, 0, 1, 1], [], []>} : vector<128x128xbf16>, vector<128x128xbf16>, vector<128x128xf32> -> vector<128x128xf32>
    %37 = arith.addf %32, %36 : vector<128x128xf32>
    %38 = vector.extract_strided_slice %3 {offsets = [138, 0], sizes = [128, 128], strides = [1, 1]} : vector<384x128xbf16> to vector<128x128xbf16>
    %c7 = arith.constant 7 : index
    %c0_26 = arith.constant 0 : index
    %c0_27 = arith.constant 0 : index
    %39 = vector.load %arg4[%c7, %c0_26, %c0_27] : memref<9x128x128xbf16, #tpu.memory_space<vmem>>, vector<1x128x128xbf16>
    %40 = vector.shape_cast %39 : vector<1x128x128xbf16> to vector<128x128xbf16>
    %cst_28 = arith.constant dense<0.000000e+00> : vector<128x128xf32>
    %41 = tpu.matmul %38, %40, %cst_28 {dimension_numbers = #tpu.dot_dimension_numbers<[1], [0], [0], [1], [0, 0, 1, 1], [], []>} : vector<128x128xbf16>, vector<128x128xbf16>, vector<128x128xf32> -> vector<128x128xf32>
    %42 = arith.addf %37, %41 : vector<128x128xf32>
    %43 = vector.extract_strided_slice %3 {offsets = [139, 0], sizes = [128, 128], strides = [1, 1]} : vector<384x128xbf16> to vector<128x128xbf16>
    %c8 = arith.constant 8 : index
    %c0_29 = arith.constant 0 : index
    %c0_30 = arith.constant 0 : index
    %44 = vector.load %arg4[%c8, %c0_29, %c0_30] : memref<9x128x128xbf16, #tpu.memory_space<vmem>>, vector<1x128x128xbf16>
    %45 = vector.shape_cast %44 : vector<1x128x128xbf16> to vector<128x128xbf16>
    %cst_31 = arith.constant dense<0.000000e+00> : vector<128x128xf32>
    %46 = tpu.matmul %43, %45, %cst_31 {dimension_numbers = #tpu.dot_dimension_numbers<[1], [0], [0], [1], [0, 0, 1, 1], [], []>} : vector<128x128xbf16>, vector<128x128xbf16>, vector<128x128xf32> -> vector<128x128xf32>
    %47 = arith.addf %42, %46 : vector<128x128xf32>
    %c0_32 = arith.constant 0 : index
    %c0_33 = arith.constant 0 : index
    %48 = vector.load %arg5[%c0_32, %c0_33] : memref<128x128xbf16, #tpu.memory_space<vmem>>, vector<128x128xbf16>
    %c0_34 = arith.constant 0 : index
    %c0_35 = arith.constant 0 : index
    %49 = vector.load %arg6[%c0_34, %c0_35] : memref<128x128xbf16, #tpu.memory_space<vmem>>, vector<128x128xbf16>
    %cst_36 = arith.constant dense<0.000000e+00> : vector<128x128xf32>
    %50 = tpu.matmul %48, %49, %cst_36 {dimension_numbers = #tpu.dot_dimension_numbers<[1], [0], [0], [1], [0, 0, 1, 1], [], []>} : vector<128x128xbf16>, vector<128x128xbf16>, vector<128x128xf32> -> vector<128x128xf32>
    %51 = arith.addf %47, %50 : vector<128x128xf32>
    %c0_37 = arith.constant 0 : index
    %c0_38 = arith.constant 0 : index
    %52 = vector.load %arg7[%c0_37, %c0_38] : memref<1x128xf32, #tpu.memory_space<vmem>>, vector<1x128xf32>
    %53 = vector.broadcast %52 : vector<1x128xf32> to vector<128x128xf32>
    %54 = arith.addf %51, %53 : vector<128x128xf32>
    %cst_39 = arith.constant 0.000000e+00 : f32
    %55 = vector.broadcast %cst_39 : f32 to vector<128x128xf32>
    %56 = arith.maximumf %54, %55 : vector<128x128xf32>
    %c0_40 = arith.constant 0 : index
    %c0_41 = arith.constant 0 : index
    %57 = vector.load %arg8[%c0_40, %c0_41] : memref<128x1xf32, #tpu.memory_space<vmem>>, vector<128x1xf32>
    %58 = vector.broadcast %57 : vector<128x1xf32> to vector<128x128xf32>
    %59 = arith.mulf %56, %58 : vector<128x128xf32>
    %c0_42 = arith.constant 0 : index
    %c0_43 = arith.constant 0 : index
    %60 = vector.load %arg9[%c0_42, %c0_43] : memref<128x128xf32, #tpu.memory_space<vmem>>, vector<128x128xf32>
    tpu.vector_store %arg9[%c0_42, %c0_43], %59 {strides = array<i32>} : memref<128x128xf32, #tpu.memory_space<vmem>>, vector<128x128xf32>,
    return
  }
  func.func @transform_0(%arg0: i32) -> (i32, i32) {
    %c0_i32 = arith.constant 0 : i32
    %0 = arith.addi %arg0, %c0_i32 : i32
    %c0_i32_0 = arith.constant 0 : i32
    %c0_i32_1 = arith.constant 0 : i32
    return %0, %c0_i32_0 : i32, i32
  }
  func.func @transform_1(%arg0: i32) -> (i32, i32) {
    %c1_i32 = arith.constant 1 : i32
    %0 = arith.addi %arg0, %c1_i32 : i32
    %c0_i32 = arith.constant 0 : i32
    %c0_i32_0 = arith.constant 0 : i32
    return %0, %c0_i32 : i32, i32
  }
  func.func @transform_2(%arg0: i32) -> (i32, i32) {
    %c2_i32 = arith.constant 2 : i32
    %0 = arith.addi %arg0, %c2_i32 : i32
    %c0_i32 = arith.constant 0 : i32
    %c0_i32_0 = arith.constant 0 : i32
    return %0, %c0_i32 : i32, i32
  }
  func.func @transform_3(%arg0: i32) -> (i32, i32, i32) {
    %c0_i32 = arith.constant 0 : i32
    %c0_i32_0 = arith.constant 0 : i32
    %c0_i32_1 = arith.constant 0 : i32
    %c0_i32_2 = arith.constant 0 : i32
    return %c0_i32, %c0_i32_0, %c0_i32_1 : i32, i32, i32
  }
  func.func @transform_4(%arg0: i32) -> (i32, i32) {
    %c1_i32 = arith.constant 1 : i32
    %0 = arith.addi %arg0, %c1_i32 : i32
    %c0_i32 = arith.constant 0 : i32
    %c0_i32_0 = arith.constant 0 : i32
    return %0, %c0_i32 : i32, i32
  }
  func.func @transform_5(%arg0: i32) -> (i32, i32) {
    %c0_i32 = arith.constant 0 : i32
    %c0_i32_0 = arith.constant 0 : i32
    %c0_i32_1 = arith.constant 0 : i32
    return %c0_i32, %c0_i32_0 : i32, i32
  }
  func.func @transform_6(%arg0: i32) -> (i32, i32) {
    %c0_i32 = arith.constant 0 : i32
    %c0_i32_0 = arith.constant 0 : i32
    %c0_i32_1 = arith.constant 0 : i32
    return %c0_i32, %c0_i32_0 : i32, i32
  }
  func.func @transform_7(%arg0: i32) -> (i32, i32) {
    %c0_i32 = arith.constant 0 : i32
    %c0_i32_0 = arith.constant 0 : i32
    return %arg0, %c0_i32 : i32, i32
  }
  func.func @transform_8(%arg0: i32) -> (i32, i32) {
    %c1_i32 = arith.constant 1 : i32
    %0 = arith.addi %arg0, %c1_i32 : i32
    %c0_i32 = arith.constant 0 : i32
    %c0_i32_0 = arith.constant 0 : i32
    return %0, %c0_i32 : i32, i32
  }
}

</mosaic_0001>

<llo_original>
// kernel: residual_block_forward.2
$region0: #{residual_block_forward.2}
  #allocation0 [shape = 'u32[]', space=smem, size = 0x4, offset = 0x4, fixed_abs, tag = 'smem constant byte address 0x4 - core index']
  #allocation1 [shape = 'u32[144,128]{1,0:T(1,128)}', space=vmem, size = 0x12000, scoped, tag = 'internal scratch']
  %s0 = inlined_call_operand.vmem [shape: bf16[512,128], index: 0, kind: input, shape index: {}, may-alias: {0,1}]
  %s1 = inlined_call_operand.vmem [shape: bf16[512,128], index: 1, kind: input, shape index: {}, may-alias: {0,1}]
  %s2 = inlined_call_operand.vmem [shape: bf16[4,128,128], index: 2, kind: input, shape index: {}]
  %s3 = inlined_call_operand.vmem [shape: bf16[512,128], index: 3, kind: input, shape index: {}, may-alias: {3,4}]
  %s4 = inlined_call_operand.vmem [shape: bf16[512,128], index: 4, kind: input, shape index: {}, may-alias: {3,4}]
  %s5 = inlined_call_operand.vmem [shape: bf16[2,128,128], index: 5, kind: input, shape index: {}]
  %s6 = inlined_call_operand.vmem [shape: bf16[512,128], index: 6, kind: input, shape index: {}, may-alias: {6,7}]
  %s7 = inlined_call_operand.vmem [shape: bf16[512,128], index: 7, kind: input, shape index: {}, may-alias: {6,7}]
  %s8 = inlined_call_operand.vmem [shape: bf16[2,128,128], index: 8, kind: input, shape index: {}]
  %s9 = inlined_call_operand.vmem [shape: bf16[512,128], index: 9, kind: input, shape index: {}, may-alias: {9,10}]
  %s10 = inlined_call_operand.vmem [shape: bf16[512,128], index: 10, kind: input, shape index: {}, may-alias: {9,10}]
  %s11 = inlined_call_operand.vmem [shape: bf16[1,128,128], index: 11, kind: input, shape index: {}]
  %s12 = inlined_call_operand.vmem [shape: f32[1,128], index: 12, kind: input, shape index: {}]
  %s13 = inlined_call_operand.vmem [shape: f32[256,1], index: 13, kind: input, shape index: {}]
  %s14 = inlined_call_operand.vmem [shape: bf16[512,128], index: 14, kind: output, shape index: {}]
  %s15 = sld [smem:[#allocation0]]
  $region89: #{residual_block_forward.2} parent=0
    _
  %s17 = ssub.s32 1, %s15
  %s18 = scalar_select 0, %s17, %s15
  loop: start=0, step=1, limit=4
  $region2: #{residual_block_forward.2} parent=0 // loop_pre_header
    _
  $region3: #{residual_block_forward.2} parent=0 // loop_header
    %s20 = sphi 0, %s24
    %p21 = scmp.ge.s32.totalorder %s20, 4
    %s32 = sphi 0, %s34
    %s35 = sphi 0, %s32
    %s36 = sphi 0, %s35
    %s52 = sphi 0, %s36
    %s60 = sphi 0, %s62
    %s63 = sphi 0, %s60
    %s64 = sphi 0, %s63
    %s80 = sphi 0, %s64
    %s84 = sphi 0, %s84
    %s86 = sphi 0, %s84
    %s87 = sphi 0, %s86
    %s101 = sphi 0, %s87
    %s109 = sphi 0, %s111
    %s112 = sphi 0, %s109
    %s113 = sphi 0, %s112
    %s129 = sphi 0, %s113
    %s137 = sphi 0, %s139
    %s140 = sphi 0, %s137
    %s141 = sphi 0, %s140
    %s157 = sphi 0, %s141
    %s161 = sphi 0, %s161
    %s163 = sphi 0, %s161
    %s164 = sphi 0, %s163
    %s178 = sphi 0, %s164
    %s186 = sphi 0, %s188
    %s189 = sphi 0, %s186
    %s190 = sphi 0, %s189
    %s206 = sphi 0, %s190
    %s214 = sphi 0, %s216
    %s217 = sphi 0, %s214
    %s218 = sphi 0, %s217
    %s234 = sphi 0, %s218
    %s238 = sphi 0, %s238
    %s240 = sphi 0, %s238
    %s241 = sphi 0, %s240
    %s255 = sphi 0, %s241
    %s263 = sphi 0, %s265
    %s266 = sphi 0, %s263
    %s267 = sphi 0, %s266
    %s283 = sphi 0, %s267
    %s291 = sphi 0, %s293
    %s294 = sphi 0, %s291
    %s295 = sphi 0, %s294
    %s311 = sphi 0, %s295
    %s315 = sphi 0, %s315
    %s317 = sphi 0, %s315
    %s318 = sphi 0, %s317
    %s332 = sphi 0, %s318
    %s336 = sphi 0, %s336
    %s338 = sphi 0, %s336
    %s339 = sphi 0, %s338
    %s353 = sphi 0, %s339
    %s359 = sphi 0, %s361
    %s362 = sphi 0, %s359
    %s363 = sphi 0, %s362
    %s379 = sphi 0, %s363
    %s387 = sphi 0, %s389
    %s390 = sphi 0, %s387
    %s391 = sphi 0, %s390
    %s407 = sphi 0, %s391
  $region4: #{residual_block_forward.2} parent=0 // loop_header_branch
    %23 = sbr.rel (%p21) target = $region8
  $region5: #{residual_block_forward.2} parent=0 // loop_body
    %s25 = ssub.s32 %s20, 1
    %s26 = ssub.s32 %s20, 2
    %s27 = sadd.s32 %s20, 1
    %s28 = sadd.s32 %s20, 1
    %s29 = sadd.s32 %s27, 1
    %s30 = ssub.s32 %s28, %s29
    %p31 = scmp.eq.s32.totalorder %s30, 0
    %s33 = sadd.s32 %s32, 1
    %s34 = scalar_select %p31, %s32, %s33
    %p37 = pneg %p31
    %p38 = scmp.eq.s32.totalorder %s20, 1
    %p39 = por %p37, %p38
    %p40 = scmp.ne.s32.totalorder %s32, %s35
    %p41 = scmp.eq.s32.totalorder %s20, 0
    %p42 = por %p40, %p41
    %p43 = scmp.ne.s32.totalorder %s32, %s35
    %p44 = scmp.eq.s32.totalorder %s25, 1
    %p45 = por %p43, %p44
    %p46 = scmp.ne.s32.totalorder %s35, %s36
    %p47 = scmp.eq.s32.totalorder %s25, 0
    %p48 = por %p46, %p47
    %p49 = scmp.ne.s32.totalorder %s35, %s36
    %p50 = scmp.eq.s32.totalorder %s26, 1
    %p51 = por %p49, %p50
    %p53 = scmp.ne.s32.totalorder %s36, %s52
    %p54 = scmp.eq.s32.totalorder %s26, 0
    %p55 = por %p53, %p54
    %s56 = sadd.s32 %s20, 2
    %s57 = sadd.s32 %s27, 2
    %s58 = ssub.s32 %s56, %s57
    %p59 = scmp.eq.s32.totalorder %s58, 0
    %s61 = sadd.s32 %s60, 1
    %s62 = scalar_select %p59, %s60, %s61
    %p65 = pneg %p59
    %p66 = scmp.eq.s32.totalorder %s20, 1
    %p67 = por %p65, %p66
    %p68 = scmp.ne.s32.totalorder %s60, %s63
    %p69 = scmp.eq.s32.totalorder %s20, 0
    %p70 = por %p68, %p69
    %p71 = scmp.ne.s32.totalorder %s60, %s63
    %p72 = scmp.eq.s32.totalorder %s25, 1
    %p73 = por %p71, %p72
    %p74 = scmp.ne.s32.totalorder %s63, %s64
    %p75 = scmp.eq.s32.totalorder %s25, 0
    %p76 = por %p74, %p75
    %p77 = scmp.ne.s32.totalorder %s63, %s64
    %p78 = scmp.eq.s32.totalorder %s26, 1
    %p79 = por %p77, %p78
    %p81 = scmp.ne.s32.totalorder %s64, %s80
    %p82 = scmp.eq.s32.totalorder %s26, 0
    %p83 = por %p81, %p82
    %s85 = sadd.s32 %s84, 1
    %p88 = scmp.eq.s32.totalorder %s20, 1
    %p89 = scmp.ne.s32.totalorder %s84, %s86
    %p90 = scmp.eq.s32.totalorder %s20, 0
    %p91 = por %p89, %p90
    %p92 = scmp.ne.s32.totalorder %s84, %s86
    %p93 = scmp.eq.s32.totalorder %s25, 1
    %p94 = por %p92, %p93
    %p95 = scmp.ne.s32.totalorder %s86, %s87
    %p96 = scmp.eq.s32.totalorder %s25, 0
    %p97 = por %p95, %p96
    %p98 = scmp.ne.s32.totalorder %s86, %s87
    %p99 = scmp.eq.s32.totalorder %s26, 1
    %p100 = por %p98, %p99
    %p102 = scmp.ne.s32.totalorder %s87, %s101
    %p103 = scmp.eq.s32.totalorder %s26, 0
    %p104 = por %p102, %p103
    %s105 = sadd.s32 %s20, 1
    %s106 = sadd.s32 %s27, 1
    %s107 = ssub.s32 %s105, %s106
    %p108 = scmp.eq.s32.totalorder %s107, 0
    %s110 = sadd.s32 %s109, 1
    %s111 = scalar_select %p108, %s109, %s110
    %p114 = pneg %p108
    %p115 = scmp.eq.s32.totalorder %s20, 1
    %p116 = por %p114, %p115
    %p117 = scmp.ne.s32.totalorder %s109, %s112
    %p118 = scmp.eq.s32.totalorder %s20, 0
    %p119 = por %p117, %p118
    %p120 = scmp.ne.s32.totalorder %s109, %s112
    %p121 = scmp.eq.s32.totalorder %s25, 1
    %p122 = por %p120, %p121
    %p123 = scmp.ne.s32.totalorder %s112, %s113
    %p124 = scmp.eq.s32.totalorder %s25, 0
    %p125 = por %p123, %p124
    %p126 = scmp.ne.s32.totalorder %s112, %s113
    %p127 = scmp.eq.s32.totalorder %s26, 1
    %p128 = por %p126, %p127
    %p130 = scmp.ne.s32.totalorder %s113, %s129
    %p131 = scmp.eq.s32.totalorder %s26, 0
    %p132 = por %p130, %p131
    %s133 = sadd.s32 %s20, 2
    %s134 = sadd.s32 %s27, 2
    %s135 = ssub.s32 %s133, %s134
    %p136 = scmp.eq.s32.totalorder %s135, 0
    %s138 = sadd.s32 %s137, 1
    %s139 = scalar_select %p136, %s137, %s138
    %p142 = pneg %p136
    %p143 = scmp.eq.s32.totalorder %s20, 1
    %p144 = por %p142, %p143
    %p145 = scmp.ne.s32.totalorder %s137, %s140
    %p146 = scmp.eq.s32.totalorder %s20, 0
    %p147 = por %p145, %p146
    %p148 = scmp.ne.s32.totalorder %s137, %s140
    %p149 = scmp.eq.s32.totalorder %s25, 1
    %p150 = por %p148, %p149
    %p151 = scmp.ne.s32.totalorder %s140, %s141
    %p152 = scmp.eq.s32.totalorder %s25, 0
    %p153 = por %p151, %p152
    %p154 = scmp.ne.s32.totalorder %s140, %s141
    %p155 = scmp.eq.s32.totalorder %s26, 1
    %p156 = por %p154, %p155
    %p158 = scmp.ne.s32.totalorder %s141, %s157
    %p159 = scmp.eq.s32.totalorder %s26, 0
    %p160 = por %p158, %p159
    %s162 = sadd.s32 %s161, 1
    %p165 = scmp.eq.s32.totalorder %s20, 1
    %p166 = scmp.ne.s32.totalorder %s161, %s163
    %p167 = scmp.eq.s32.totalorder %s20, 0
    %p168 = por %p166, %p167
    %p169 = scmp.ne.s32.totalorder %s161, %s163
    %p170 = scmp.eq.s32.totalorder %s25, 1
    %p171 = por %p169, %p170
    %p172 = scmp.ne.s32.totalorder %s163, %s164
    %p173 = scmp.eq.s32.totalorder %s25, 0
    %p174 = por %p172, %p173
    %p175 = scmp.ne.s32.totalorder %s163, %s164
    %p176 = scmp.eq.s32.totalorder %s26, 1
    %p177 = por %p175, %p176
    %p179 = scmp.ne.s32.totalorder %s164, %s178
    %p180 = scmp.eq.s32.totalorder %s26, 0
    %p181 = por %p179, %p180
    %s182 = sadd.s32 %s20, 1
    %s183 = sadd.s32 %s27, 1
    %s184 = ssub.s32 %s182, %s183
    %p185 = scmp.eq.s32.totalorder %s184, 0
    %s187 = sadd.s32 %s186, 1
    %s188 = scalar_select %p185, %s186, %s187
    %p191 = pneg %p185
    %p192 = scmp.eq.s32.totalorder %s20, 1
    %p193 = por %p191, %p192
    %p194 = scmp.ne.s32.totalorder %s186, %s189
    %p195 = scmp.eq.s32.totalorder %s20, 0
    %p196 = por %p194, %p195
    %p197 = scmp.ne.s32.totalorder %s186, %s189
    %p198 = scmp.eq.s32.totalorder %s25, 1
    %p199 = por %p197, %p198
    %p200 = scmp.ne.s32.totalorder %s189, %s190
    %p201 = scmp.eq.s32.totalorder %s25, 0
    %p202 = por %p200, %p201
    %p203 = scmp.ne.s32.totalorder %s189, %s190
    %p204 = scmp.eq.s32.totalorder %s26, 1
    %p205 = por %p203, %p204
    %p207 = scmp.ne.s32.totalorder %s190, %s206
    %p208 = scmp.eq.s32.totalorder %s26, 0
    %p209 = por %p207, %p208
    %s210 = sadd.s32 %s20, 2
    %s211 = sadd.s32 %s27, 2
    %s212 = ssub.s32 %s210, %s211
    %p213 = scmp.eq.s32.totalorder %s212, 0
    %s215 = sadd.s32 %s214, 1
    %s216 = scalar_select %p213, %s214, %s215
    %p219 = pneg %p213
    %p220 = scmp.eq.s32.totalorder %s20, 1
    %p221 = por %p219, %p220
    %p222 = scmp.ne.s32.totalorder %s214, %s217
    %p223 = scmp.eq.s32.totalorder %s20, 0
    %p224 = por %p222, %p223
    %p225 = scmp.ne.s32.totalorder %s214, %s217
    %p226 = scmp.eq.s32.totalorder %s25, 1
    %p227 = por %p225, %p226
    %p228 = scmp.ne.s32.totalorder %s217, %s218
    %p229 = scmp.eq.s32.totalorder %s25, 0
    %p230 = por %p228, %p229
    %p231 = scmp.ne.s32.totalorder %s217, %s218
    %p232 = scmp.eq.s32.totalorder %s26, 1
    %p233 = por %p231, %p232
    %p235 = scmp.ne.s32.totalorder %s218, %s234
    %p236 = scmp.eq.s32.totalorder %s26, 0
    %p237 = por %p235, %p236
    %s239 = sadd.s32 %s238, 1
    %p242 = scmp.eq.s32.totalorder %s20, 1
    %p243 = scmp.ne.s32.totalorder %s238, %s240
    %p244 = scmp.eq.s32.totalorder %s20, 0
    %p245 = por %p243, %p244
    %p246 = scmp.ne.s32.totalorder %s238, %s240
    %p247 = scmp.eq.s32.totalorder %s25, 1
    %p248 = por %p246, %p247
    %p249 = scmp.ne.s32.totalorder %s240, %s241
    %p250 = scmp.eq.s32.totalorder %s25, 0
    %p251 = por %p249, %p250
    %p252 = scmp.ne.s32.totalorder %s240, %s241
    %p253 = scmp.eq.s32.totalorder %s26, 1
    %p254 = por %p252, %p253
    %p256 = scmp.ne.s32.totalorder %s241, %s255
    %p257 = scmp.eq.s32.totalorder %s26, 0
    %p258 = por %p256, %p257
    %s259 = sadd.s32 %s20, 1
    %s260 = sadd.s32 %s27, 1
    %s261 = ssub.s32 %s259, %s260
    %p262 = scmp.eq.s32.totalorder %s261, 0
    %s264 = sadd.s32 %s263, 1
    %s265 = scalar_select %p262, %s263, %s264
    %p268 = pneg %p262
    %p269 = scmp.eq.s32.totalorder %s20, 1
    %p270 = por %p268, %p269
    %p271 = scmp.ne.s32.totalorder %s263, %s266
    %p272 = scmp.eq.s32.totalorder %s20, 0
    %p273 = por %p271, %p272
    %p274 = scmp.ne.s32.totalorder %s263, %s266
    %p275 = scmp.eq.s32.totalorder %s25, 1
    %p276 = por %p274, %p275
    %p277 = scmp.ne.s32.totalorder %s266, %s267
    %p278 = scmp.eq.s32.totalorder %s25, 0
    %p279 = por %p277, %p278
    %p280 = scmp.ne.s32.totalorder %s266, %s267
    %p281 = scmp.eq.s32.totalorder %s26, 1
    %p282 = por %p280, %p281
    %p284 = scmp.ne.s32.totalorder %s267, %s283
    %p285 = scmp.eq.s32.totalorder %s26, 0
    %p286 = por %p284, %p285
    %s287 = sadd.s32 %s20, 2
    %s288 = sadd.s32 %s27, 2
    %s289 = ssub.s32 %s287, %s288
    %p290 = scmp.eq.s32.totalorder %s289, 0
    %s292 = sadd.s32 %s291, 1
    %s293 = scalar_select %p290, %s291, %s292
    %p296 = pneg %p290
    %p297 = scmp.eq.s32.totalorder %s20, 1
    %p298 = por %p296, %p297
    %p299 = scmp.ne.s32.totalorder %s291, %s294
    %p300 = scmp.eq.s32.totalorder %s20, 0
    %p301 = por %p299, %p300
    %p302 = scmp.ne.s32.totalorder %s291, %s294
    %p303 = scmp.eq.s32.totalorder %s25, 1
    %p304 = por %p302, %p303
    %p305 = scmp.ne.s32.totalorder %s294, %s295
    %p306 = scmp.eq.s32.totalorder %s25, 0
    %p307 = por %p305, %p306
    %p308 = scmp.ne.s32.totalorder %s294, %s295
    %p309 = scmp.eq.s32.totalorder %s26, 1
    %p310 = por %p308, %p309
    %p312 = scmp.ne.s32.totalorder %s295, %s311
    %p313 = scmp.eq.s32.totalorder %s26, 0
    %p314 = por %p312, %p313
    %s316 = sadd.s32 %s315, 1
    %p319 = scmp.eq.s32.totalorder %s20, 1
    %p320 = scmp.ne.s32.totalorder %s315, %s317
    %p321 = scmp.eq.s32.totalorder %s20, 0
    %p322 = por %p320, %p321
    %p323 = scmp.ne.s32.totalorder %s315, %s317
    %p324 = scmp.eq.s32.totalorder %s25, 1
    %p325 = por %p323, %p324
    %p326 = scmp.ne.s32.totalorder %s317, %s318
    %p327 = scmp.eq.s32.totalorder %s25, 0
    %p328 = por %p326, %p327
    %p329 = scmp.ne.s32.totalorder %s317, %s318
    %p330 = scmp.eq.s32.totalorder %s26, 1
    %p331 = por %p329, %p330
    %p333 = scmp.ne.s32.totalorder %s318, %s332
    %p334 = scmp.eq.s32.totalorder %s26, 0
    %p335 = por %p333, %p334
    %s337 = sadd.s32 %s336, 1
    %p340 = scmp.eq.s32.totalorder %s20, 1
    %p341 = scmp.ne.s32.totalorder %s336, %s338
    %p342 = scmp.eq.s32.totalorder %s20, 0
    %p343 = por %p341, %p342
    %p344 = scmp.ne.s32.totalorder %s336, %s338
    %p345 = scmp.eq.s32.totalorder %s25, 1
    %p346 = por %p344, %p345
    %p347 = scmp.ne.s32.totalorder %s338, %s339
    %p348 = scmp.eq.s32.totalorder %s25, 0
    %p349 = por %p347, %p348
    %p350 = scmp.ne.s32.totalorder %s338, %s339
    %p351 = scmp.eq.s32.totalorder %s26, 1
    %p352 = por %p350, %p351
    %p354 = scmp.ne.s32.totalorder %s339, %s353
    %p355 = scmp.eq.s32.totalorder %s26, 0
    %p356 = por %p354, %p355
    %s357 = ssub.s32 %s20, %s27
    %p358 = scmp.eq.s32.totalorder %s357, 0
    %s360 = sadd.s32 %s359, 1
    %s361 = scalar_select %p358, %s359, %s360
    %p364 = pneg %p358
    %p365 = scmp.eq.s32.totalorder %s20, 1
    %p366 = por %p364, %p365
    %p367 = scmp.ne.s32.totalorder %s359, %s362
    %p368 = scmp.eq.s32.totalorder %s20, 0
    %p369 = por %p367, %p368
    %p370 = scmp.ne.s32.totalorder %s359, %s362
    %p371 = scmp.eq.s32.totalorder %s25, 1
    %p372 = por %p370, %p371
    %p373 = scmp.ne.s32.totalorder %s362, %s363
    %p374 = scmp.eq.s32.totalorder %s25, 0
    %p375 = por %p373, %p374
    %p376 = scmp.ne.s32.totalorder %s362, %s363
    %p377 = scmp.eq.s32.totalorder %s26, 1
    %p378 = por %p376, %p377
    %p380 = scmp.ne.s32.totalorder %s363, %s379
    %p381 = scmp.eq.s32.totalorder %s26, 0
    %p382 = por %p380, %p381
    %s383 = sadd.s32 %s20, 1
    %s384 = sadd.s32 %s27, 1
    %s385 = ssub.s32 %s383, %s384
    %p386 = scmp.eq.s32.totalorder %s385, 0
    %s388 = sadd.s32 %s387, 1
    %s389 = scalar_select %p386, %s387, %s388
    %p392 = pneg %p386
    %p393 = scmp.eq.s32.totalorder %s20, 1
    %p394 = por %p392, %p393
    %p395 = scmp.ne.s32.totalorder %s387, %s390
    %p396 = scmp.eq.s32.totalorder %s20, 0
    %p397 = por %p395, %p396
    %p398 = scmp.ne.s32.totalorder %s387, %s390
    %p399 = scmp.eq.s32.totalorder %s25, 1
    %p400 = por %p398, %p399
    %p401 = scmp.ne.s32.totalorder %s390, %s391
    %p402 = scmp.eq.s32.totalorder %s25, 0
    %p403 = por %p401, %p402
    %p404 = scmp.ne.s32.totalorder %s390, %s391
    %p405 = scmp.eq.s32.totalorder %s26, 1
    %p406 = por %p404, %p405
    %p408 = scmp.ne.s32.totalorder %s391, %s407
    %p409 = scmp.eq.s32.totalorder %s26, 0
    %p410 = por %p408, %p409
    %p411 = scmp.le.s32.totalorder 1, %s20
    %p412 = scmp.lt.s32.totalorder %s20, 3
    %p413 = pnand %p411, %p412
    %p414 = pneg %p413
    // Predicated region
    $region9: #{residual_block_forward.2} parent=5 // pred_check
      _
    $region10: #{residual_block_forward.2} parent=5 // pred_check_branch
      %416 = sbr.rel (%p413) target = $region12
    $region11: #{residual_block_forward.2} parent=5 // pred_region
      %s417 = ssub.s32 %s20, 1
      // Predicated region
      $region13: #{residual_block_forward.2} parent=11 // pred_check
        %p418 = pneg %p97
      $region14: #{residual_block_forward.2} parent=11 // pred_check_branch
        %420 = sbr.rel (%p418) target = $region16
      $region15: #{residual_block_forward.2} parent=11 // pred_region
        _
      $region16: #{residual_block_forward.2} parent=11 // pred_fallthru
        _
      // Predicated region
      $region17: #{residual_block_forward.2} parent=11 // pred_check
        %p421 = pneg %p174
      $region18: #{residual_block_forward.2} parent=11 // pred_check_branch
        %423 = sbr.rel (%p421) target = $region20
      $region19: #{residual_block_forward.2} parent=11 // pred_region
        _
      $region20: #{residual_block_forward.2} parent=11 // pred_fallthru
        _
      // Predicated region
      $region21: #{residual_block_forward.2} parent=11 // pred_check
        %p424 = pneg %p251
      $region22: #{residual_block_forward.2} parent=11 // pred_check_branch
        %426 = sbr.rel (%p424) target = $region24
      $region23: #{residual_block_forward.2} parent=11 // pred_region
        _
      $region24: #{residual_block_forward.2} parent=11 // pred_fallthru
        _
      // Predicated region
      $region25: #{residual_block_forward.2} parent=11 // pred_check
        %p427 = pneg %p328
      $region26: #{residual_block_forward.2} parent=11 // pred_check_branch
        %429 = sbr.rel (%p427) target = $region28
      $region27: #{residual_block_forward.2} parent=11 // pred_region
        _
      $region28: #{residual_block_forward.2} parent=11 // pred_fallthru
        _
      // Predicated region
      $region29: #{residual_block_forward.2} parent=11 // pred_check
        %p430 = pneg %p349
      $region30: #{residual_block_forward.2} parent=11 // pred_check_branch
        %432 = sbr.rel (%p430) target = $region32
      $region31: #{residual_block_forward.2} parent=11 // pred_region
        _
      $region32: #{residual_block_forward.2} parent=11 // pred_fallthru
        _
    $region12: #{residual_block_forward.2} parent=5 // pred_fallthru
      _
    %p433 = scmp.lt.s32.totalorder %s20, 2
    // Predicated region
    $region33: #{residual_block_forward.2} parent=5 // pred_check
      %p434 = pneg %p433
    $region34: #{residual_block_forward.2} parent=5 // pred_check_branch
      %436 = sbr.rel (%p434) target = $region36
    $region35: #{residual_block_forward.2} parent=5 // pred_region
      // Predicated region
      $region37: #{residual_block_forward.2} parent=35 // pred_check
        %p437 = pneg %p42
      $region38: #{residual_block_forward.2} parent=35 // pred_check_branch
        %439 = sbr.rel (%p437) target = $region40
      $region39: #{residual_block_forward.2} parent=35 // pred_region
        %s440 = sadd.s32 %s20, 1
        %s441 = smul.u32 16, %s440
        %p442 = scmp.lt.s32.totalorder %s441, 63
        %s443 = scalar_select %p442, %s441, 63
        %s444 = smul.addr %s443, 4
        %s445 = scalar_lea.vmem %s0, %s444
        %s446 = sadd.s32 %s20, 1
        %s447 = smul.u32 16, %s446
      $region40: #{residual_block_forward.2} parent=35 // pred_fallthru
        _
      // Predicated region
      $region41: #{residual_block_forward.2} parent=35 // pred_check
        %p448 = pneg %p70
      $region42: #{residual_block_forward.2} parent=35 // pred_check_branch
        %450 = sbr.rel (%p448) target = $region44
      $region43: #{residual_block_forward.2} parent=35 // pred_region
        %s451 = sadd.s32 %s20, 2
        %s452 = smul.u32 16, %s451
        %p453 = scmp.lt.s32.totalorder %s452, 63
        %s454 = scalar_select %p453, %s452, 63
        %s455 = smul.addr %s454, 4
        %s456 = scalar_lea.vmem %s1, %s455
        %s457 = sadd.s32 %s20, 2
        %s458 = smul.u32 16, %s457
      $region44: #{residual_block_forward.2} parent=35 // pred_fallthru
        _
      // Predicated region
      $region45: #{residual_block_forward.2} parent=35 // pred_check
        %p459 = pneg %p119
      $region46: #{residual_block_forward.2} parent=35 // pred_check_branch
        %461 = sbr.rel (%p459) target = $region48
      $region47: #{residual_block_forward.2} parent=35 // pred_region
        %s462 = sadd.s32 %s20, 1
        %s463 = smul.u32 16, %s462
        %p464 = scmp.lt.s32.totalorder %s463, 63
        %s465 = scalar_select %p464, %s463, 63
        %s466 = smul.addr %s465, 4
        %s467 = scalar_lea.vmem %s3, %s466
        %s468 = sadd.s32 %s20, 1
        %s469 = smul.u32 16, %s468
      $region48: #{residual_block_forward.2} parent=35 // pred_fallthru
        _
      // Predicated region
      $region49: #{residual_block_forward.2} parent=35 // pred_check
        %p470 = pneg %p147
      $region50: #{residual_block_forward.2} parent=35 // pred_check_branch
        %472 = sbr.rel (%p470) target = $region52
      $region51: #{residual_block_forward.2} parent=35 // pred_region
        %s473 = sadd.s32 %s20, 2
        %s474 = smul.u32 16, %s473
        %p475 = scmp.lt.s32.totalorder %s474, 63
        %s476 = scalar_select %p475, %s474, 63
        %s477 = smul.addr %s476, 4
        %s478 = scalar_lea.vmem %s4, %s477
        %s479 = sadd.s32 %s20, 2
        %s480 = smul.u32 16, %s479
      $region52: #{residual_block_forward.2} parent=35 // pred_fallthru
        _
      // Predicated region
      $region53: #{residual_block_forward.2} parent=35 // pred_check
        %p481 = pneg %p196
      $region54: #{residual_block_forward.2} parent=35 // pred_check_branch
        %483 = sbr.rel (%p481) target = $region56
      $region55: #{residual_block_forward.2} parent=35 // pred_region
        %s484 = sadd.s32 %s20, 1
        %s485 = smul.u32 16, %s484
        %p486 = scmp.lt.s32.totalorder %s485, 63
        %s487 = scalar_select %p486, %s485, 63
        %s488 = smul.addr %s487, 4
        %s489 = scalar_lea.vmem %s6, %s488
        %s490 = sadd.s32 %s20, 1
        %s491 = smul.u32 16, %s490
      $region56: #{residual_block_forward.2} parent=35 // pred_fallthru
        _
      // Predicated region
      $region57: #{residual_block_forward.2} parent=35 // pred_check
        %p492 = pneg %p224
      $region58: #{residual_block_forward.2} parent=35 // pred_check_branch
        %494 = sbr.rel (%p492) target = $region60
      $region59: #{residual_block_forward.2} parent=35 // pred_region
        %s495 = sadd.s32 %s20, 2
        %s496 = smul.u32 16, %s495
        %p497 = scmp.lt.s32.totalorder %s496, 63
        %s498 = scalar_select %p497, %s496, 63
        %s499 = smul.addr %s498, 4
        %s500 = scalar_lea.vmem %s7, %s499
        %s501 = sadd.s32 %s20, 2
        %s502 = smul.u32 16, %s501
      $region60: #{residual_block_forward.2} parent=35 // pred_fallthru
        _
      // Predicated region
      $region61: #{residual_block_forward.2} parent=35 // pred_check
        %p503 = pneg %p273
      $region62: #{residual_block_forward.2} parent=35 // pred_check_branch
        %505 = sbr.rel (%p503) target = $region64
      $region63: #{residual_block_forward.2} parent=35 // pred_region
        %s506 = sadd.s32 %s20, 1
        %s507 = smul.u32 16, %s506
        %p508 = scmp.lt.s32.totalorder %s507, 63
        %s509 = scalar_select %p508, %s507, 63
        %s510 = smul.addr %s509, 4
        %s511 = scalar_lea.vmem %s9, %s510
        %s512 = sadd.s32 %s20, 1
        %s513 = smul.u32 16, %s512
      $region64: #{residual_block_forward.2} parent=35 // pred_fallthru
        _
      // Predicated region
      $region65: #{residual_block_forward.2} parent=35 // pred_check
        %p514 = pneg %p301
      $region66: #{residual_block_forward.2} parent=35 // pred_check_branch
        %516 = sbr.rel (%p514) target = $region68
      $region67: #{residual_block_forward.2} parent=35 // pred_region
        %s517 = sadd.s32 %s20, 2
        %s518 = smul.u32 16, %s517
        %p519 = scmp.lt.s32.totalorder %s518, 63
        %s520 = scalar_select %p519, %s518, 63
        %s521 = smul.addr %s520, 4
        %s522 = scalar_lea.vmem %s10, %s521
        %s523 = sadd.s32 %s20, 2
        %s524 = smul.u32 16, %s523
      $region68: #{residual_block_forward.2} parent=35 // pred_fallthru
        _
      // Predicated region
      $region69: #{residual_block_forward.2} parent=35 // pred_check
        %p525 = pneg %p369
      $region70: #{residual_block_forward.2} parent=35 // pred_check_branch
        %527 = sbr.rel (%p525) target = $region72
      $region71: #{residual_block_forward.2} parent=35 // pred_region
        %s528 = smul.u32 16, %s20
        %p529 = scmp.lt.s32.totalorder %s528, 31
        %s530 = scalar_select %p529, %s528, 31
        %s531 = smul.addr %s530, 8
        %s532 = scalar_lea.vmem %s13, %s531
        %s533 = smul.u32 16, %s20
      $region72: #{residual_block_forward.2} parent=35 // pred_fallthru
        _
    $region36: #{residual_block_forward.2} parent=5 // pred_fallthru
      _
    %p534 = scmp.le.s32.totalorder 1, %s20
    %p535 = scmp.lt.s32.totalorder %s20, 3
    %p536 = pnand %p534, %p535
    %p537 = pneg %p536
    // Predicated region
    $region73: #{residual_block_forward.2} parent=5 // pred_check
      _
    $region74: #{residual_block_forward.2} parent=5 // pred_check_branch
      %539 = sbr.rel (%p536) target = $region76
    $region75: #{residual_block_forward.2} parent=5 // pred_region
      %s540 = ssub.s32 %s20, 1
      %s541 = sadd.s32 %s25, 1
      %s542 = smul.u32 16, %s541
      %p543 = scmp.lt.s32.totalorder %s542, 63
      %s544 = scalar_select %p543, %s542, 63
      %s545 = smul.addr %s544, 4
      %s546 = scalar_lea.vmem %s0, %s545
      %p547 = pneg %p48
      %p548 = pneg %p45
      %s549 = sadd.s32 %s25, 2
      %s550 = smul.u32 16, %s549
      %p551 = scmp.lt.s32.totalorder %s550, 63
      %s552 = scalar_select %p551, %s550, 63
      %s553 = smul.addr %s552, 4
      %s554 = scalar_lea.vmem %s1, %s553
      %p555 = pneg %p76
      %p556 = pneg %p73
      %p557 = pneg %p97
      %p558 = pneg %p94
      %s559 = sadd.s32 %s25, 1
      %s560 = smul.u32 16, %s559
      %p561 = scmp.lt.s32.totalorder %s560, 63
      %s562 = scalar_select %p561, %s560, 63
      %s563 = smul.addr %s562, 4
      %s564 = scalar_lea.vmem %s3, %s563
      %p565 = pneg %p125
      %p566 = pneg %p122
      %s567 = sadd.s32 %s25, 2
      %s568 = smul.u32 16, %s567
      %p569 = scmp.lt.s32.totalorder %s568, 63
      %s570 = scalar_select %p569, %s568, 63
      %s571 = smul.addr %s570, 4
      %s572 = scalar_lea.vmem %s4, %s571
      %p573 = pneg %p153
      %p574 = pneg %p150
      %p575 = pneg %p174
      %p576 = pneg %p171
      %s577 = sadd.s32 %s25, 1
      %s578 = smul.u32 16, %s577
      %p579 = scmp.lt.s32.totalorder %s578, 63
      %s580 = scalar_select %p579, %s578, 63
      %s581 = smul.addr %s580, 4
      %s582 = scalar_lea.vmem %s6, %s581
      %p583 = pneg %p202
      %p584 = pneg %p199
      %s585 = sadd.s32 %s25, 2
      %s586 = smul.u32 16, %s585
      %p587 = scmp.lt.s32.totalorder %s586, 63
      %s588 = scalar_select %p587, %s586, 63
      %s589 = smul.addr %s588, 4
      %s590 = scalar_lea.vmem %s7, %s589
      %p591 = pneg %p230
      %p592 = pneg %p227
      %p593 = pneg %p251
      %p594 = pneg %p248
      %s595 = sadd.s32 %s25, 1
      %s596 = smul.u32 16, %s595
      %p597 = scmp.lt.s32.totalorder %s596, 63
      %s598 = scalar_select %p597, %s596, 63
      %s599 = smul.addr %s598, 4
      %s600 = scalar_lea.vmem %s9, %s599
      %p601 = pneg %p279
      %p602 = pneg %p276
      %s603 = sadd.s32 %s25, 2
      %s604 = smul.u32 16, %s603
      %p605 = scmp.lt.s32.totalorder %s604, 63
      %s606 = scalar_select %p605, %s604, 63
      %s607 = smul.addr %s606, 4
      %s608 = scalar_lea.vmem %s10, %s607
      %p609 = pneg %p307
      %p610 = pneg %p304
      %p611 = pneg %p328
      %p612 = pneg %p325
      %p613 = pneg %p349
      %p614 = pneg %p346
      %s615 = smul.u32 16, %s25
      %p616 = scmp.lt.s32.totalorder %s615, 31
      %s617 = scalar_select %p616, %s615, 31
      %s618 = smul.addr %s617, 8
      %s619 = scalar_lea.vmem %s13, %s618
      %p620 = pneg %p375
      %p621 = pneg %p372
      %p622 = pneg %p403
      %p623 = pneg %p400
      %s624 = sadd.s32 %s25, 1
      %s625 = smul.u32 16, %s624
      %p626 = scmp.lt.s32.totalorder %s625, 63
      %s627 = scalar_select %p626, %s625, 63
      %s628 = smul.addr %s627, 4
      %s629 = scalar_lea.vmem %s14, %s628
      %s630 = sadd.s32 %s25, 1
      %s631 = smul.u32 16, %s630
      %p632 = scmp.lt.s32.totalorder %s631, 63
      %s633 = scalar_select %p632, %s631, 63
      %s634 = smul.addr %s633, 4
      %s635 = scalar_lea.vmem %s0, %s634
      %s636 = sadd.s32 %s25, 1
      %s637 = smul.u32 16, %s636
      %s638 = sadd.s32 %s25, 2
      %s639 = smul.u32 16, %s638
      %p640 = scmp.lt.s32.totalorder %s639, 63
      %s641 = scalar_select %p640, %s639, 63
      %s642 = smul.addr %s641, 4
      %s643 = scalar_lea.vmem %s1, %s642
      %s644 = sadd.s32 %s25, 2
      %s645 = smul.u32 16, %s644
      %s646 = sadd.s32 %s25, 1
      %s647 = smul.u32 16, %s646
      %p648 = scmp.lt.s32.totalorder %s647, 63
      %s649 = scalar_select %p648, %s647, 63
      %s650 = smul.addr %s649, 4
      %s651 = scalar_lea.vmem %s3, %s650
      %s652 = sadd.s32 %s25, 1
      %s653 = smul.u32 16, %s652
      %s654 = sadd.s32 %s25, 2
      %s655 = smul.u32 16, %s654
      %p656 = scmp.lt.s32.totalorder %s655, 63
      %s657 = scalar_select %p656, %s655, 63
      %s658 = smul.addr %s657, 4
      %s659 = scalar_lea.vmem %s4, %s658
      %s660 = sadd.s32 %s25, 2
      %s661 = smul.u32 16, %s660
      %s662 = sadd.s32 %s25, 1
      %s663 = smul.u32 16, %s662
      %p664 = scmp.lt.s32.totalorder %s663, 63
      %s665 = scalar_select %p664, %s663, 63
      %s666 = smul.addr %s665, 4
      %s667 = scalar_lea.vmem %s6, %s666
      %s668 = sadd.s32 %s25, 1
      %s669 = smul.u32 16, %s668
      %s670 = sadd.s32 %s25, 2
      %s671 = smul.u32 16, %s670
      %p672 = scmp.lt.s32.totalorder %s671, 63
      %s673 = scalar_select %p672, %s671, 63
      %s674 = smul.addr %s673, 4
      %s675 = scalar_lea.vmem %s7, %s674
      %s676 = sadd.s32 %s25, 2
      %s677 = smul.u32 16, %s676
      %s678 = sadd.s32 %s25, 1
      %s679 = smul.u32 16, %s678
      %p680 = scmp.lt.s32.totalorder %s679, 63
      %s681 = scalar_select %p680, %s679, 63
      %s682 = smul.addr %s681, 4
      %s683 = scalar_lea.vmem %s9, %s682
      %s684 = sadd.s32 %s25, 1
      %s685 = smul.u32 16, %s684
      %s686 = sadd.s32 %s25, 2
      %s687 = smul.u32 16, %s686
      %p688 = scmp.lt.s32.totalorder %s687, 63
      %s689 = scalar_select %p688, %s687, 63
      %s690 = smul.addr %s689, 4
      %s691 = scalar_lea.vmem %s10, %s690
      %s692 = sadd.s32 %s25, 2
      %s693 = smul.u32 16, %s692
      %s694 = smul.u32 16, %s25
      %p695 = scmp.lt.s32.totalorder %s694, 31
      %s696 = scalar_select %p695, %s694, 31
      %s697 = smul.addr %s696, 8
      %s698 = scalar_lea.vmem %s13, %s697
      %s699 = smul.u32 16, %s25
      %s700 = sadd.s32 %s25, 1
      %s701 = smul.u32 16, %s700
      %p702 = scmp.lt.s32.totalorder %s701, 63
      %s703 = scalar_select %p702, %s701, 63
      %s704 = smul.addr %s703, 4
      %s705 = scalar_lea.vmem %s14, %s704
      %s706 = sadd.s32 %s25, 1
      %s707 = smul.u32 16, %s706
      %v709 = vld [vmem:[%s635] sm:$0xf]
      %v710 = vld [vmem:[%s635 + $0x4] sm:$0xf]
      %v711 = vld [vmem:[%s635 + $0x8] sm:$0xf]
      %v712 = vld [vmem:[%s635 + $0xc] sm:$0xf]
      %v713 = vld [vmem:[%s635 + $0x10] sm:$0xf]
      %v714 = vld [vmem:[%s635 + $0x14] sm:$0xf]
      %v715 = vld [vmem:[%s635 + $0x18] sm:$0xf]
      %v716 = vld [vmem:[%s635 + $0x1c] sm:$0xf]
      %v717 = vld [vmem:[%s635 + $0x20] sm:$0xf]
      %v718 = vld [vmem:[%s635 + $0x24] sm:$0xf]
      %v719 = vld [vmem:[%s635 + $0x28] sm:$0xf]
      %v720 = vld [vmem:[%s635 + $0x2c] sm:$0xf]
      %v721 = vld [vmem:[%s635 + $0x30] sm:$0xf]
      %v722 = vld [vmem:[%s635 + $0x34] sm:$0xf]
      %v723 = vld [vmem:[%s635 + $0x38] sm:$0xf]
      %v724 = vld [vmem:[%s635 + $0x3c] sm:$0xf]
      %v725 = vld [vmem:[%s643] sm:$0xf]
      %v726 = vld [vmem:[%s643 + $0x4] sm:$0xf]
      %v743 = vunpack.c.l.b16 %v709
      %v744 = vunpack.c.l.b16 %v710
      %v745 = vunpack.c.l.b16 %v711
      %v746 = vunpack.c.l.b16 %v712
      %v747 = vunpack.c.l.b16 %v713
      %v748 = vunpack.c.l.b16 %v714
      %v749 = vunpack.c.l.b16 %v715
      %v750 = vunpack.c.l.b16 %v716
      %v751 = vunpack.c.l.b16 %v717
      %v752 = vunpack.c.l.b16 %v718
      %v753 = vunpack.c.l.b16 %v719
      %v754 = vunpack.c.l.b16 %v720
      %v755 = vunpack.c.l.b16 %v721
      %v756 = vunpack.c.l.b16 %v722
      %v757 = vunpack.c.l.b16 %v723
      %v758 = vunpack.c.l.b16 %v724
      %v759 = vpack.c.b16 %v744, %v743
      %v760 = vpack.c.b16 %v746, %v745
      %v761 = vpack.c.b16 %v748, %v747
      %v762 = vpack.c.b16 %v750, %v749
      %v763 = vpack.c.b16 %v752, %v751
      %v764 = vpack.c.b16 %v754, %v753
      %v765 = vpack.c.b16 %v756, %v755
      %v766 = vpack.c.b16 %v758, %v757
      %v777 = vunpack.c.l.b16 %v725
      %v778 = vunpack.c.l.b16 %v726
      %v779 = vpack.c.b16 %v778, %v777
      %v780 = vld [vmem:[%s2] sm:$0xf]
      %v781 = vld [vmem:[%s2 + $0x4] sm:$0xf]
      %v782 = vld [vmem:[%s2 + $0x8] sm:$0xf]
      %v783 = vld [vmem:[%s2 + $0xc] sm:$0xf]
      %v784 = vld [vmem:[%s2 + $0x10] sm:$0xf]
      %v785 = vld [vmem:[%s2 + $0x14] sm:$0xf]
      %v786 = vld [vmem:[%s2 + $0x18] sm:$0xf]
      %v787 = vld [vmem:[%s2 + $0x1c] sm:$0xf]
      %v788 = vld [vmem:[%s2 + $0x20] sm:$0xf]
      %v789 = vld [vmem:[%s2 + $0x24] sm:$0xf]
      %v790 = vld [vmem:[%s2 + $0x28] sm:$0xf]
      %v791 = vld [vmem:[%s2 + $0x2c] sm:$0xf]
      %v792 = vld [vmem:[%s2 + $0x30] sm:$0xf]
      %v793 = vld [vmem:[%s2 + $0x34] sm:$0xf]
      %v794 = vld [vmem:[%s2 + $0x38] sm:$0xf]
      %v795 = vld [vmem:[%s2 + $0x3c] sm:$0xf]
      %s796 = scalar_lea.vmem %s2, 64
      %v797 = vld [vmem:[%s796] sm:$0xf]
      %v798 = vld [vmem:[%s796 + $0x4] sm:$0xf]
      %v799 = vld [vmem:[%s796 + $0x8] sm:$0xf]
      %v800 = vld [vmem:[%s796 + $0xc] sm:$0xf]
      %v801 = vld [vmem:[%s796 + $0x10] sm:$0xf]
      %v802 = vld [vmem:[%s796 + $0x14] sm:$0xf]
      %v803 = vld [vmem:[%s796 + $0x18] sm:$0xf]
      %v804 = vld [vmem:[%s796 + $0x1c] sm:$0xf]
      %v805 = vld [vmem:[%s796 + $0x20] sm:$0xf]
      %v806 = vld [vmem:[%s796 + $0x24] sm:$0xf]
      %v807 = vld [vmem:[%s796 + $0x28] sm:$0xf]
      %v808 = vld [vmem:[%s796 + $0x2c] sm:$0xf]
      %v809 = vld [vmem:[%s796 + $0x30] sm:$0xf]
      %v810 = vld [vmem:[%s796 + $0x34] sm:$0xf]
      %v811 = vld [vmem:[%s796 + $0x38] sm:$0xf]
      %v812 = vld [vmem:[%s796 + $0x3c] sm:$0xf]
      %vm813 = vsmask.f32 7424
      %v815 = vshrl.u32 %v759, 16
      %v817 = vshll.u32 %v759, 16
      %v819 = vrot.slane %v817, 1
      %v820 = vor.u32 %v815, %v819
      %v822 = vshll.u32 %v760, 16
      %v824 = vrot.slane %v822, 1
      %v825 = vsel %vm813, %v820, %v824
      %v826 = vshrl.u32 %v760, 16
      %v828 = vor.u32 %v826, %v824
      %v830 = vshll.u32 %v761, 16
      %v832 = vrot.slane %v830, 1
      %v833 = vsel %vm813, %v828, %v832
      %v834 = vshrl.u32 %v761, 16
      %v836 = vor.u32 %v834, %v832
      %v838 = vshll.u32 %v762, 16
      %v840 = vrot.slane %v838, 1
      %v841 = vsel %vm813, %v836, %v840
      %v842 = vshrl.u32 %v762, 16
      %v844 = vor.u32 %v842, %v840
      %v846 = vshll.u32 %v763, 16
      %v848 = vrot.slane %v846, 1
      %v849 = vsel %vm813, %v844, %v848
      %v850 = vshrl.u32 %v763, 16
      %v852 = vor.u32 %v850, %v848
      %v854 = vshll.u32 %v764, 16
      %v856 = vrot.slane %v854, 1
      %v857 = vsel %vm813, %v852, %v856
      %v858 = vshrl.u32 %v764, 16
      %v860 = vor.u32 %v858, %v856
      %v862 = vshll.u32 %v765, 16
      %v864 = vrot.slane %v862, 1
      %v865 = vsel %vm813, %v860, %v864
      %v866 = vshrl.u32 %v765, 16
      %v868 = vor.u32 %v866, %v864
      %v870 = vshll.u32 %v766, 16
      %v872 = vrot.slane %v870, 1
      %v873 = vsel %vm813, %v868, %v872
      %v874 = vshrl.u32 %v766, 16
      %v876 = vor.u32 %v874, %v872
      %v878 = vshll.u32 %v779, 16
      %v880 = vrot.slane %v878, 1
      %v881 = vsel %vm813, %v876, %v880
      %v906 = vunpack.c.l.b16 %v797
      %v907 = vunpack.c.l.b16 %v798
      %v908 = vunpack.c.l.b16 %v799
      %v909 = vunpack.c.l.b16 %v800
      %v910 = vunpack.c.l.b16 %v801
      %v911 = vunpack.c.l.b16 %v802
      %v912 = vunpack.c.l.b16 %v803
      %v913 = vunpack.c.l.b16 %v804
      %v914 = vunpack.c.l.b16 %v805
      %v915 = vunpack.c.l.b16 %v806
      %v916 = vunpack.c.l.b16 %v807
      %v917 = vunpack.c.l.b16 %v808
      %v918 = vunpack.c.l.b16 %v809
      %v919 = vunpack.c.l.b16 %v810
      %v920 = vunpack.c.l.b16 %v811
      %v921 = vunpack.c.l.b16 %v812
      %v922 = vpack.c.b16 %v907, %v906
      %v923 = vpack.c.b16 %v909, %v908
      %v924 = vpack.c.b16 %v911, %v910
      %v925 = vpack.c.b16 %v913, %v912
      %v926 = vpack.c.b16 %v915, %v914
      %v927 = vpack.c.b16 %v917, %v916
      %v928 = vpack.c.b16 %v919, %v918
      %v929 = vpack.c.b16 %v921, %v920
      %938 = vmatprep.subr.bf16.mxu0 0
      %939 = vmatpush1.bf16.msra.mxu0 %v922
      %940 = vmatprep.subr.bf16.mxu0 0
      %941 = vmatpush1.bf16.msra.mxu0 %v923
      %942 = vmatprep.subr.bf16.mxu0 0
      %943 = vmatpush1.bf16.msra.mxu0 %v924
      %944 = vmatprep.subr.bf16.mxu0 0
      %945 = vmatpush1.bf16.msra.mxu0 %v925
      %946 = vmatprep.subr.bf16.mxu0 0
      %947 = vmatpush1.bf16.msra.mxu0 %v926
      %948 = vmatprep.subr.bf16.mxu0 0
      %949 = vmatpush1.bf16.msra.mxu0 %v927
      %950 = vmatprep.subr.bf16.mxu0 0
      %951 = vmatpush1.bf16.msra.mxu0 %v928
      %952 = vmatprep.subr.bf16.mxu0 0
      %953 = vmatpush1.bf16.msra.mxu0 %v929
      %954 = vmatprep.subr.bf16.mxu0 0
      %955 = vmatpush1.bf16.msra.mxu0 0
      %956 = vmatprep.subr.bf16.mxu0 0
      %957 = vmatpush1.bf16.msra.mxu0 0
      %958 = vmatprep.subr.bf16.mxu0 0
      %959 = vmatpush1.bf16.msra.mxu0 0
      %960 = vmatprep.subr.bf16.mxu0 0
      %961 = vmatpush1.bf16.msra.mxu0 0
      %962 = vmatprep.subr.bf16.mxu0 0
      %963 = vmatpush1.bf16.msra.mxu0 0
      %964 = vmatprep.subr.bf16.mxu0 0
      %965 = vmatpush1.bf16.msra.mxu0 0
      %966 = vmatprep.subr.bf16.mxu0 0
      %967 = vmatpush1.bf16.msra.mxu0 0
      %968 = vmatprep.subr.bf16.mxu0 0
      %969 = vmatpush1.bf16.msra.mxu0 0
      %970 = vmatprep.mubr.bf16.mxu0 0
      %971 = vmatmul.mubr.bf16.gmra.mrb[0].mxu0 %v825
      %v972 = vpop.f32.mrb[0].mxu0
      %v973 = vadd.f32 0.0, %v972
      %v974 = vpop.f32.mrb[0].mxu0
      %v975 = vpop.f32.mrb[0].mxu0
      %v976 = vadd.f32 0.0, %v975
      %v977 = vpop.f32.mrb[0].mxu0
      %978 = vmatprep.mubr.bf16.mxu0 0
      %979 = vmatmul.mubr.bf16.gmra.mrb[0].mxu0 %v833
      %v980 = vpop.f32.mrb[0].mxu0
      %v981 = vadd.f32 0.0, %v980
      %v982 = vpop.f32.mrb[0].mxu0
      %v983 = vpop.f32.mrb[0].mxu0
      %v984 = vadd.f32 0.0, %v983
      %v985 = vpop.f32.mrb[0].mxu0
      %986 = vmatprep.mubr.bf16.mxu0 0
      %987 = vmatmul.mubr.bf16.gmra.mrb[0].mxu0 %v841
      %v988 = vpop.f32.mrb[0].mxu0
      %v989 = vadd.f32 0.0, %v988
      %v990 = vpop.f32.mrb[0].mxu0
      %v991 = vpop.f32.mrb[0].mxu0
      %v992 = vadd.f32 0.0, %v991
      %v993 = vpop.f32.mrb[0].mxu0
      %994 = vmatprep.mubr.bf16.mxu0 0
      %995 = vmatmul.mubr.bf16.gmra.mrb[0].mxu0 %v849
      %v996 = vpop.f32.mrb[0].mxu0
      %v997 = vadd.f32 0.0, %v996
      %v998 = vpop.f32.mrb[0].mxu0
      %v999 = vpop.f32.mrb[0].mxu0
      %v1000 = vadd.f32 0.0, %v999
      %v1001 = vpop.f32.mrb[0].mxu0
      %1002 = vmatprep.mubr.bf16.mxu0 0
      %1003 = vmatmul.mubr.bf16.gmra.mrb[0].mxu0 %v857
      %v1004 = vpop.f32.mrb[0].mxu0
      %v1005 = vadd.f32 0.0, %v1004
      %v1006 = vpop.f32.mrb[0].mxu0
      %v1007 = vpop.f32.mrb[0].mxu0
      %v1008 = vadd.f32 0.0, %v1007
      %v1009 = vpop.f32.mrb[0].mxu0
      %1010 = vmatprep.mubr.bf16.mxu0 0
      %1011 = vmatmul.mubr.bf16.gmra.mrb[0].mxu0 %v865
      %v1012 = vpop.f32.mrb[0].mxu0
      %v1013 = vadd.f32 0.0, %v1012
      %v1014 = vpop.f32.mrb[0].mxu0
      %v1015 = vpop.f32.mrb[0].mxu0
      %v1016 = vadd.f32 0.0, %v1015
      %v1017 = vpop.f32.mrb[0].mxu0
      %1018 = vmatprep.mubr.bf16.mxu0 0
      %1019 = vmatmul.mubr.bf16.gmra.mrb[0].mxu0 %v873
      %v1020 = vpop.f32.mrb[0].mxu0
      %v1021 = vadd.f32 0.0, %v1020
      %v1022 = vpop.f32.mrb[0].mxu0
      %v1023 = vpop.f32.mrb[0].mxu0
      %v1024 = vadd.f32 0.0, %v1023
      %v1025 = vpop.f32.mrb[0].mxu0
      %1026 = vmatprep.mubr.bf16.mxu0 0
      %1027 = vmatmul.mubr.bf16.gmra.mrb[0].mxu0 %v881
      %v1028 = vpop.f32.mrb[0].mxu0
      %v1029 = vadd.f32 0.0, %v1028
      %v1030 = vpop.f32.mrb[0].mxu0
      %v1031 = vpop.f32.mrb[0].mxu0
      %v1032 = vadd.f32 0.0, %v1031
      %v1033 = vpop.f32.mrb[0].mxu0
      %1034 = vdwg.mxu0
      %v1051 = vunpack.c.l.b16 %v780
      %v1052 = vunpack.c.l.b16 %v781
      %v1053 = vunpack.c.l.b16 %v782
      %v1054 = vunpack.c.l.b16 %v783
      %v1055 = vunpack.c.l.b16 %v784
      %v1056 = vunpack.c.l.b16 %v785
      %v1057 = vunpack.c.l.b16 %v786
      %v1058 = vunpack.c.l.b16 %v787
      %v1059 = vunpack.c.l.b16 %v788
      %v1060 = vunpack.c.l.b16 %v789
      %v1061 = vunpack.c.l.b16 %v790
      %v1062 = vunpack.c.l.b16 %v791
      %v1063 = vunpack.c.l.b16 %v792
      %v1064 = vunpack.c.l.b16 %v793
      %v1065 = vunpack.c.l.b16 %v794
      %v1066 = vunpack.c.l.b16 %v795
      %v1067 = vpack.c.b16 %v1052, %v1051
      %v1068 = vpack.c.b16 %v1054, %v1053
      %v1069 = vpack.c.b16 %v1056, %v1055
      %v1070 = vpack.c.b16 %v1058, %v1057
      %v1071 = vpack.c.b16 %v1060, %v1059
      %v1072 = vpack.c.b16 %v1062, %v1061
      %v1073 = vpack.c.b16 %v1064, %v1063
      %v1074 = vpack.c.b16 %v1066, %v1065
      %1083 = vmatprep.subr.bf16.mxu0 0
      %1084 = vmatpush1.bf16.msra.mxu0 %v1067
      %1085 = vmatprep.subr.bf16.mxu0 0
      %1086 = vmatpush1.bf16.msra.mxu0 %v1068
      %1087 = vmatprep.subr.bf16.mxu0 0
      %1088 = vmatpush1.bf16.msra.mxu0 %v1069
      %1089 = vmatprep.subr.bf16.mxu0 0
      %1090 = vmatpush1.bf16.msra.mxu0 %v1070
      %1091 = vmatprep.subr.bf16.mxu0 0
      %1092 = vmatpush1.bf16.msra.mxu0 %v1071
      %1093 = vmatprep.subr.bf16.mxu0 0
      %1094 = vmatpush1.bf16.msra.mxu0 %v1072
      %1095 = vmatprep.subr.bf16.mxu0 0
      %1096 = vmatpush1.bf16.msra.mxu0 %v1073
      %1097 = vmatprep.subr.bf16.mxu0 0
      %1098 = vmatpush1.bf16.msra.mxu0 %v1074
      %1099 = vmatprep.subr.bf16.mxu0 0
      %1100 = vmatpush1.bf16.msra.mxu0 0
      %1101 = vmatprep.subr.bf16.mxu0 0
      %1102 = vmatpush1.bf16.msra.mxu0 0
      %1103 = vmatprep.subr.bf16.mxu0 0
      %1104 = vmatpush1.bf16.msra.mxu0 0
      %1105 = vmatprep.subr.bf16.mxu0 0
      %1106 = vmatpush1.bf16.msra.mxu0 0
      %1107 = vmatprep.subr.bf16.mxu0 0
      %1108 = vmatpush1.bf16.msra.mxu0 0
      %1109 = vmatprep.subr.bf16.mxu0 0
      %1110 = vmatpush1.bf16.msra.mxu0 0
      %1111 = vmatprep.subr.bf16.mxu0 0
      %1112 = vmatpush1.bf16.msra.mxu0 0
      %1113 = vmatprep.subr.bf16.mxu0 0
      %1114 = vmatpush1.bf16.msra.mxu0 0
      %1115 = vmatprep.mubr.bf16.mxu0 0
      %1116 = vmatmul.mubr.bf16.gmra.mrb[0].mxu0 %v759
      %v1117 = vpop.f32.mrb[0].mxu0
      %v1118 = vadd.f32 %v973, %v1117
      %v1119 = vpop.f32.mrb[0].mxu0
      %v1120 = vpop.f32.mrb[0].mxu0
      %v1121 = vadd.f32 %v976, %v1120
      %v1122 = vpop.f32.mrb[0].mxu0
      %1123 = vmatprep.mubr.bf16.mxu0 0
      %1124 = vmatmul.mubr.bf16.gmra.mrb[0].mxu0 %v760
      %v1125 = vpop.f32.mrb[0].mxu0
      %v1126 = vadd.f32 %v981, %v1125
      %v1127 = vpop.f32.mrb[0].mxu0
      %v1128 = vpop.f32.mrb[0].mxu0
      %v1129 = vadd.f32 %v984, %v1128
      %v1130 = vpop.f32.mrb[0].mxu0
      %1131 = vmatprep.mubr.bf16.mxu0 0
      %1132 = vmatmul.mubr.bf16.gmra.mrb[0].mxu0 %v761
      %v1133 = vpop.f32.mrb[0].mxu0
      %v1134 = vadd.f32 %v989, %v1133
      %v1135 = vpop.f32.mrb[0].mxu0
      %v1136 = vpop.f32.mrb[0].mxu0
      %v1137 = vadd.f32 %v992, %v1136
      %v1138 = vpop.f32.mrb[0].mxu0
      %1139 = vmatprep.mubr.bf16.mxu0 0
      %1140 = vmatmul.mubr.bf16.gmra.mrb[0].mxu0 %v762
      %v1141 = vpop.f32.mrb[0].mxu0
      %v1142 = vadd.f32 %v997, %v1141
      %v1143 = vpop.f32.mrb[0].mxu0
      %v1144 = vpop.f32.mrb[0].mxu0
      %v1145 = vadd.f32 %v1000, %v1144
      %v1146 = vpop.f32.mrb[0].mxu0
      %1147 = vmatprep.mubr.bf16.mxu0 0
      %1148 = vmatmul.mubr.bf16.gmra.mrb[0].mxu0 %v763
      %v1149 = vpop.f32.mrb[0].mxu0
      %v1150 = vadd.f32 %v1005, %v1149
      %v1151 = vpop.f32.mrb[0].mxu0
      %v1152 = vpop.f32.mrb[0].mxu0
      %v1153 = vadd.f32 %v1008, %v1152
      %v1154 = vpop.f32.mrb[0].mxu0
      %1155 = vmatprep.mubr.bf16.mxu0 0
      %1156 = vmatmul.mubr.bf16.gmra.mrb[0].mxu0 %v764
      %v1157 = vpop.f32.mrb[0].mxu0
      %v1158 = vadd.f32 %v1013, %v1157
      %v1159 = vpop.f32.mrb[0].mxu0
      %v1160 = vpop.f32.mrb[0].mxu0
      %v1161 = vadd.f32 %v1016, %v1160
      %v1162 = vpop.f32.mrb[0].mxu0
      %1163 = vmatprep.mubr.bf16.mxu0 0
      %1164 = vmatmul.mubr.bf16.gmra.mrb[0].mxu0 %v765
      %v1165 = vpop.f32.mrb[0].mxu0
      %v1166 = vadd.f32 %v1021, %v1165
      %v1167 = vpop.f32.mrb[0].mxu0
      %v1168 = vpop.f32.mrb[0].mxu0
      %v1169 = vadd.f32 %v1024, %v1168
      %v1170 = vpop.f32.mrb[0].mxu0
      %1171 = vmatprep.mubr.bf16.mxu0 0
      %1172 = vmatmul.mubr.bf16.gmra.mrb[0].mxu0 %v766
      %v1173 = vpop.f32.mrb[0].mxu0
      %v1174 = vadd.f32 %v1029, %v1173
      %v1175 = vpop.f32.mrb[0].mxu0
      %v1176 = vpop.f32.mrb[0].mxu0
      %v1177 = vadd.f32 %v1032, %v1176
      %v1178 = vpop.f32.mrb[0].mxu0
      %1179 = vdwg.mxu0
      %s1180 = scalar_lea.vmem %s2, 128
      %v1181 = vld [vmem:[%s1180] sm:$0xf]
      %v1182 = vld [vmem:[%s1180 + $0x4] sm:$0xf]
      %v1183 = vld [vmem:[%s1180 + $0x8] sm:$0xf]
      %v1184 = vld [vmem:[%s1180 + $0xc] sm:$0xf]
      %v1185 = vld [vmem:[%s1180 + $0x10] sm:$0xf]
      %v1186 = vld [vmem:[%s1180 + $0x14] sm:$0xf]
      %v1187 = vld [vmem:[%s1180 + $0x18] sm:$0xf]
      %v1188 = vld [vmem:[%s1180 + $0x1c] sm:$0xf]
      %v1189 = vld [vmem:[%s1180 + $0x20] sm:$0xf]
      %v1190 = vld [vmem:[%s1180 + $0x24] sm:$0xf]
      %v1191 = vld [vmem:[%s1180 + $0x28] sm:$0xf]
      %v1192 = vld [vmem:[%s1180 + $0x2c] sm:$0xf]
      %v1193 = vld [vmem:[%s1180 + $0x30] sm:$0xf]
      %v1194 = vld [vmem:[%s1180 + $0x34] sm:$0xf]
      %v1195 = vld [vmem:[%s1180 + $0x38] sm:$0xf]
      %v1196 = vld [vmem:[%s1180 + $0x3c] sm:$0xf]
      %vm1197 = vcmask 1042432
      %v1198 = vrot.slane %v759, 5
      %v1199 = vrot.slane %v760, 5
      %v1200 = vsel %vm1197, %v1198, %v1199
      %v1201 = vrot.slane %v761, 5
      %v1202 = vsel %vm1197, %v1199, %v1201
      %v1203 = vrot.slane %v762, 5
      %v1204 = vsel %vm1197, %v1201, %v1203
      %v1205 = vrot.slane %v763, 5
      %v1206 = vsel %vm1197, %v1203, %v1205
      %v1207 = vrot.slane %v764, 5
      %v1208 = vsel %vm1197, %v1205, %v1207
      %v1209 = vrot.slane %v765, 5
      %v1210 = vsel %vm1197, %v1207, %v1209
      %v1211 = vrot.slane %v766, 5
      %v1212 = vsel %vm1197, %v1209, %v1211
      %v1213 = vrot.slane %v779, 5
      %v1214 = vsel %vm1197, %v1211, %v1213
      %v1239 = vunpack.c.l.b16 %v1181
      %v1240 = vunpack.c.l.b16 %v1182
      %v1241 = vunpack.c.l.b16 %v1183
      %v1242 = vunpack.c.l.b16 %v1184
      %v1243 = vunpack.c.l.b16 %v1185
      %v1244 = vunpack.c.l.b16 %v1186
      %v1245 = vunpack.c.l.b16 %v1187
      %v1246 = vunpack.c.l.b16 %v1188
      %v1247 = vunpack.c.l.b16 %v1189
      %v1248 = vunpack.c.l.b16 %v1190
      %v1249 = vunpack.c.l.b16 %v1191
      %v1250 = vunpack.c.l.b16 %v1192
      %v1251 = vunpack.c.l.b16 %v1193
      %v1252 = vunpack.c.l.b16 %v1194
      %v1253 = vunpack.c.l.b16 %v1195
      %v1254 = vunpack.c.l.b16 %v1196
      %v1255 = vpack.c.b16 %v1240, %v1239
      %v1256 = vpack.c.b16 %v1242, %v1241
      %v1257 = vpack.c.b16 %v1244, %v1243
      %v1258 = vpack.c.b16 %v1246, %v1245
      %v1259 = vpack.c.b16 %v1248, %v1247
      %v1260 = vpack.c.b16 %v1250, %v1249
      %v1261 = vpack.c.b16 %v1252, %v1251
      %v1262 = vpack.c.b16 %v1254, %v1253
      %1271 = vmatprep.subr.bf16.mxu0 0
      %1272 = vmatpush1.bf16.msra.mxu0 %v1255
      %1273 = vmatprep.subr.bf16.mxu0 0
      %1274 = vmatpush1.bf16.msra.mxu0 %v1256
      %1275 = vmatprep.subr.bf16.mxu0 0
      %1276 = vmatpush1.bf16.msra.mxu0 %v1257
      %1277 = vmatprep.subr.bf16.mxu0 0
      %1278 = vmatpush1.bf16.msra.mxu0 %v1258
      %1279 = vmatprep.subr.bf16.mxu0 0
      %1280 = vmatpush1.bf16.msra.mxu0 %v1259
      %1281 = vmatprep.subr.bf16.mxu0 0
      %1282 = vmatpush1.bf16.msra.mxu0 %v1260
      %1283 = vmatprep.subr.bf16.mxu0 0
      %1284 = vmatpush1.bf16.msra.mxu0 %v1261
      %1285 = vmatprep.subr.bf16.mxu0 0
      %1286 = vmatpush1.bf16.msra.mxu0 %v1262
      %1287 = vmatprep.subr.bf16.mxu0 0
      %1288 = vmatpush1.bf16.msra.mxu0 0
      %1289 = vmatprep.subr.bf16.mxu0 0
      %1290 = vmatpush1.bf16.msra.mxu0 0
      %1291 = vmatprep.subr.bf16.mxu0 0
      %1292 = vmatpush1.bf16.msra.mxu0 0
      %1293 = vmatprep.subr.bf16.mxu0 0
      %1294 = vmatpush1.bf16.msra.mxu0 0
      %1295 = vmatprep.subr.bf16.mxu0 0
      %1296 = vmatpush1.bf16.msra.mxu0 0
      %1297 = vmatprep.subr.bf16.mxu0 0
      %1298 = vmatpush1.bf16.msra.mxu0 0
      %1299 = vmatprep.subr.bf16.mxu0 0
      %1300 = vmatpush1.bf16.msra.mxu0 0
      %1301 = vmatprep.subr.bf16.mxu0 0
      %1302 = vmatpush1.bf16.msra.mxu0 0
      %1303 = vmatprep.mubr.bf16.mxu0 0
      %1304 = vmatmul.mubr.bf16.gmra.mrb[0].mxu0 %v1200
      %v1305 = vpop.f32.mrb[0].mxu0
      %v1306 = vadd.f32 0.0, %v1305
      %v1307 = vpop.f32.mrb[0].mxu0
      %v1308 = vpop.f32.mrb[0].mxu0
      %v1309 = vadd.f32 0.0, %v1308
      %v1310 = vpop.f32.mrb[0].mxu0
      %1311 = vmatprep.mubr.bf16.mxu0 0
      %1312 = vmatmul.mubr.bf16.gmra.mrb[0].mxu0 %v1202
      %v1313 = vpop.f32.mrb[0].mxu0
      %v1314 = vadd.f32 0.0, %v1313
      %v1315 = vpop.f32.mrb[0].mxu0
      %v1316 = vpop.f32.mrb[0].mxu0
      %v1317 = vadd.f32 0.0, %v1316
      %v1318 = vpop.f32.mrb[0].mxu0
      %1319 = vmatprep.mubr.bf16.mxu0 0
      %1320 = vmatmul.mubr.bf16.gmra.mrb[0].mxu0 %v1204
      %v1321 = vpop.f32.mrb[0].mxu0
      %v1322 = vadd.f32 0.0, %v1321
      %v1323 = vpop.f32.mrb[0].mxu0
      %v1324 = vpop.f32.mrb[0].mxu0
      %v1325 = vadd.f32 0.0, %v1324
      %v1326 = vpop.f32.mrb[0].mxu0
      %1327 = vmatprep.mubr.bf16.mxu0 0
      %1328 = vmatmul.mubr.bf16.gmra.mrb[0].mxu0 %v1206
      %v1329 = vpop.f32.mrb[0].mxu0
      %v1330 = vadd.f32 0.0, %v1329
      %v1331 = vpop.f32.mrb[0].mxu0
      %v1332 = vpop.f32.mrb[0].mxu0
      %v1333 = vadd.f32 0.0, %v1332
      %v1334 = vpop.f32.mrb[0].mxu0
      %1335 = vmatprep.mubr.bf16.mxu0 0
      %1336 = vmatmul.mubr.bf16.gmra.mrb[0].mxu0 %v1208
      %v1337 = vpop.f32.mrb[0].mxu0
      %v1338 = vadd.f32 0.0, %v1337
      %v1339 = vpop.f32.mrb[0].mxu0
      %v1340 = vpop.f32.mrb[0].mxu0
      %v1341 = vadd.f32 0.0, %v1340
      %v1342 = vpop.f32.mrb[0].mxu0
      %1343 = vmatprep.mubr.bf16.mxu0 0
      %1344 = vmatmul.mubr.bf16.gmra.mrb[0].mxu0 %v1210
      %v1345 = vpop.f32.mrb[0].mxu0
      %v1346 = vadd.f32 0.0, %v1345
      %v1347 = vpop.f32.mrb[0].mxu0
      %v1348 = vpop.f32.mrb[0].mxu0
      %v1349 = vadd.f32 0.0, %v1348
      %v1350 = vpop.f32.mrb[0].mxu0
      %1351 = vmatprep.mubr.bf16.mxu0 0
      %1352 = vmatmul.mubr.bf16.gmra.mrb[0].mxu0 %v1212
      %v1353 = vpop.f32.mrb[0].mxu0
      %v1354 = vadd.f32 0.0, %v1353
      %v1355 = vpop.f32.mrb[0].mxu0
      %v1356 = vpop.f32.mrb[0].mxu0
      %v1357 = vadd.f32 0.0, %v1356
      %v1358 = vpop.f32.mrb[0].mxu0
      %1359 = vmatprep.mubr.bf16.mxu0 0
      %1360 = vmatmul.mubr.bf16.gmra.mrb[0].mxu0 %v1214
      %v1361 = vpop.f32.mrb[0].mxu0
      %v1362 = vadd.f32 0.0, %v1361
      %v1363 = vpop.f32.mrb[0].mxu0
      %v1364 = vpop.f32.mrb[0].mxu0
      %v1365 = vadd.f32 0.0, %v1364
      %v1366 = vpop.f32.mrb[0].mxu0
      %1367 = vdwg.mxu0
      %v1368 = vadd.f32 %v1118, %v1306
      %v1369 = vadd.f32 %v1121, %v1309
      %v1370 = vadd.f32 %v1126, %v1314
      %v1371 = vadd.f32 %v1129, %v1317
      %v1372 = vadd.f32 %v1134, %v1322
      %v1373 = vadd.f32 %v1137, %v1325
      %v1374 = vadd.f32 %v1142, %v1330
      %v1375 = vadd.f32 %v1145, %v1333
      %v1376 = vadd.f32 %v1150, %v1338
      %v1377 = vadd.f32 %v1153, %v1341
      %v1378 = vadd.f32 %v1158, %v1346
      %v1379 = vadd.f32 %v1161, %v1349
      %v1380 = vadd.f32 %v1166, %v1354
      %v1381 = vadd.f32 %v1169, %v1357
      %v1382 = vadd.f32 %v1174, %v1362
      %v1383 = vadd.f32 %v1177, %v1365
      %s1384 = scalar_lea.vmem %s2, 192
      %v1385 = vld [vmem:[%s1384] sm:$0xf]
      %v1386 = vld [vmem:[%s1384 + $0x4] sm:$0xf]
      %v1387 = vld [vmem:[%s1384 + $0x8] sm:$0xf]
      %v1388 = vld [vmem:[%s1384 + $0xc] sm:$0xf]
      %v1389 = vld [vmem:[%s1384 + $0x10] sm:$0xf]
      %v1390 = vld [vmem:[%s1384 + $0x14] sm:$0xf]
      %v1391 = vld [vmem:[%s1384 + $0x18] sm:$0xf]
      %v1392 = vld [vmem:[%s1384 + $0x1c] sm:$0xf]
      %v1393 = vld [vmem:[%s1384 + $0x20] sm:$0xf]
      %v1394 = vld [vmem:[%s1384 + $0x24] sm:$0xf]
      %v1395 = vld [vmem:[%s1384 + $0x28] sm:$0xf]
      %v1396 = vld [vmem:[%s1384 + $0x2c] sm:$0xf]
      %v1397 = vld [vmem:[%s1384 + $0x30] sm:$0xf]
      %v1398 = vld [vmem:[%s1384 + $0x34] sm:$0xf]
      %v1399 = vld [vmem:[%s1384 + $0x38] sm:$0xf]
      %v1400 = vld [vmem:[%s1384 + $0x3c] sm:$0xf]
      %vm1401 = vsmask.f32 2304
      %v1402 = vrot.slane %v815, 5
      %v1403 = vrot.slane %v817, 6
      %v1404 = vor.u32 %v1402, %v1403
      %v1405 = vrot.slane %v826, 5
      %v1406 = vrot.slane %v822, 6
      %v1407 = vor.u32 %v1405, %v1406
      %v1408 = vsel %vm1401, %v1404, %v1407
      %v1409 = vrot.slane %v834, 5
      %v1410 = vrot.slane %v830, 6
      %v1411 = vor.u32 %v1409, %v1410
      %v1412 = vsel %vm1401, %v1407, %v1411
      %v1413 = vrot.slane %v842, 5
      %v1414 = vrot.slane %v838, 6
      %v1415 = vor.u32 %v1413, %v1414
      %v1416 = vsel %vm1401, %v1411, %v1415
      %v1417 = vrot.slane %v850, 5
      %v1418 = vrot.slane %v846, 6
      %v1419 = vor.u32 %v1417, %v1418
      %v1420 = vsel %vm1401, %v1415, %v1419
      %v1421 = vrot.slane %v858, 5
      %v1422 = vrot.slane %v854, 6
      %v1423 = vor.u32 %v1421, %v1422
      %v1424 = vsel %vm1401, %v1419, %v1423
      %v1425 = vrot.slane %v866, 5
      %v1426 = vrot.slane %v862, 6
      %v1427 = vor.u32 %v1425, %v1426
      %v1428 = vsel %vm1401, %v1423, %v1427
      %v1429 = vrot.slane %v874, 5
      %v1430 = vrot.slane %v870, 6
      %v1431 = vor.u32 %v1429, %v1430
      %v1432 = vsel %vm1401, %v1427, %v1431
      %v1433 = vshrl.u32 %v779, 16
      %v1435 = vrot.slane %v1433, 5
      %v1436 = vrot.slane %v878, 6
      %v1437 = vor.u32 %v1435, %v1436
      %v1438 = vsel %vm1401, %v1431, %v1437
      %v1463 = vunpack.c.l.b16 %v1385
      %v1464 = vunpack.c.l.b16 %v1386
      %v1465 = vunpack.c.l.b16 %v1387
      %v1466 = vunpack.c.l.b16 %v1388
      %v1467 = vunpack.c.l.b16 %v1389
      %v1468 = vunpack.c.l.b16 %v1390
      %v1469 = vunpack.c.l.b16 %v1391
      %v1470 = vunpack.c.l.b16 %v1392
      %v1471 = vunpack.c.l.b16 %v1393
      %v1472 = vunpack.c.l.b16 %v1394
      %v1473 = vunpack.c.l.b16 %v1395
      %v1474 = vunpack.c.l.b16 %v1396
      %v1475 = vunpack.c.l.b16 %v1397
      %v1476 = vunpack.c.l.b16 %v1398
      %v1477 = vunpack.c.l.b16 %v1399
      %v1478 = vunpack.c.l.b16 %v1400
      %v1479 = vpack.c.b16 %v1464, %v1463
      %v1480 = vpack.c.b16 %v1466, %v1465
      %v1481 = vpack.c.b16 %v1468, %v1467
      %v1482 = vpack.c.b16 %v1470, %v1469
      %v1483 = vpack.c.b16 %v1472, %v1471
      %v1484 = vpack.c.b16 %v1474, %v1473
      %v1485 = vpack.c.b16 %v1476, %v1475
      %v1486 = vpack.c.b16 %v1478, %v1477
      %1495 = vmatprep.subr.bf16.mxu0 0
      %1496 = vmatpush1.bf16.msra.mxu0 %v1479
      %1497 = vmatprep.subr.bf16.mxu0 0
      %1498 = vmatpush1.bf16.msra.mxu0 %v1480
      %1499 = vmatprep.subr.bf16.mxu0 0
      %1500 = vmatpush1.bf16.msra.mxu0 %v1481
      %1501 = vmatprep.subr.bf16.mxu0 0
      %1502 = vmatpush1.bf16.msra.mxu0 %v1482
      %1503 = vmatprep.subr.bf16.mxu0 0
      %1504 = vmatpush1.bf16.msra.mxu0 %v1483
      %1505 = vmatprep.subr.bf16.mxu0 0
      %1506 = vmatpush1.bf16.msra.mxu0 %v1484
      %1507 = vmatprep.subr.bf16.mxu0 0
      %1508 = vmatpush1.bf16.msra.mxu0 %v1485
      %1509 = vmatprep.subr.bf16.mxu0 0
      %1510 = vmatpush1.bf16.msra.mxu0 %v1486
      %1511 = vmatprep.subr.bf16.mxu0 0
      %1512 = vmatpush1.bf16.msra.mxu0 0
      %1513 = vmatprep.subr.bf16.mxu0 0
      %1514 = vmatpush1.bf16.msra.mxu0 0
      %1515 = vmatprep.subr.bf16.mxu0 0
      %1516 = vmatpush1.bf16.msra.mxu0 0
      %1517 = vmatprep.subr.bf16.mxu0 0
      %1518 = vmatpush1.bf16.msra.mxu0 0
      %1519 = vmatprep.subr.bf16.mxu0 0
      %1520 = vmatpush1.bf16.msra.mxu0 0
      %1521 = vmatprep.subr.bf16.mxu0 0
      %1522 = vmatpush1.bf16.msra.mxu0 0
      %1523 = vmatprep.subr.bf16.mxu0 0
      %1524 = vmatpush1.bf16.msra.mxu0 0
      %1525 = vmatprep.subr.bf16.mxu0 0
      %1526 = vmatpush1.bf16.msra.mxu0 0
      %1527 = vmatprep.mubr.bf16.mxu0 0
      %1528 = vmatmul.mubr.bf16.gmra.mrb[0].mxu0 %v1408
      %v1529 = vpop.f32.mrb[0].mxu0
      %v1530 = vadd.f32 0.0, %v1529
      %v1531 = vpop.f32.mrb[0].mxu0
      %v1532 = vpop.f32.mrb[0].mxu0
      %v1533 = vadd.f32 0.0, %v1532
      %v1534 = vpop.f32.mrb[0].mxu0
      %1535 = vmatprep.mubr.bf16.mxu0 0
      %1536 = vmatmul.mubr.bf16.gmra.mrb[0].mxu0 %v1412
      %v1537 = vpop.f32.mrb[0].mxu0
      %v1538 = vadd.f32 0.0, %v1537
      %v1539 = vpop.f32.mrb[0].mxu0
      %v1540 = vpop.f32.mrb[0].mxu0
      %v1541 = vadd.f32 0.0, %v1540
      %v1542 = vpop.f32.mrb[0].mxu0
      %1543 = vmatprep.mubr.bf16.mxu0 0
      %1544 = vmatmul.mubr.bf16.gmra.mrb[0].mxu0 %v1416
      %v1545 = vpop.f32.mrb[0].mxu0
      %v1546 = vadd.f32 0.0, %v1545
      %v1547 = vpop.f32.mrb[0].mxu0
      %v1548 = vpop.f32.mrb[0].mxu0
      %v1549 = vadd.f32 0.0, %v1548
      %v1550 = vpop.f32.mrb[0].mxu0
      %1551 = vmatprep.mubr.bf16.mxu0 0
      %1552 = vmatmul.mubr.bf16.gmra.mrb[0].mxu0 %v1420
      %v1553 = vpop.f32.mrb[0].mxu0
      %v1554 = vadd.f32 0.0, %v1553
      %v1555 = vpop.f32.mrb[0].mxu0
      %v1556 = vpop.f32.mrb[0].mxu0
      %v1557 = vadd.f32 0.0, %v1556
      %v1558 = vpop.f32.mrb[0].mxu0
      %1559 = vmatprep.mubr.bf16.mxu0 0
      %1560 = vmatmul.mubr.bf16.gmra.mrb[0].mxu0 %v1424
      %v1561 = vpop.f32.mrb[0].mxu0
      %v1562 = vadd.f32 0.0, %v1561
      %v1563 = vpop.f32.mrb[0].mxu0
      %v1564 = vpop.f32.mrb[0].mxu0
      %v1565 = vadd.f32 0.0, %v1564
      %v1566 = vpop.f32.mrb[0].mxu0
      %1567 = vmatprep.mubr.bf16.mxu0 0
      %1568 = vmatmul.mubr.bf16.gmra.mrb[0].mxu0 %v1428
      %v1569 = vpop.f32.mrb[0].mxu0
      %v1570 = vadd.f32 0.0, %v1569
      %v1571 = vpop.f32.mrb[0].mxu0
      %v1572 = vpop.f32.mrb[0].mxu0
      %v1573 = vadd.f32 0.0, %v1572
      %v1574 = vpop.f32.mrb[0].mxu0
      %1575 = vmatprep.mubr.bf16.mxu0 0
      %1576 = vmatmul.mubr.bf16.gmra.mrb[0].mxu0 %v1432
      %v1577 = vpop.f32.mrb[0].mxu0
      %v1578 = vadd.f32 0.0, %v1577
      %v1579 = vpop.f32.mrb[0].mxu0
      %v1580 = vpop.f32.mrb[0].mxu0
      %v1581 = vadd.f32 0.0, %v1580
      %v1582 = vpop.f32.mrb[0].mxu0
      %1583 = vmatprep.mubr.bf16.mxu0 0
      %1584 = vmatmul.mubr.bf16.gmra.mrb[0].mxu0 %v1438
      %v1585 = vpop.f32.mrb[0].mxu0
      %v1586 = vadd.f32 0.0, %v1585
      %v1587 = vpop.f32.mrb[0].mxu0
      %v1588 = vpop.f32.mrb[0].mxu0
      %v1589 = vadd.f32 0.0, %v1588
      %v1590 = vpop.f32.mrb[0].mxu0
      %1591 = vdwg.mxu0
      %v1592 = vadd.f32 %v1368, %v1530
      %v1593 = vadd.f32 %v1369, %v1533
      %v1594 = vadd.f32 %v1370, %v1538
      %v1595 = vadd.f32 %v1371, %v1541
      %v1596 = vadd.f32 %v1372, %v1546
      %v1597 = vadd.f32 %v1373, %v1549
      %v1598 = vadd.f32 %v1374, %v1554
      %v1599 = vadd.f32 %v1375, %v1557
      %v1600 = vadd.f32 %v1376, %v1562
      %v1601 = vadd.f32 %v1377, %v1565
      %v1602 = vadd.f32 %v1378, %v1570
      %v1603 = vadd.f32 %v1379, %v1573
      %v1604 = vadd.f32 %v1380, %v1578
      %v1605 = vadd.f32 %v1381, %v1581
      %v1606 = vadd.f32 %v1382, %v1586
      %v1607 = vadd.f32 %v1383, %v1589
      %v1608 = vld [vmem:[%s651] sm:$0xf]
      %v1609 = vld [vmem:[%s651 + $0x4] sm:$0xf]
      %v1610 = vld [vmem:[%s651 + $0x8] sm:$0xf]
      %v1611 = vld [vmem:[%s651 + $0xc] sm:$0xf]
      %v1612 = vld [vmem:[%s651 + $0x10] sm:$0xf]
      %v1613 = vld [vmem:[%s651 + $0x14] sm:$0xf]
      %v1614 = vld [vmem:[%s651 + $0x18] sm:$0xf]
      %v1615 = vld [vmem:[%s651 + $0x1c] sm:$0xf]
      %v1616 = vld [vmem:[%s651 + $0x20] sm:$0xf]
      %v1617 = vld [vmem:[%s651 + $0x24] sm:$0xf]
      %v1618 = vld [vmem:[%s651 + $0x28] sm:$0xf]
      %v1619 = vld [vmem:[%s651 + $0x2c] sm:$0xf]
      %v1620 = vld [vmem:[%s651 + $0x30] sm:$0xf]
      %v1621 = vld [vmem:[%s651 + $0x34] sm:$0xf]
      %v1622 = vld [vmem:[%s651 + $0x38] sm:$0xf]
      %v1623 = vld [vmem:[%s651 + $0x3c] sm:$0xf]
      %v1624 = vld [vmem:[%s659] sm:$0xf]
      %v1625 = vld [vmem:[%s659 + $0x4] sm:$0xf]
      %v1642 = vunpack.c.l.b16 %v1608
      %v1643 = vunpack.c.l.b16 %v1609
      %v1644 = vunpack.c.l.b16 %v1610
      %v1645 = vunpack.c.l.b16 %v1611
      %v1646 = vunpack.c.l.b16 %v1612
      %v1647 = vunpack.c.l.b16 %v1613
      %v1648 = vunpack.c.l.b16 %v1614
      %v1649 = vunpack.c.l.b16 %v1615
      %v1650 = vunpack.c.l.b16 %v1616
      %v1651 = vunpack.c.l.b16 %v1617
      %v1652 = vunpack.c.l.b16 %v1618
      %v1653 = vunpack.c.l.b16 %v1619
      %v1654 = vunpack.c.l.b16 %v1620
      %v1655 = vunpack.c.l.b16 %v1621
      %v1656 = vunpack.c.l.b16 %v1622
      %v1657 = vunpack.c.l.b16 %v1623
      %v1658 = vpack.c.b16 %v1643, %v1642
      %v1659 = vpack.c.b16 %v1645, %v1644
      %v1660 = vpack.c.b16 %v1647, %v1646
      %v1661 = vpack.c.b16 %v1649, %v1648
      %v1662 = vpack.c.b16 %v1651, %v1650
      %v1663 = vpack.c.b16 %v1653, %v1652
      %v1664 = vpack.c.b16 %v1655, %v1654
      %v1665 = vpack.c.b16 %v1657, %v1656
      %v1676 = vunpack.c.l.b16 %v1624
      %v1677 = vunpack.c.l.b16 %v1625
      %v1678 = vpack.c.b16 %v1677, %v1676
      %v1679 = vld [vmem:[%s5] sm:$0xf]
      %v1680 = vld [vmem:[%s5 + $0x4] sm:$0xf]
      %v1681 = vld [vmem:[%s5 + $0x8] sm:$0xf]
      %v1682 = vld [vmem:[%s5 + $0xc] sm:$0xf]
      %v1683 = vld [vmem:[%s5 + $0x10] sm:$0xf]
      %v1684 = vld [vmem:[%s5 + $0x14] sm:$0xf]
      %v1685 = vld [vmem:[%s5 + $0x18] sm:$0xf]
      %v1686 = vld [vmem:[%s5 + $0x1c] sm:$0xf]
      %v1687 = vld [vmem:[%s5 + $0x20] sm:$0xf]
      %v1688 = vld [vmem:[%s5 + $0x24] sm:$0xf]
      %v1689 = vld [vmem:[%s5 + $0x28] sm:$0xf]
      %v1690 = vld [vmem:[%s5 + $0x2c] sm:$0xf]
      %v1691 = vld [vmem:[%s5 + $0x30] sm:$0xf]
      %v1692 = vld [vmem:[%s5 + $0x34] sm:$0xf]
      %v1693 = vld [vmem:[%s5 + $0x38] sm:$0xf]
      %v1694 = vld [vmem:[%s5 + $0x3c] sm:$0xf]
      %v1711 = vunpack.c.l.b16 %v1679
      %v1712 = vunpack.c.l.b16 %v1680
      %v1713 = vunpack.c.l.b16 %v1681
      %v1714 = vunpack.c.l.b16 %v1682
      %v1715 = vunpack.c.l.b16 %v1683
      %v1716 = vunpack.c.l.b16 %v1684
      %v1717 = vunpack.c.l.b16 %v1685
      %v1718 = vunpack.c.l.b16 %v1686
      %v1719 = vunpack.c.l.b16 %v1687
      %v1720 = vunpack.c.l.b16 %v1688
      %v1721 = vunpack.c.l.b16 %v1689
      %v1722 = vunpack.c.l.b16 %v1690
      %v1723 = vunpack.c.l.b16 %v1691
      %v1724 = vunpack.c.l.b16 %v1692
      %v1725 = vunpack.c.l.b16 %v1693
      %v1726 = vunpack.c.l.b16 %v1694
      %v1727 = vpack.c.b16 %v1712, %v1711
      %v1728 = vpack.c.b16 %v1714, %v1713
      %v1729 = vpack.c.b16 %v1716, %v1715
      %v1730 = vpack.c.b16 %v1718, %v1717
      %v1731 = vpack.c.b16 %v1720, %v1719
      %v1732 = vpack.c.b16 %v1722, %v1721
      %v1733 = vpack.c.b16 %v1724, %v1723
      %v1734 = vpack.c.b16 %v1726, %v1725
      %1743 = vmatprep.subr.bf16.mxu0 0
      %1744 = vmatpush1.bf16.msra.mxu0 %v1727
      %1745 = vmatprep.subr.bf16.mxu0 0
      %1746 = vmatpush1.bf16.msra.mxu0 %v1728
      %1747 = vmatprep.subr.bf16.mxu0 0
      %1748 = vmatpush1.bf16.msra.mxu0 %v1729
      %1749 = vmatprep.subr.bf16.mxu0 0
      %1750 = vmatpush1.bf16.msra.mxu0 %v1730
      %1751 = vmatprep.subr.bf16.mxu0 0
      %1752 = vmatpush1.bf16.msra.mxu0 %v1731
      %1753 = vmatprep.subr.bf16.mxu0 0
      %1754 = vmatpush1.bf16.msra.mxu0 %v1732
      %1755 = vmatprep.subr.bf16.mxu0 0
      %1756 = vmatpush1.bf16.msra.mxu0 %v1733
      %1757 = vmatprep.subr.bf16.mxu0 0
      %1758 = vmatpush1.bf16.msra.mxu0 %v1734
      %1759 = vmatprep.subr.bf16.mxu0 0
      %1760 = vmatpush1.bf16.msra.mxu0 0
      %1761 = vmatprep.subr.bf16.mxu0 0
      %1762 = vmatpush1.bf16.msra.mxu0 0
      %1763 = vmatprep.subr.bf16.mxu0 0
      %1764 = vmatpush1.bf16.msra.mxu0 0
      %1765 = vmatprep.subr.bf16.mxu0 0
      %1766 = vmatpush1.bf16.msra.mxu0 0
      %1767 = vmatprep.subr.bf16.mxu0 0
      %1768 = vmatpush1.bf16.msra.mxu0 0
      %1769 = vmatprep.subr.bf16.mxu0 0
      %1770 = vmatpush1.bf16.msra.mxu0 0
      %1771 = vmatprep.subr.bf16.mxu0 0
      %1772 = vmatpush1.bf16.msra.mxu0 0
      %1773 = vmatprep.subr.bf16.mxu0 0
      %1774 = vmatpush1.bf16.msra.mxu0 0
      %1775 = vmatprep.mubr.bf16.mxu0 0
      %1776 = vmatmul.mubr.bf16.gmra.mrb[0].mxu0 %v1658
      %v1777 = vpop.f32.mrb[0].mxu0
      %v1778 = vadd.f32 0.0, %v1777
      %v1779 = vpop.f32.mrb[0].mxu0
      %v1780 = vpop.f32.mrb[0].mxu0
      %v1781 = vadd.f32 0.0, %v1780
      %v1782 = vpop.f32.mrb[0].mxu0
      %1783 = vmatprep.mubr.bf16.mxu0 0
      %1784 = vmatmul.mubr.bf16.gmra.mrb[0].mxu0 %v1659
      %v1785 = vpop.f32.mrb[0].mxu0
      %v1786 = vadd.f32 0.0, %v1785
      %v1787 = vpop.f32.mrb[0].mxu0
      %v1788 = vpop.f32.mrb[0].mxu0
      %v1789 = vadd.f32 0.0, %v1788
      %v1790 = vpop.f32.mrb[0].mxu0
      %1791 = vmatprep.mubr.bf16.mxu0 0
      %1792 = vmatmul.mubr.bf16.gmra.mrb[0].mxu0 %v1660
      %v1793 = vpop.f32.mrb[0].mxu0
      %v1794 = vadd.f32 0.0, %v1793
      %v1795 = vpop.f32.mrb[0].mxu0
      %v1796 = vpop.f32.mrb[0].mxu0
      %v1797 = vadd.f32 0.0, %v1796
      %v1798 = vpop.f32.mrb[0].mxu0
      %1799 = vmatprep.mubr.bf16.mxu0 0
      %1800 = vmatmul.mubr.bf16.gmra.mrb[0].mxu0 %v1661
      %v1801 = vpop.f32.mrb[0].mxu0
      %v1802 = vadd.f32 0.0, %v1801
      %v1803 = vpop.f32.mrb[0].mxu0
      %v1804 = vpop.f32.mrb[0].mxu0
      %v1805 = vadd.f32 0.0, %v1804
      %v1806 = vpop.f32.mrb[0].mxu0
      %1807 = vmatprep.mubr.bf16.mxu0 0
      %1808 = vmatmul.mubr.bf16.gmra.mrb[0].mxu0 %v1662
      %v1809 = vpop.f32.mrb[0].mxu0
      %v1810 = vadd.f32 0.0, %v1809
      %v1811 = vpop.f32.mrb[0].mxu0
      %v1812 = vpop.f32.mrb[0].mxu0
      %v1813 = vadd.f32 0.0, %v1812
      %v1814 = vpop.f32.mrb[0].mxu0
      %1815 = vmatprep.mubr.bf16.mxu0 0
      %1816 = vmatmul.mubr.bf16.gmra.mrb[0].mxu0 %v1663
      %v1817 = vpop.f32.mrb[0].mxu0
      %v1818 = vadd.f32 0.0, %v1817
      %v1819 = vpop.f32.mrb[0].mxu0
      %v1820 = vpop.f32.mrb[0].mxu0
      %v1821 = vadd.f32 0.0, %v1820
      %v1822 = vpop.f32.mrb[0].mxu0
      %1823 = vmatprep.mubr.bf16.mxu0 0
      %1824 = vmatmul.mubr.bf16.gmra.mrb[0].mxu0 %v1664
      %v1825 = vpop.f32.mrb[0].mxu0
      %v1826 = vadd.f32 0.0, %v1825
      %v1827 = vpop.f32.mrb[0].mxu0
      %v1828 = vpop.f32.mrb[0].mxu0
      %v1829 = vadd.f32 0.0, %v1828
      %v1830 = vpop.f32.mrb[0].mxu0
      %1831 = vmatprep.mubr.bf16.mxu0 0
      %1832 = vmatmul.mubr.bf16.gmra.mrb[0].mxu0 %v1665
      %v1833 = vpop.f32.mrb[0].mxu0
      %v1834 = vadd.f32 0.0, %v1833
      %v1835 = vpop.f32.mrb[0].mxu0
      %v1836 = vpop.f32.mrb[0].mxu0
      %v1837 = vadd.f32 0.0, %v1836
      %v1838 = vpop.f32.mrb[0].mxu0
      %1839 = vdwg.mxu0
      %v1840 = vadd.f32 %v1592, %v1778
      %v1841 = vadd.f32 %v1593, %v1781
      %v1842 = vadd.f32 %v1594, %v1786
      %v1843 = vadd.f32 %v1595, %v1789
      %v1844 = vadd.f32 %v1596, %v1794
      %v1845 = vadd.f32 %v1597, %v1797
      %v1846 = vadd.f32 %v1598, %v1802
      %v1847 = vadd.f32 %v1599, %v1805
      %v1848 = vadd.f32 %v1600, %v1810
      %v1849 = vadd.f32 %v1601, %v1813
      %v1850 = vadd.f32 %v1602, %v1818
      %v1851 = vadd.f32 %v1603, %v1821
      %v1852 = vadd.f32 %v1604, %v1826
      %v1853 = vadd.f32 %v1605, %v1829
      %v1854 = vadd.f32 %v1606, %v1834
      %v1855 = vadd.f32 %v1607, %v1837
      %s1856 = scalar_lea.vmem %s5, 64
      %v1857 = vld [vmem:[%s1856] sm:$0xf]
      %v1858 = vld [vmem:[%s1856 + $0x4] sm:$0xf]
      %v1859 = vld [vmem:[%s1856 + $0x8] sm:$0xf]
      %v1860 = vld [vmem:[%s1856 + $0xc] sm:$0xf]
      %v1861 = vld [vmem:[%s1856 + $0x10] sm:$0xf]
      %v1862 = vld [vmem:[%s1856 + $0x14] sm:$0xf]
      %v1863 = vld [vmem:[%s1856 + $0x18] sm:$0xf]
      %v1864 = vld [vmem:[%s1856 + $0x1c] sm:$0xf]
      %v1865 = vld [vmem:[%s1856 + $0x20] sm:$0xf]
      %v1866 = vld [vmem:[%s1856 + $0x24] sm:$0xf]
      %v1867 = vld [vmem:[%s1856 + $0x28] sm:$0xf]
      %v1868 = vld [vmem:[%s1856 + $0x2c] sm:$0xf]
      %v1869 = vld [vmem:[%s1856 + $0x30] sm:$0xf]
      %v1870 = vld [vmem:[%s1856 + $0x34] sm:$0xf]
      %v1871 = vld [vmem:[%s1856 + $0x38] sm:$0xf]
      %v1872 = vld [vmem:[%s1856 + $0x3c] sm:$0xf]
      %v1873 = vrot.slane %v1658, 5
      %v1874 = vrot.slane %v1659, 5
      %v1875 = vsel %vm1197, %v1873, %v1874
      %v1876 = vrot.slane %v1660, 5
      %v1877 = vsel %vm1197, %v1874, %v1876
      %v1878 = vrot.slane %v1661, 5
      %v1879 = vsel %vm1197, %v1876, %v1878
      %v1880 = vrot.slane %v1662, 5
      %v1881 = vsel %vm1197, %v1878, %v1880
      %v1882 = vrot.slane %v1663, 5
      %v1883 = vsel %vm1197, %v1880, %v1882
      %v1884 = vrot.slane %v1664, 5
      %v1885 = vsel %vm1197, %v1882, %v1884
      %v1886 = vrot.slane %v1665, 5
      %v1887 = vsel %vm1197, %v1884, %v1886
      %v1888 = vrot.slane %v1678, 5
      %v1889 = vsel %vm1197, %v1886, %v1888
      %v1914 = vunpack.c.l.b16 %v1857
      %v1915 = vunpack.c.l.b16 %v1858
      %v1916 = vunpack.c.l.b16 %v1859
      %v1917 = vunpack.c.l.b16 %v1860
      %v1918 = vunpack.c.l.b16 %v1861
      %v1919 = vunpack.c.l.b16 %v1862
      %v1920 = vunpack.c.l.b16 %v1863
      %v1921 = vunpack.c.l.b16 %v1864
      %v1922 = vunpack.c.l.b16 %v1865
      %v1923 = vunpack.c.l.b16 %v1866
      %v1924 = vunpack.c.l.b16 %v1867
      %v1925 = vunpack.c.l.b16 %v1868
      %v1926 = vunpack.c.l.b16 %v1869
      %v1927 = vunpack.c.l.b16 %v1870
      %v1928 = vunpack.c.l.b16 %v1871
      %v1929 = vunpack.c.l.b16 %v1872
      %v1930 = vpack.c.b16 %v1915, %v1914
      %v1931 = vpack.c.b16 %v1917, %v1916
      %v1932 = vpack.c.b16 %v1919, %v1918
      %v1933 = vpack.c.b16 %v1921, %v1920
      %v1934 = vpack.c.b16 %v1923, %v1922
      %v1935 = vpack.c.b16 %v1925, %v1924
      %v1936 = vpack.c.b16 %v1927, %v1926
      %v1937 = vpack.c.b16 %v1929, %v1928
      %1946 = vmatprep.subr.bf16.mxu0 0
      %1947 = vmatpush1.bf16.msra.mxu0 %v1930
      %1948 = vmatprep.subr.bf16.mxu0 0
      %1949 = vmatpush1.bf16.msra.mxu0 %v1931
      %1950 = vmatprep.subr.bf16.mxu0 0
      %1951 = vmatpush1.bf16.msra.mxu0 %v1932
      %1952 = vmatprep.subr.bf16.mxu0 0
      %1953 = vmatpush1.bf16.msra.mxu0 %v1933
      %1954 = vmatprep.subr.bf16.mxu0 0
      %1955 = vmatpush1.bf16.msra.mxu0 %v1934
      %1956 = vmatprep.subr.bf16.mxu0 0
      %1957 = vmatpush1.bf16.msra.mxu0 %v1935
      %1958 = vmatprep.subr.bf16.mxu0 0
      %1959 = vmatpush1.bf16.msra.mxu0 %v1936
      %1960 = vmatprep.subr.bf16.mxu0 0
      %1961 = vmatpush1.bf16.msra.mxu0 %v1937
      %1962 = vmatprep.subr.bf16.mxu0 0
      %1963 = vmatpush1.bf16.msra.mxu0 0
      %1964 = vmatprep.subr.bf16.mxu0 0
      %1965 = vmatpush1.bf16.msra.mxu0 0
      %1966 = vmatprep.subr.bf16.mxu0 0
      %1967 = vmatpush1.bf16.msra.mxu0 0
      %1968 = vmatprep.subr.bf16.mxu0 0
      %1969 = vmatpush1.bf16.msra.mxu0 0
      %1970 = vmatprep.subr.bf16.mxu0 0
      %1971 = vmatpush1.bf16.msra.mxu0 0
      %1972 = vmatprep.subr.bf16.mxu0 0
      %1973 = vmatpush1.bf16.msra.mxu0 0
      %1974 = vmatprep.subr.bf16.mxu0 0
      %1975 = vmatpush1.bf16.msra.mxu0 0
      %1976 = vmatprep.subr.bf16.mxu0 0
      %1977 = vmatpush1.bf16.msra.mxu0 0
      %1978 = vmatprep.mubr.bf16.mxu0 0
      %1979 = vmatmul.mubr.bf16.gmra.mrb[0].mxu0 %v1875
      %v1980 = vpop.f32.mrb[0].mxu0
      %v1981 = vadd.f32 0.0, %v1980
      %v1982 = vpop.f32.mrb[0].mxu0
      %v1983 = vpop.f32.mrb[0].mxu0
      %v1984 = vadd.f32 0.0, %v1983
      %v1985 = vpop.f32.mrb[0].mxu0
      %1986 = vmatprep.mubr.bf16.mxu0 0
      %1987 = vmatmul.mubr.bf16.gmra.mrb[0].mxu0 %v1877
      %v1988 = vpop.f32.mrb[0].mxu0
      %v1989 = vadd.f32 0.0, %v1988
      %v1990 = vpop.f32.mrb[0].mxu0
      %v1991 = vpop.f32.mrb[0].mxu0
      %v1992 = vadd.f32 0.0, %v1991
      %v1993 = vpop.f32.mrb[0].mxu0
      %1994 = vmatprep.mubr.bf16.mxu0 0
      %1995 = vmatmul.mubr.bf16.gmra.mrb[0].mxu0 %v1879
      %v1996 = vpop.f32.mrb[0].mxu0
      %v1997 = vadd.f32 0.0, %v1996
      %v1998 = vpop.f32.mrb[0].mxu0
      %v1999 = vpop.f32.mrb[0].mxu0
      %v2000 = vadd.f32 0.0, %v1999
      %v2001 = vpop.f32.mrb[0].mxu0
      %2002 = vmatprep.mubr.bf16.mxu0 0
      %2003 = vmatmul.mubr.bf16.gmra.mrb[0].mxu0 %v1881
      %v2004 = vpop.f32.mrb[0].mxu0
      %v2005 = vadd.f32 0.0, %v2004
      %v2006 = vpop.f32.mrb[0].mxu0
      %v2007 = vpop.f32.mrb[0].mxu0
      %v2008 = vadd.f32 0.0, %v2007
      %v2009 = vpop.f32.mrb[0].mxu0
      %2010 = vmatprep.mubr.bf16.mxu0 0
      %2011 = vmatmul.mubr.bf16.gmra.mrb[0].mxu0 %v1883
      %v2012 = vpop.f32.mrb[0].mxu0
      %v2013 = vadd.f32 0.0, %v2012
      %v2014 = vpop.f32.mrb[0].mxu0
      %v2015 = vpop.f32.mrb[0].mxu0
      %v2016 = vadd.f32 0.0, %v2015
      %v2017 = vpop.f32.mrb[0].mxu0
      %2018 = vmatprep.mubr.bf16.mxu0 0
      %2019 = vmatmul.mubr.bf16.gmra.mrb[0].mxu0 %v1885
      %v2020 = vpop.f32.mrb[0].mxu0
      %v2021 = vadd.f32 0.0, %v2020
      %v2022 = vpop.f32.mrb[0].mxu0
      %v2023 = vpop.f32.mrb[0].mxu0
      %v2024 = vadd.f32 0.0, %v2023
      %v2025 = vpop.f32.mrb[0].mxu0
      %2026 = vmatprep.mubr.bf16.mxu0 0
      %2027 = vmatmul.mubr.bf16.gmra.mrb[0].mxu0 %v1887
      %v2028 = vpop.f32.mrb[0].mxu0
      %v2029 = vadd.f32 0.0, %v2028
      %v2030 = vpop.f32.mrb[0].mxu0
      %v2031 = vpop.f32.mrb[0].mxu0
      %v2032 = vadd.f32 0.0, %v2031
      %v2033 = vpop.f32.mrb[0].mxu0
      %2034 = vmatprep.mubr.bf16.mxu0 0
      %2035 = vmatmul.mubr.bf16.gmra.mrb[0].mxu0 %v1889
      %v2036 = vpop.f32.mrb[0].mxu0
      %v2037 = vadd.f32 0.0, %v2036
      %v2038 = vpop.f32.mrb[0].mxu0
      %v2039 = vpop.f32.mrb[0].mxu0
      %v2040 = vadd.f32 0.0, %v2039
      %v2041 = vpop.f32.mrb[0].mxu0
      %2042 = vdwg.mxu0
      %v2043 = vadd.f32 %v1840, %v1981
      %v2044 = vadd.f32 %v1841, %v1984
      %v2045 = vadd.f32 %v1842, %v1989
      %v2046 = vadd.f32 %v1843, %v1992
      %v2047 = vadd.f32 %v1844, %v1997
      %v2048 = vadd.f32 %v1845, %v2000
      %v2049 = vadd.f32 %v1846, %v2005
      %v2050 = vadd.f32 %v1847, %v2008
      %v2051 = vadd.f32 %v1848, %v2013
      %v2052 = vadd.f32 %v1849, %v2016
      %v2053 = vadd.f32 %v1850, %v2021
      %v2054 = vadd.f32 %v1851, %v2024
      %v2055 = vadd.f32 %v1852, %v2029
      %v2056 = vadd.f32 %v1853, %v2032
      %v2057 = vadd.f32 %v1854, %v2037
      %v2058 = vadd.f32 %v1855, %v2040
      %v2059 = vld [vmem:[%s667] sm:$0xf]
      %v2060 = vld [vmem:[%s667 + $0x4] sm:$0xf]
      %v2061 = vld [vmem:[%s667 + $0x8] sm:$0xf]
      %v2062 = vld [vmem:[%s667 + $0xc] sm:$0xf]
      %v2063 = vld [vmem:[%s667 + $0x10] sm:$0xf]
      %v2064 = vld [vmem:[%s667 + $0x14] sm:$0xf]
      %v2065 = vld [vmem:[%s667 + $0x18] sm:$0xf]
      %v2066 = vld [vmem:[%s667 + $0x1c] sm:$0xf]
      %v2067 = vld [vmem:[%s667 + $0x20] sm:$0xf]
      %v2068 = vld [vmem:[%s667 + $0x24] sm:$0xf]
      %v2069 = vld [vmem:[%s667 + $0x28] sm:$0xf]
      %v2070 = vld [vmem:[%s667 + $0x2c] sm:$0xf]
      %v2071 = vld [vmem:[%s667 + $0x30] sm:$0xf]
      %v2072 = vld [vmem:[%s667 + $0x34] sm:$0xf]
      %v2073 = vld [vmem:[%s667 + $0x38] sm:$0xf]
      %v2074 = vld [vmem:[%s667 + $0x3c] sm:$0xf]
      %v2075 = vld [vmem:[%s675] sm:$0xf]
      %v2076 = vld [vmem:[%s675 + $0x4] sm:$0xf]
      %v2093 = vunpack.c.l.b16 %v2059
      %v2094 = vunpack.c.l.b16 %v2060
      %v2095 = vunpack.c.l.b16 %v2061
      %v2096 = vunpack.c.l.b16 %v2062
      %v2097 = vunpack.c.l.b16 %v2063
      %v2098 = vunpack.c.l.b16 %v2064
      %v2099 = vunpack.c.l.b16 %v2065
      %v2100 = vunpack.c.l.b16 %v2066
      %v2101 = vunpack.c.l.b16 %v2067
      %v2102 = vunpack.c.l.b16 %v2068
      %v2103 = vunpack.c.l.b16 %v2069
      %v2104 = vunpack.c.l.b16 %v2070
      %v2105 = vunpack.c.l.b16 %v2071
      %v2106 = vunpack.c.l.b16 %v2072
      %v2107 = vunpack.c.l.b16 %v2073
      %v2108 = vunpack.c.l.b16 %v2074
      %v2109 = vpack.c.b16 %v2094, %v2093
      %v2110 = vpack.c.b16 %v2096, %v2095
      %v2111 = vpack.c.b16 %v2098, %v2097
      %v2112 = vpack.c.b16 %v2100, %v2099
      %v2113 = vpack.c.b16 %v2102, %v2101
      %v2114 = vpack.c.b16 %v2104, %v2103
      %v2115 = vpack.c.b16 %v2106, %v2105
      %v2116 = vpack.c.b16 %v2108, %v2107
      %v2127 = vunpack.c.l.b16 %v2075
      %v2128 = vunpack.c.l.b16 %v2076
      %v2129 = vpack.c.b16 %v2128, %v2127
      %v2130 = vld [vmem:[%s8] sm:$0xf]
      %v2131 = vld [vmem:[%s8 + $0x4] sm:$0xf]
      %v2132 = vld [vmem:[%s8 + $0x8] sm:$0xf]
      %v2133 = vld [vmem:[%s8 + $0xc] sm:$0xf]
      %v2134 = vld [vmem:[%s8 + $0x10] sm:$0xf]
      %v2135 = vld [vmem:[%s8 + $0x14] sm:$0xf]
      %v2136 = vld [vmem:[%s8 + $0x18] sm:$0xf]
      %v2137 = vld [vmem:[%s8 + $0x1c] sm:$0xf]
      %v2138 = vld [vmem:[%s8 + $0x20] sm:$0xf]
      %v2139 = vld [vmem:[%s8 + $0x24] sm:$0xf]
      %v2140 = vld [vmem:[%s8 + $0x28] sm:$0xf]
      %v2141 = vld [vmem:[%s8 + $0x2c] sm:$0xf]
      %v2142 = vld [vmem:[%s8 + $0x30] sm:$0xf]
      %v2143 = vld [vmem:[%s8 + $0x34] sm:$0xf]
      %v2144 = vld [vmem:[%s8 + $0x38] sm:$0xf]
      %v2145 = vld [vmem:[%s8 + $0x3c] sm:$0xf]
      %v2162 = vunpack.c.l.b16 %v2130
      %v2163 = vunpack.c.l.b16 %v2131
      %v2164 = vunpack.c.l.b16 %v2132
      %v2165 = vunpack.c.l.b16 %v2133
      %v2166 = vunpack.c.l.b16 %v2134
      %v2167 = vunpack.c.l.b16 %v2135
      %v2168 = vunpack.c.l.b16 %v2136
      %v2169 = vunpack.c.l.b16 %v2137
      %v2170 = vunpack.c.l.b16 %v2138
      %v2171 = vunpack.c.l.b16 %v2139
      %v2172 = vunpack.c.l.b16 %v2140
      %v2173 = vunpack.c.l.b16 %v2141
      %v2174 = vunpack.c.l.b16 %v2142
      %v2175 = vunpack.c.l.b16 %v2143
      %v2176 = vunpack.c.l.b16 %v2144
      %v2177 = vunpack.c.l.b16 %v2145
      %v2178 = vpack.c.b16 %v2163, %v2162
      %v2179 = vpack.c.b16 %v2165, %v2164
      %v2180 = vpack.c.b16 %v2167, %v2166
      %v2181 = vpack.c.b16 %v2169, %v2168
      %v2182 = vpack.c.b16 %v2171, %v2170
      %v2183 = vpack.c.b16 %v2173, %v2172
      %v2184 = vpack.c.b16 %v2175, %v2174
      %v2185 = vpack.c.b16 %v2177, %v2176
      %2194 = vmatprep.subr.bf16.mxu0 0
      %2195 = vmatpush1.bf16.msra.mxu0 %v2178
      %2196 = vmatprep.subr.bf16.mxu0 0
      %2197 = vmatpush1.bf16.msra.mxu0 %v2179
      %2198 = vmatprep.subr.bf16.mxu0 0
      %2199 = vmatpush1.bf16.msra.mxu0 %v2180
      %2200 = vmatprep.subr.bf16.mxu0 0
      %2201 = vmatpush1.bf16.msra.mxu0 %v2181
      %2202 = vmatprep.subr.bf16.mxu0 0
      %2203 = vmatpush1.bf16.msra.mxu0 %v2182
      %2204 = vmatprep.subr.bf16.mxu0 0
      %2205 = vmatpush1.bf16.msra.mxu0 %v2183
      %2206 = vmatprep.subr.bf16.mxu0 0
      %2207 = vmatpush1.bf16.msra.mxu0 %v2184
      %2208 = vmatprep.subr.bf16.mxu0 0
      %2209 = vmatpush1.bf16.msra.mxu0 %v2185
      %2210 = vmatprep.subr.bf16.mxu0 0
      %2211 = vmatpush1.bf16.msra.mxu0 0
      %2212 = vmatprep.subr.bf16.mxu0 0
      %2213 = vmatpush1.bf16.msra.mxu0 0
      %2214 = vmatprep.subr.bf16.mxu0 0
      %2215 = vmatpush1.bf16.msra.mxu0 0
      %2216 = vmatprep.subr.bf16.mxu0 0
      %2217 = vmatpush1.bf16.msra.mxu0 0
      %2218 = vmatprep.subr.bf16.mxu0 0
      %2219 = vmatpush1.bf16.msra.mxu0 0
      %2220 = vmatprep.subr.bf16.mxu0 0
      %2221 = vmatpush1.bf16.msra.mxu0 0
      %2222 = vmatprep.subr.bf16.mxu0 0
      %2223 = vmatpush1.bf16.msra.mxu0 0
      %2224 = vmatprep.subr.bf16.mxu0 0
      %2225 = vmatpush1.bf16.msra.mxu0 0
      %2226 = vmatprep.mubr.bf16.mxu0 0
      %2227 = vmatmul.mubr.bf16.gmra.mrb[0].mxu0 %v2109
      %v2228 = vpop.f32.mrb[0].mxu0
      %v2229 = vadd.f32 0.0, %v2228
      %v2230 = vpop.f32.mrb[0].mxu0
      %v2231 = vpop.f32.mrb[0].mxu0
      %v2232 = vadd.f32 0.0, %v2231
      %v2233 = vpop.f32.mrb[0].mxu0
      %2234 = vmatprep.mubr.bf16.mxu0 0
      %2235 = vmatmul.mubr.bf16.gmra.mrb[0].mxu0 %v2110
      %v2236 = vpop.f32.mrb[0].mxu0
      %v2237 = vadd.f32 0.0, %v2236
      %v2238 = vpop.f32.mrb[0].mxu0
      %v2239 = vpop.f32.mrb[0].mxu0
      %v2240 = vadd.f32 0.0, %v2239
      %v2241 = vpop.f32.mrb[0].mxu0
      %2242 = vmatprep.mubr.bf16.mxu0 0
      %2243 = vmatmul.mubr.bf16.gmra.mrb[0].mxu0 %v2111
      %v2244 = vpop.f32.mrb[0].mxu0
      %v2245 = vadd.f32 0.0, %v2244
      %v2246 = vpop.f32.mrb[0].mxu0
      %v2247 = vpop.f32.mrb[0].mxu0
      %v2248 = vadd.f32 0.0, %v2247
      %v2249 = vpop.f32.mrb[0].mxu0
      %2250 = vmatprep.mubr.bf16.mxu0 0
      %2251 = vmatmul.mubr.bf16.gmra.mrb[0].mxu0 %v2112
      %v2252 = vpop.f32.mrb[0].mxu0
      %v2253 = vadd.f32 0.0, %v2252
      %v2254 = vpop.f32.mrb[0].mxu0
      %v2255 = vpop.f32.mrb[0].mxu0
      %v2256 = vadd.f32 0.0, %v2255
      %v2257 = vpop.f32.mrb[0].mxu0
      %2258 = vmatprep.mubr.bf16.mxu0 0
      %2259 = vmatmul.mubr.bf16.gmra.mrb[0].mxu0 %v2113
      %v2260 = vpop.f32.mrb[0].mxu0
      %v2261 = vadd.f32 0.0, %v2260
      %v2262 = vpop.f32.mrb[0].mxu0
      %v2263 = vpop.f32.mrb[0].mxu0
      %v2264 = vadd.f32 0.0, %v2263
      %v2265 = vpop.f32.mrb[0].mxu0
      %2266 = vmatprep.mubr.bf16.mxu0 0
      %2267 = vmatmul.mubr.bf16.gmra.mrb[0].mxu0 %v2114
      %v2268 = vpop.f32.mrb[0].mxu0
      %v2269 = vadd.f32 0.0, %v2268
      %v2270 = vpop.f32.mrb[0].mxu0
      %v2271 = vpop.f32.mrb[0].mxu0
      %v2272 = vadd.f32 0.0, %v2271
      %v2273 = vpop.f32.mrb[0].mxu0
      %2274 = vmatprep.mubr.bf16.mxu0 0
      %2275 = vmatmul.mubr.bf16.gmra.mrb[0].mxu0 %v2115
      %v2276 = vpop.f32.mrb[0].mxu0
      %v2277 = vadd.f32 0.0, %v2276
      %v2278 = vpop.f32.mrb[0].mxu0
      %v2279 = vpop.f32.mrb[0].mxu0
      %v2280 = vadd.f32 0.0, %v2279
      %v2281 = vpop.f32.mrb[0].mxu0
      %2282 = vmatprep.mubr.bf16.mxu0 0
      %2283 = vmatmul.mubr.bf16.gmra.mrb[0].mxu0 %v2116
      %v2284 = vpop.f32.mrb[0].mxu0
      %v2285 = vadd.f32 0.0, %v2284
      %v2286 = vpop.f32.mrb[0].mxu0
      %v2287 = vpop.f32.mrb[0].mxu0
      %v2288 = vadd.f32 0.0, %v2287
      %v2289 = vpop.f32.mrb[0].mxu0
      %2290 = vdwg.mxu0
      %v2291 = vadd.f32 %v2043, %v2229
      %v2292 = vadd.f32 %v2044, %v2232
      %v2293 = vadd.f32 %v2045, %v2237
      %v2294 = vadd.f32 %v2046, %v2240
      %v2295 = vadd.f32 %v2047, %v2245
      %v2296 = vadd.f32 %v2048, %v2248
      %v2297 = vadd.f32 %v2049, %v2253
      %v2298 = vadd.f32 %v2050, %v2256
      %v2299 = vadd.f32 %v2051, %v2261
      %v2300 = vadd.f32 %v2052, %v2264
      %v2301 = vadd.f32 %v2053, %v2269
      %v2302 = vadd.f32 %v2054, %v2272
      %v2303 = vadd.f32 %v2055, %v2277
      %v2304 = vadd.f32 %v2056, %v2280
      %v2305 = vadd.f32 %v2057, %v2285
      %v2306 = vadd.f32 %v2058, %v2288
      %s2307 = scalar_lea.vmem %s8, 64
      %v2308 = vld [vmem:[%s2307] sm:$0xf]
      %v2309 = vld [vmem:[%s2307 + $0x4] sm:$0xf]
      %v2310 = vld [vmem:[%s2307 + $0x8] sm:$0xf]
      %v2311 = vld [vmem:[%s2307 + $0xc] sm:$0xf]
      %v2312 = vld [vmem:[%s2307 + $0x10] sm:$0xf]
      %v2313 = vld [vmem:[%s2307 + $0x14] sm:$0xf]
      %v2314 = vld [vmem:[%s2307 + $0x18] sm:$0xf]
      %v2315 = vld [vmem:[%s2307 + $0x1c] sm:$0xf]
      %v2316 = vld [vmem:[%s2307 + $0x20] sm:$0xf]
      %v2317 = vld [vmem:[%s2307 + $0x24] sm:$0xf]
      %v2318 = vld [vmem:[%s2307 + $0x28] sm:$0xf]
      %v2319 = vld [vmem:[%s2307 + $0x2c] sm:$0xf]
      %v2320 = vld [vmem:[%s2307 + $0x30] sm:$0xf]
      %v2321 = vld [vmem:[%s2307 + $0x34] sm:$0xf]
      %v2322 = vld [vmem:[%s2307 + $0x38] sm:$0xf]
      %v2323 = vld [vmem:[%s2307 + $0x3c] sm:$0xf]
      %v2325 = vshrl.u32 %v2109, 16
      %v2327 = vshll.u32 %v2109, 16
      %v2329 = vrot.slane %v2327, 1
      %v2330 = vor.u32 %v2325, %v2329
      %v2332 = vshll.u32 %v2110, 16
      %v2334 = vrot.slane %v2332, 1
      %v2335 = vsel %vm813, %v2330, %v2334
      %v2336 = vshrl.u32 %v2110, 16
      %v2338 = vor.u32 %v2336, %v2334
      %v2340 = vshll.u32 %v2111, 16
      %v2342 = vrot.slane %v2340, 1
      %v2343 = vsel %vm813, %v2338, %v2342
      %v2344 = vshrl.u32 %v2111, 16
      %v2346 = vor.u32 %v2344, %v2342
      %v2348 = vshll.u32 %v2112, 16
      %v2350 = vrot.slane %v2348, 1
      %v2351 = vsel %vm813, %v2346, %v2350
      %v2352 = vshrl.u32 %v2112, 16
      %v2354 = vor.u32 %v2352, %v2350
      %v2356 = vshll.u32 %v2113, 16
      %v2358 = vrot.slane %v2356, 1
      %v2359 = vsel %vm813, %v2354, %v2358
      %v2360 = vshrl.u32 %v2113, 16
      %v2362 = vor.u32 %v2360, %v2358
      %v2364 = vshll.u32 %v2114, 16
      %v2366 = vrot.slane %v2364, 1
      %v2367 = vsel %vm813, %v2362, %v2366
      %v2368 = vshrl.u32 %v2114, 16
      %v2370 = vor.u32 %v2368, %v2366
      %v2372 = vshll.u32 %v2115, 16
      %v2374 = vrot.slane %v2372, 1
      %v2375 = vsel %vm813, %v2370, %v2374
      %v2376 = vshrl.u32 %v2115, 16
      %v2378 = vor.u32 %v2376, %v2374
      %v2380 = vshll.u32 %v2116, 16
      %v2382 = vrot.slane %v2380, 1
      %v2383 = vsel %vm813, %v2378, %v2382
      %v2384 = vshrl.u32 %v2116, 16
      %v2386 = vor.u32 %v2384, %v2382
      %v2388 = vshll.u32 %v2129, 16
      %v2390 = vrot.slane %v2388, 1
      %v2391 = vsel %vm813, %v2386, %v2390
      %v2416 = vunpack.c.l.b16 %v2308
      %v2417 = vunpack.c.l.b16 %v2309
      %v2418 = vunpack.c.l.b16 %v2310
      %v2419 = vunpack.c.l.b16 %v2311
      %v2420 = vunpack.c.l.b16 %v2312
      %v2421 = vunpack.c.l.b16 %v2313
      %v2422 = vunpack.c.l.b16 %v2314
      %v2423 = vunpack.c.l.b16 %v2315
      %v2424 = vunpack.c.l.b16 %v2316
      %v2425 = vunpack.c.l.b16 %v2317
      %v2426 = vunpack.c.l.b16 %v2318
      %v2427 = vunpack.c.l.b16 %v2319
      %v2428 = vunpack.c.l.b16 %v2320
      %v2429 = vunpack.c.l.b16 %v2321
      %v2430 = vunpack.c.l.b16 %v2322
      %v2431 = vunpack.c.l.b16 %v2323
      %v2432 = vpack.c.b16 %v2417, %v2416
      %v2433 = vpack.c.b16 %v2419, %v2418
      %v2434 = vpack.c.b16 %v2421, %v2420
      %v2435 = vpack.c.b16 %v2423, %v2422
      %v2436 = vpack.c.b16 %v2425, %v2424
      %v2437 = vpack.c.b16 %v2427, %v2426
      %v2438 = vpack.c.b16 %v2429, %v2428
      %v2439 = vpack.c.b16 %v2431, %v2430
      %2448 = vmatprep.subr.bf16.mxu0 0
      %2449 = vmatpush1.bf16.msra.mxu0 %v2432
      %2450 = vmatprep.subr.bf16.mxu0 0
      %2451 = vmatpush1.bf16.msra.mxu0 %v2433
      %2452 = vmatprep.subr.bf16.mxu0 0
      %2453 = vmatpush1.bf16.msra.mxu0 %v2434
      %2454 = vmatprep.subr.bf16.mxu0 0
      %2455 = vmatpush1.bf16.msra.mxu0 %v2435
      %2456 = vmatprep.subr.bf16.mxu0 0
      %2457 = vmatpush1.bf16.msra.mxu0 %v2436
      %2458 = vmatprep.subr.bf16.mxu0 0
      %2459 = vmatpush1.bf16.msra.mxu0 %v2437
      %2460 = vmatprep.subr.bf16.mxu0 0
      %2461 = vmatpush1.bf16.msra.mxu0 %v2438
      %2462 = vmatprep.subr.bf16.mxu0 0
      %2463 = vmatpush1.bf16.msra.mxu0 %v2439
      %2464 = vmatprep.subr.bf16.mxu0 0
      %2465 = vmatpush1.bf16.msra.mxu0 0
      %2466 = vmatprep.subr.bf16.mxu0 0
      %2467 = vmatpush1.bf16.msra.mxu0 0
      %2468 = vmatprep.subr.bf16.mxu0 0
      %2469 = vmatpush1.bf16.msra.mxu0 0
      %2470 = vmatprep.subr.bf16.mxu0 0
      %2471 = vmatpush1.bf16.msra.mxu0 0
      %2472 = vmatprep.subr.bf16.mxu0 0
      %2473 = vmatpush1.bf16.msra.mxu0 0
      %2474 = vmatprep.subr.bf16.mxu0 0
      %2475 = vmatpush1.bf16.msra.mxu0 0
      %2476 = vmatprep.subr.bf16.mxu0 0
      %2477 = vmatpush1.bf16.msra.mxu0 0
      %2478 = vmatprep.subr.bf16.mxu0 0
      %2479 = vmatpush1.bf16.msra.mxu0 0
      %2480 = vmatprep.mubr.bf16.mxu0 0
      %2481 = vmatmul.mubr.bf16.gmra.mrb[0].mxu0 %v2335
      %v2482 = vpop.f32.mrb[0].mxu0
      %v2483 = vadd.f32 0.0, %v2482
      %v2484 = vpop.f32.mrb[0].mxu0
      %v2485 = vpop.f32.mrb[0].mxu0
      %v2486 = vadd.f32 0.0, %v2485
      %v2487 = vpop.f32.mrb[0].mxu0
      %2488 = vmatprep.mubr.bf16.mxu0 0
      %2489 = vmatmul.mubr.bf16.gmra.mrb[0].mxu0 %v2343
      %v2490 = vpop.f32.mrb[0].mxu0
      %v2491 = vadd.f32 0.0, %v2490
      %v2492 = vpop.f32.mrb[0].mxu0
      %v2493 = vpop.f32.mrb[0].mxu0
      %v2494 = vadd.f32 0.0, %v2493
      %v2495 = vpop.f32.mrb[0].mxu0
      %2496 = vmatprep.mubr.bf16.mxu0 0
      %2497 = vmatmul.mubr.bf16.gmra.mrb[0].mxu0 %v2351
      %v2498 = vpop.f32.mrb[0].mxu0
      %v2499 = vadd.f32 0.0, %v2498
      %v2500 = vpop.f32.mrb[0].mxu0
      %v2501 = vpop.f32.mrb[0].mxu0
      %v2502 = vadd.f32 0.0, %v2501
      %v2503 = vpop.f32.mrb[0].mxu0
      %2504 = vmatprep.mubr.bf16.mxu0 0
      %2505 = vmatmul.mubr.bf16.gmra.mrb[0].mxu0 %v2359
      %v2506 = vpop.f32.mrb[0].mxu0
      %v2507 = vadd.f32 0.0, %v2506
      %v2508 = vpop.f32.mrb[0].mxu0
      %v2509 = vpop.f32.mrb[0].mxu0
      %v2510 = vadd.f32 0.0, %v2509
      %v2511 = vpop.f32.mrb[0].mxu0
      %2512 = vmatprep.mubr.bf16.mxu0 0
      %2513 = vmatmul.mubr.bf16.gmra.mrb[0].mxu0 %v2367
      %v2514 = vpop.f32.mrb[0].mxu0
      %v2515 = vadd.f32 0.0, %v2514
      %v2516 = vpop.f32.mrb[0].mxu0
      %v2517 = vpop.f32.mrb[0].mxu0
      %v2518 = vadd.f32 0.0, %v2517
      %v2519 = vpop.f32.mrb[0].mxu0
      %2520 = vmatprep.mubr.bf16.mxu0 0
      %2521 = vmatmul.mubr.bf16.gmra.mrb[0].mxu0 %v2375
      %v2522 = vpop.f32.mrb[0].mxu0
      %v2523 = vadd.f32 0.0, %v2522
      %v2524 = vpop.f32.mrb[0].mxu0
      %v2525 = vpop.f32.mrb[0].mxu0
      %v2526 = vadd.f32 0.0, %v2525
      %v2527 = vpop.f32.mrb[0].mxu0
      %2528 = vmatprep.mubr.bf16.mxu0 0
      %2529 = vmatmul.mubr.bf16.gmra.mrb[0].mxu0 %v2383
      %v2530 = vpop.f32.mrb[0].mxu0
      %v2531 = vadd.f32 0.0, %v2530
      %v2532 = vpop.f32.mrb[0].mxu0
      %v2533 = vpop.f32.mrb[0].mxu0
      %v2534 = vadd.f32 0.0, %v2533
      %v2535 = vpop.f32.mrb[0].mxu0
      %2536 = vmatprep.mubr.bf16.mxu0 0
      %2537 = vmatmul.mubr.bf16.gmra.mrb[0].mxu0 %v2391
      %v2538 = vpop.f32.mrb[0].mxu0
      %v2539 = vadd.f32 0.0, %v2538
      %v2540 = vpop.f32.mrb[0].mxu0
      %v2541 = vpop.f32.mrb[0].mxu0
      %v2542 = vadd.f32 0.0, %v2541
      %v2543 = vpop.f32.mrb[0].mxu0
      %2544 = vdwg.mxu0
      %v2545 = vadd.f32 %v2291, %v2483
      %v2546 = vadd.f32 %v2292, %v2486
      %v2547 = vadd.f32 %v2293, %v2491
      %v2548 = vadd.f32 %v2294, %v2494
      %v2549 = vadd.f32 %v2295, %v2499
      %v2550 = vadd.f32 %v2296, %v2502
      %v2551 = vadd.f32 %v2297, %v2507
      %v2552 = vadd.f32 %v2298, %v2510
      %v2553 = vadd.f32 %v2299, %v2515
      %v2554 = vadd.f32 %v2300, %v2518
      %v2555 = vadd.f32 %v2301, %v2523
      %v2556 = vadd.f32 %v2302, %v2526
      %v2557 = vadd.f32 %v2303, %v2531
      %v2558 = vadd.f32 %v2304, %v2534
      %v2559 = vadd.f32 %v2305, %v2539
      %v2560 = vadd.f32 %v2306, %v2542
      %v2561 = vld [vmem:[%s683] sm:$0xf]
      %v2562 = vld [vmem:[%s683 + $0x4] sm:$0xf]
      %v2563 = vld [vmem:[%s683 + $0x8] sm:$0xf]
      %v2564 = vld [vmem:[%s683 + $0xc] sm:$0xf]
      %v2565 = vld [vmem:[%s683 + $0x10] sm:$0xf]
      %v2566 = vld [vmem:[%s683 + $0x14] sm:$0xf]
      %v2567 = vld [vmem:[%s683 + $0x18] sm:$0xf]
      %v2568 = vld [vmem:[%s683 + $0x1c] sm:$0xf]
      %v2569 = vld [vmem:[%s683 + $0x20] sm:$0xf]
      %v2570 = vld [vmem:[%s683 + $0x24] sm:$0xf]
      %v2571 = vld [vmem:[%s683 + $0x28] sm:$0xf]
      %v2572 = vld [vmem:[%s683 + $0x2c] sm:$0xf]
      %v2573 = vld [vmem:[%s683 + $0x30] sm:$0xf]
      %v2574 = vld [vmem:[%s683 + $0x34] sm:$0xf]
      %v2575 = vld [vmem:[%s683 + $0x38] sm:$0xf]
      %v2576 = vld [vmem:[%s683 + $0x3c] sm:$0xf]
      %v2593 = vunpack.c.l.b16 %v2561
      %v2594 = vunpack.c.l.b16 %v2562
      %v2595 = vunpack.c.l.b16 %v2563
      %v2596 = vunpack.c.l.b16 %v2564
      %v2597 = vunpack.c.l.b16 %v2565
      %v2598 = vunpack.c.l.b16 %v2566
      %v2599 = vunpack.c.l.b16 %v2567
      %v2600 = vunpack.c.l.b16 %v2568
      %v2601 = vunpack.c.l.b16 %v2569
      %v2602 = vunpack.c.l.b16 %v2570
      %v2603 = vunpack.c.l.b16 %v2571
      %v2604 = vunpack.c.l.b16 %v2572
      %v2605 = vunpack.c.l.b16 %v2573
      %v2606 = vunpack.c.l.b16 %v2574
      %v2607 = vunpack.c.l.b16 %v2575
      %v2608 = vunpack.c.l.b16 %v2576
      %v2609 = vpack.c.b16 %v2594, %v2593
      %v2610 = vpack.c.b16 %v2596, %v2595
      %v2611 = vpack.c.b16 %v2598, %v2597
      %v2612 = vpack.c.b16 %v2600, %v2599
      %v2613 = vpack.c.b16 %v2602, %v2601
      %v2614 = vpack.c.b16 %v2604, %v2603
      %v2615 = vpack.c.b16 %v2606, %v2605
      %v2616 = vpack.c.b16 %v2608, %v2607
      %v2625 = vld [vmem:[%s11] sm:$0xf]
      %v2626 = vld [vmem:[%s11 + $0x4] sm:$0xf]
      %v2627 = vld [vmem:[%s11 + $0x8] sm:$0xf]
      %v2628 = vld [vmem:[%s11 + $0xc] sm:$0xf]
      %v2629 = vld [vmem:[%s11 + $0x10] sm:$0xf]
      %v2630 = vld [vmem:[%s11 + $0x14] sm:$0xf]
      %v2631 = vld [vmem:[%s11 + $0x18] sm:$0xf]
      %v2632 = vld [vmem:[%s11 + $0x1c] sm:$0xf]
      %v2633 = vld [vmem:[%s11 + $0x20] sm:$0xf]
      %v2634 = vld [vmem:[%s11 + $0x24] sm:$0xf]
      %v2635 = vld [vmem:[%s11 + $0x28] sm:$0xf]
      %v2636 = vld [vmem:[%s11 + $0x2c] sm:$0xf]
      %v2637 = vld [vmem:[%s11 + $0x30] sm:$0xf]
      %v2638 = vld [vmem:[%s11 + $0x34] sm:$0xf]
      %v2639 = vld [vmem:[%s11 + $0x38] sm:$0xf]
      %v2640 = vld [vmem:[%s11 + $0x3c] sm:$0xf]
      %v2657 = vunpack.c.l.b16 %v2625
      %v2658 = vunpack.c.l.b16 %v2626
      %v2659 = vunpack.c.l.b16 %v2627
      %v2660 = vunpack.c.l.b16 %v2628
      %v2661 = vunpack.c.l.b16 %v2629
      %v2662 = vunpack.c.l.b16 %v2630
      %v2663 = vunpack.c.l.b16 %v2631
      %v2664 = vunpack.c.l.b16 %v2632
      %v2665 = vunpack.c.l.b16 %v2633
      %v2666 = vunpack.c.l.b16 %v2634
      %v2667 = vunpack.c.l.b16 %v2635
      %v2668 = vunpack.c.l.b16 %v2636
      %v2669 = vunpack.c.l.b16 %v2637
      %v2670 = vunpack.c.l.b16 %v2638
      %v2671 = vunpack.c.l.b16 %v2639
      %v2672 = vunpack.c.l.b16 %v2640
      %v2673 = vpack.c.b16 %v2658, %v2657
      %v2674 = vpack.c.b16 %v2660, %v2659
      %v2675 = vpack.c.b16 %v2662, %v2661
      %v2676 = vpack.c.b16 %v2664, %v2663
      %v2677 = vpack.c.b16 %v2666, %v2665
      %v2678 = vpack.c.b16 %v2668, %v2667
      %v2679 = vpack.c.b16 %v2670, %v2669
      %v2680 = vpack.c.b16 %v2672, %v2671
      %2689 = vmatprep.subr.bf16.mxu0 0
      %2690 = vmatpush1.bf16.msra.mxu0 %v2673
      %2691 = vmatprep.subr.bf16.mxu0 0
      %2692 = vmatpush1.bf16.msra.mxu0 %v2674
      %2693 = vmatprep.subr.bf16.mxu0 0
      %2694 = vmatpush1.bf16.msra.mxu0 %v2675
      %2695 = vmatprep.subr.bf16.mxu0 0
      %2696 = vmatpush1.bf16.msra.mxu0 %v2676
      %2697 = vmatprep.subr.bf16.mxu0 0
      %2698 = vmatpush1.bf16.msra.mxu0 %v2677
      %2699 = vmatprep.subr.bf16.mxu0 0
      %2700 = vmatpush1.bf16.msra.mxu0 %v2678
      %2701 = vmatprep.subr.bf16.mxu0 0
      %2702 = vmatpush1.bf16.msra.mxu0 %v2679
      %2703 = vmatprep.subr.bf16.mxu0 0
      %2704 = vmatpush1.bf16.msra.mxu0 %v2680
      %2705 = vmatprep.subr.bf16.mxu0 0
      %2706 = vmatpush1.bf16.msra.mxu0 0
      %2707 = vmatprep.subr.bf16.mxu0 0
      %2708 = vmatpush1.bf16.msra.mxu0 0
      %2709 = vmatprep.subr.bf16.mxu0 0
      %2710 = vmatpush1.bf16.msra.mxu0 0
      %2711 = vmatprep.subr.bf16.mxu0 0
      %2712 = vmatpush1.bf16.msra.mxu0 0
      %2713 = vmatprep.subr.bf16.mxu0 0
      %2714 = vmatpush1.bf16.msra.mxu0 0
      %2715 = vmatprep.subr.bf16.mxu0 0
      %2716 = vmatpush1.bf16.msra.mxu0 0
      %2717 = vmatprep.subr.bf16.mxu0 0
      %2718 = vmatpush1.bf16.msra.mxu0 0
      %2719 = vmatprep.subr.bf16.mxu0 0
      %2720 = vmatpush1.bf16.msra.mxu0 0
      %2721 = vmatprep.mubr.bf16.mxu0 0
      %2722 = vmatmul.mubr.bf16.gmra.mrb[0].mxu0 %v2609
      %v2723 = vpop.f32.mrb[0].mxu0
      %v2724 = vadd.f32 0.0, %v2723
      %v2725 = vpop.f32.mrb[0].mxu0
      %v2726 = vpop.f32.mrb[0].mxu0
      %v2727 = vadd.f32 0.0, %v2726
      %v2728 = vpop.f32.mrb[0].mxu0
      %2729 = vmatprep.mubr.bf16.mxu0 0
      %2730 = vmatmul.mubr.bf16.gmra.mrb[0].mxu0 %v2610
      %v2731 = vpop.f32.mrb[0].mxu0
      %v2732 = vadd.f32 0.0, %v2731
      %v2733 = vpop.f32.mrb[0].mxu0
      %v2734 = vpop.f32.mrb[0].mxu0
      %v2735 = vadd.f32 0.0, %v2734
      %v2736 = vpop.f32.mrb[0].mxu0
      %2737 = vmatprep.mubr.bf16.mxu0 0
      %2738 = vmatmul.mubr.bf16.gmra.mrb[0].mxu0 %v2611
      %v2739 = vpop.f32.mrb[0].mxu0
      %v2740 = vadd.f32 0.0, %v2739
      %v2741 = vpop.f32.mrb[0].mxu0
      %v2742 = vpop.f32.mrb[0].mxu0
      %v2743 = vadd.f32 0.0, %v2742
      %v2744 = vpop.f32.mrb[0].mxu0
      %2745 = vmatprep.mubr.bf16.mxu0 0
      %2746 = vmatmul.mubr.bf16.gmra.mrb[0].mxu0 %v2612
      %v2747 = vpop.f32.mrb[0].mxu0
      %v2748 = vadd.f32 0.0, %v2747
      %v2749 = vpop.f32.mrb[0].mxu0
      %v2750 = vpop.f32.mrb[0].mxu0
      %v2751 = vadd.f32 0.0, %v2750
      %v2752 = vpop.f32.mrb[0].mxu0
      %2753 = vmatprep.mubr.bf16.mxu0 0
      %2754 = vmatmul.mubr.bf16.gmra.mrb[0].mxu0 %v2613
      %v2755 = vpop.f32.mrb[0].mxu0
      %v2756 = vadd.f32 0.0, %v2755
      %v2757 = vpop.f32.mrb[0].mxu0
      %v2758 = vpop.f32.mrb[0].mxu0
      %v2759 = vadd.f32 0.0, %v2758
      %v2760 = vpop.f32.mrb[0].mxu0
      %2761 = vmatprep.mubr.bf16.mxu0 0
      %2762 = vmatmul.mubr.bf16.gmra.mrb[0].mxu0 %v2614
      %v2763 = vpop.f32.mrb[0].mxu0
      %v2764 = vadd.f32 0.0, %v2763
      %v2765 = vpop.f32.mrb[0].mxu0
      %v2766 = vpop.f32.mrb[0].mxu0
      %v2767 = vadd.f32 0.0, %v2766
      %v2768 = vpop.f32.mrb[0].mxu0
      %2769 = vmatprep.mubr.bf16.mxu0 0
      %2770 = vmatmul.mubr.bf16.gmra.mrb[0].mxu0 %v2615
      %v2771 = vpop.f32.mrb[0].mxu0
      %v2772 = vadd.f32 0.0, %v2771
      %v2773 = vpop.f32.mrb[0].mxu0
      %v2774 = vpop.f32.mrb[0].mxu0
      %v2775 = vadd.f32 0.0, %v2774
      %v2776 = vpop.f32.mrb[0].mxu0
      %2777 = vmatprep.mubr.bf16.mxu0 0
      %2778 = vmatmul.mubr.bf16.gmra.mrb[0].mxu0 %v2616
      %v2779 = vpop.f32.mrb[0].mxu0
      %v2780 = vadd.f32 0.0, %v2779
      %v2781 = vpop.f32.mrb[0].mxu0
      %v2782 = vpop.f32.mrb[0].mxu0
      %v2783 = vadd.f32 0.0, %v2782
      %v2784 = vpop.f32.mrb[0].mxu0
      %2785 = vdwg.mxu0
      %v2786 = vadd.f32 %v2545, %v2724
      %v2787 = vadd.f32 %v2546, %v2727
      %v2788 = vadd.f32 %v2547, %v2732
      %v2789 = vadd.f32 %v2548, %v2735
      %v2790 = vadd.f32 %v2549, %v2740
      %v2791 = vadd.f32 %v2550, %v2743
      %v2792 = vadd.f32 %v2551, %v2748
      %v2793 = vadd.f32 %v2552, %v2751
      %v2794 = vadd.f32 %v2553, %v2756
      %v2795 = vadd.f32 %v2554, %v2759
      %v2796 = vadd.f32 %v2555, %v2764
      %v2797 = vadd.f32 %v2556, %v2767
      %v2798 = vadd.f32 %v2557, %v2772
      %v2799 = vadd.f32 %v2558, %v2775
      %v2800 = vadd.f32 %v2559, %v2780
      %v2801 = vadd.f32 %v2560, %v2783
      %v2802 = vld [vmem:[%s12] sm:$0x1]
      %v2804 = vlaneseq
      %v2805 = vshrl.u32 %v2804, 7
      %v2806 = vsub.s32 0, %v2805
      %v2807 = vrot.slane %v2802, %v2806
      %v2809 = vadd.f32 %v2786, %v2807
      %v2810 = vadd.f32 %v2787, %v2807
      %v2811 = vadd.f32 %v2788, %v2807
      %v2812 = vadd.f32 %v2789, %v2807
      %v2813 = vadd.f32 %v2790, %v2807
      %v2814 = vadd.f32 %v2791, %v2807
      %v2815 = vadd.f32 %v2792, %v2807
      %v2816 = vadd.f32 %v2793, %v2807
      %v2817 = vadd.f32 %v2794, %v2807
      %v2818 = vadd.f32 %v2795, %v2807
      %v2819 = vadd.f32 %v2796, %v2807
      %v2820 = vadd.f32 %v2797, %v2807
      %v2821 = vadd.f32 %v2798, %v2807
      %v2822 = vadd.f32 %v2799, %v2807
      %v2823 = vadd.f32 %v2800, %v2807
      %v2824 = vadd.f32 %v2801, %v2807
      %v2825 = vmax.f32 %v2809, 0.0
      %v2826 = vmax.f32 %v2810, 0.0
      %v2827 = vmax.f32 %v2811, 0.0
      %v2828 = vmax.f32 %v2812, 0.0
      %v2829 = vmax.f32 %v2813, 0.0
      %v2830 = vmax.f32 %v2814, 0.0
      %v2831 = vmax.f32 %v2815, 0.0
      %v2832 = vmax.f32 %v2816, 0.0
      %v2833 = vmax.f32 %v2817, 0.0
      %v2834 = vmax.f32 %v2818, 0.0
      %v2835 = vmax.f32 %v2819, 0.0
      %v2836 = vmax.f32 %v2820, 0.0
      %v2837 = vmax.f32 %v2821, 0.0
      %v2838 = vmax.f32 %v2822, 0.0
      %v2839 = vmax.f32 %v2823, 0.0
      %v2840 = vmax.f32 %v2824, 0.0
      %v2841 = vld [vmem:[%s698] sm:$0xff]
      %v2842 = vld [vmem:[%s698 + $0x8] sm:$0xff]
      %v2843 = vld [vmem:[%s698 + $0x10] sm:$0xff]
      %v2844 = vld [vmem:[%s698 + $0x18] sm:$0xff]
      %v2845 = vld [vmem:[%s698 + $0x20] sm:$0xff]
      %v2846 = vld [vmem:[%s698 + $0x28] sm:$0xff]
      %v2847 = vld [vmem:[%s698 + $0x30] sm:$0xff]
      %v2848 = vld [vmem:[%s698 + $0x38] sm:$0xff]
      %v2849 = vld [vmem:[%s698 + $0x40] sm:$0xff]
      %v2850 = vld [vmem:[%s698 + $0x48] sm:$0xff]
      %v2851 = vld [vmem:[%s698 + $0x50] sm:$0xff]
      %v2852 = vld [vmem:[%s698 + $0x58] sm:$0xff]
      %v2853 = vld [vmem:[%s698 + $0x60] sm:$0xff]
      %v2854 = vld [vmem:[%s698 + $0x68] sm:$0xff]
      %v2855 = vld [vmem:[%s698 + $0x70] sm:$0xff]
      %v2856 = vld [vmem:[%s698 + $0x78] sm:$0xff]
      %2858 = vset.pattern.permute.xlu0 0
      %2859 = vperm.xlu0 %2858, %v2841
      %v2860 = vpop.permute.xlu0 %2859
      %2863 = vset.pattern.permute.xlu0 0
      %2864 = vperm.xlu0 %2863, %v2842
      %v2865 = vpop.permute.xlu0 %2864
      %2868 = vset.pattern.permute.xlu0 0
      %2869 = vperm.xlu0 %2868, %v2843
      %v2870 = vpop.permute.xlu0 %2869
      %2873 = vset.pattern.permute.xlu0 0
      %2874 = vperm.xlu0 %2873, %v2844
      %v2875 = vpop.permute.xlu0 %2874
      %2878 = vset.pattern.permute.xlu0 0
      %2879 = vperm.xlu0 %2878, %v2845
      %v2880 = vpop.permute.xlu0 %2879
      %2883 = vset.pattern.permute.xlu0 0
      %2884 = vperm.xlu0 %2883, %v2846
      %v2885 = vpop.permute.xlu0 %2884
      %2888 = vset.pattern.permute.xlu0 0
      %2889 = vperm.xlu0 %2888, %v2847
      %v2890 = vpop.permute.xlu0 %2889
      %2893 = vset.pattern.permute.xlu0 0
      %2894 = vperm.xlu0 %2893, %v2848
      %v2895 = vpop.permute.xlu0 %2894
      %2898 = vset.pattern.permute.xlu0 0
      %2899 = vperm.xlu0 %2898, %v2849
      %v2900 = vpop.permute.xlu0 %2899
      %2903 = vset.pattern.permute.xlu0 0
      %2904 = vperm.xlu0 %2903, %v2850
      %v2905 = vpop.permute.xlu0 %2904
      %2908 = vset.pattern.permute.xlu0 0
      %2909 = vperm.xlu0 %2908, %v2851
      %v2910 = vpop.permute.xlu0 %2909
      %2913 = vset.pattern.permute.xlu0 0
      %2914 = vperm.xlu0 %2913, %v2852
      %v2915 = vpop.permute.xlu0 %2914
      %2918 = vset.pattern.permute.xlu0 0
      %2919 = vperm.xlu0 %2918, %v2853
      %v2920 = vpop.permute.xlu0 %2919
      %2923 = vset.pattern.permute.xlu0 0
      %2924 = vperm.xlu0 %2923, %v2854
      %v2925 = vpop.permute.xlu0 %2924
      %2928 = vset.pattern.permute.xlu0 0
      %2929 = vperm.xlu0 %2928, %v2855
      %v2930 = vpop.permute.xlu0 %2929
      %2933 = vset.pattern.permute.xlu0 0
      %2934 = vperm.xlu0 %2933, %v2856
      %v2935 = vpop.permute.xlu0 %2934
      %v2937 = vmul.f32 %v2825, %v2860
      %v2938 = vmul.f32 %v2826, %v2865
      %v2939 = vmul.f32 %v2827, %v2870
      %v2940 = vmul.f32 %v2828, %v2875
      %v2941 = vmul.f32 %v2829, %v2880
      %v2942 = vmul.f32 %v2830, %v2885
      %v2943 = vmul.f32 %v2831, %v2890
      %v2944 = vmul.f32 %v2832, %v2895
      %v2945 = vmul.f32 %v2833, %v2900
      %v2946 = vmul.f32 %v2834, %v2905
      %v2947 = vmul.f32 %v2835, %v2910
      %v2948 = vmul.f32 %v2836, %v2915
      %v2949 = vmul.f32 %v2837, %v2920
      %v2950 = vmul.f32 %v2838, %v2925
      %v2951 = vmul.f32 %v2839, %v2930
      %v2952 = vmul.f32 %v2840, %v2935
      %v2953 = vpack.c.bf16 %v2938, %v2937
      %v2954 = vpack.c.bf16 %v2940, %v2939
      %v2955 = vpack.c.bf16 %v2942, %v2941
      %v2956 = vpack.c.bf16 %v2944, %v2943
      %v2957 = vpack.c.bf16 %v2946, %v2945
      %v2958 = vpack.c.bf16 %v2948, %v2947
      %v2959 = vpack.c.bf16 %v2950, %v2949
      %v2960 = vpack.c.bf16 %v2952, %v2951
      %v2969 = vunpack.c.l.b16 %v2953
      %v2970 = vunpack.c.h.b16 %v2953
      %v2971 = vunpack.c.l.b16 %v2954
      %v2972 = vunpack.c.h.b16 %v2954
      %v2973 = vunpack.c.l.b16 %v2955
      %v2974 = vunpack.c.h.b16 %v2955
      %v2975 = vunpack.c.l.b16 %v2956
      %v2976 = vunpack.c.h.b16 %v2956
      %v2977 = vunpack.c.l.b16 %v2957
      %v2978 = vunpack.c.h.b16 %v2957
      %v2979 = vunpack.c.l.b16 %v2958
      %v2980 = vunpack.c.h.b16 %v2958
      %v2981 = vunpack.c.l.b16 %v2959
      %v2982 = vunpack.c.h.b16 %v2959
      %v2983 = vunpack.c.l.b16 %v2960
      %v2984 = vunpack.c.h.b16 %v2960
      %v2985 = vpack.c.b16 %v2969, %v2969
      %v2986 = vpack.c.b16 %v2970, %v2970
      %v2987 = vpack.c.b16 %v2971, %v2971
      %v2988 = vpack.c.b16 %v2972, %v2972
      %v2989 = vpack.c.b16 %v2973, %v2973
      %v2990 = vpack.c.b16 %v2974, %v2974
      %v2991 = vpack.c.b16 %v2975, %v2975
      %v2992 = vpack.c.b16 %v2976, %v2976
      %v2993 = vpack.c.b16 %v2977, %v2977
      %v2994 = vpack.c.b16 %v2978, %v2978
      %v2995 = vpack.c.b16 %v2979, %v2979
      %v2996 = vpack.c.b16 %v2980, %v2980
      %v2997 = vpack.c.b16 %v2981, %v2981
      %v2998 = vpack.c.b16 %v2982, %v2982
      %v2999 = vpack.c.b16 %v2983, %v2983
      %v3000 = vpack.c.b16 %v2984, %v2984
      %3017 = vst [vmem:[%s705] sm:$0xf] %v2985
      %3018 = vst [vmem:[%s705 + $0x4] sm:$0xf] %v2986
      %3019 = vst [vmem:[%s705 + $0x8] sm:$0xf] %v2987
      %3020 = vst [vmem:[%s705 + $0xc] sm:$0xf] %v2988
      %3021 = vst [vmem:[%s705 + $0x10] sm:$0xf] %v2989
      %3022 = vst [vmem:[%s705 + $0x14] sm:$0xf] %v2990
      %3023 = vst [vmem:[%s705 + $0x18] sm:$0xf] %v2991
      %3024 = vst [vmem:[%s705 + $0x1c] sm:$0xf] %v2992
      %3025 = vst [vmem:[%s705 + $0x20] sm:$0xf] %v2993
      %3026 = vst [vmem:[%s705 + $0x24] sm:$0xf] %v2994
      %3027 = vst [vmem:[%s705 + $0x28] sm:$0xf] %v2995
      %3028 = vst [vmem:[%s705 + $0x2c] sm:$0xf] %v2996
      %3029 = vst [vmem:[%s705 + $0x30] sm:$0xf] %v2997
      %3030 = vst [vmem:[%s705 + $0x34] sm:$0xf] %v2998
      %3031 = vst [vmem:[%s705 + $0x38] sm:$0xf] %v2999
      %3032 = vst [vmem:[%s705 + $0x3c] sm:$0xf] %v3000
      %s3033 = sadd.s32 %s25, 1
      %s3034 = smul.u32 16, %s3033
      %p3035 = scmp.lt.s32.totalorder %s3034, 63
      %s3036 = scalar_select %p3035, %s3034, 63
      %s3037 = smul.addr %s3036, 4
      %s3038 = scalar_lea.vmem %s14, %s3037
      // Predicated region
      $region77: #{residual_block_forward.2} parent=75 // pred_check
        %p3039 = pneg %p400
      $region78: #{residual_block_forward.2} parent=75 // pred_check_branch
        %3041 = sbr.rel (%p3039) target = $region80
      $region79: #{residual_block_forward.2} parent=75 // pred_region
        %s3042 = sadd.s32 %s25, 1
        %s3043 = smul.u32 16, %s3042
      $region80: #{residual_block_forward.2} parent=75 // pred_fallthru
        _
    $region76: #{residual_block_forward.2} parent=5 // pred_fallthru
      _
    %p3044 = scmp.le.s32.totalorder 2, %s20
    // Predicated region
    $region81: #{residual_block_forward.2} parent=5 // pred_check
      %p3045 = pneg %p3044
    $region82: #{residual_block_forward.2} parent=5 // pred_check_branch
      %3047 = sbr.rel (%p3045) target = $region84
    $region83: #{residual_block_forward.2} parent=5 // pred_region
      %s3048 = ssub.s32 %s20, 2
      // Predicated region
      $region85: #{residual_block_forward.2} parent=83 // pred_check
        %p3049 = pneg %p406
      $region86: #{residual_block_forward.2} parent=83 // pred_check_branch
        %3051 = sbr.rel (%p3049) target = $region88
      $region87: #{residual_block_forward.2} parent=83 // pred_region
        %s3052 = sadd.s32 %s26, 1
        %s3053 = smul.u32 16, %s3052
        %p3054 = scmp.lt.s32.totalorder %s3053, 63
        %s3055 = scalar_select %p3054, %s3053, 63
        %s3056 = smul.addr %s3055, 4
        %s3057 = scalar_lea.vmem %s14, %s3056
      $region88: #{residual_block_forward.2} parent=83 // pred_fallthru
        _
    $region84: #{residual_block_forward.2} parent=5 // pred_fallthru
      _
  $region6: #{residual_block_forward.2} parent=0 // loop_footer
    %s24 = sadd.s32 1, %s20
  $region7: #{residual_block_forward.2} parent=0 // loop_footer_branch
    %19 = sbr.rel target = $region3
  $region8: #{residual_block_forward.2} parent=0 // loop_exit
    _

// kernel: residual_block_forward.3
$region0: #{residual_block_forward.3}
  #allocation0 [shape = 'u32[]', space=smem, size = 0x4, offset = 0x4, fixed_abs, tag = 'smem constant byte address 0x4 - core index']
  #allocation1 [shape = 'u32[144,128]{1,0:T(1,128)}', space=vmem, size = 0x12000, scoped, tag = 'internal scratch']
  %s0 = inlined_call_operand.vmem [shape: bf16[512,128], index: 0, kind: input, shape index: {}, may-alias: {0,1,2}]
  %s1 = inlined_call_operand.vmem [shape: bf16[512,128], index: 1, kind: input, shape index: {}, may-alias: {0,1,2}]
  %s2 = inlined_call_operand.vmem [shape: bf16[512,128], index: 2, kind: input, shape index: {}, may-alias: {0,1,2}]
  %s3 = inlined_call_operand.vmem [shape: bf16[9,128,128], index: 3, kind: input, shape index: {}]
  %s4 = inlined_call_operand.vmem [shape: bf16[512,128], index: 4, kind: input, shape index: {}]
  %s5 = inlined_call_operand.vmem [shape: bf16[128,128], index: 5, kind: input, shape index: {}]
  %s6 = inlined_call_operand.vmem [shape: f32[1,128], index: 6, kind: input, shape index: {}]
  %s7 = inlined_call_operand.vmem [shape: f32[256,1], index: 7, kind: input, shape index: {}]
  %s8 = inlined_call_operand.vmem [shape: f32[512,128], index: 8, kind: output, shape index: {}]
  %s9 = sld [smem:[#allocation0]]
  $region65: #{residual_block_forward.3} parent=0
    _
  %s11 = ssub.s32 1, %s9
  %s12 = scalar_select 0, %s11, %s9
  loop: start=0, step=1, limit=4
  $region2: #{residual_block_forward.3} parent=0 // loop_pre_header
    _
  $region3: #{residual_block_forward.3} parent=0 // loop_header
    %s14 = sphi 0, %s18
    %p15 = scmp.ge.s32.totalorder %s14, 4
    %s24 = sphi 0, %s26
    %s27 = sphi 0, %s24
    %s28 = sphi 0, %s27
    %s44 = sphi 0, %s28
    %s52 = sphi 0, %s54
    %s55 = sphi 0, %s52
    %s56 = sphi 0, %s55
    %s72 = sphi 0, %s56
    %s80 = sphi 0, %s82
    %s83 = sphi 0, %s80
    %s84 = sphi 0, %s83
    %s100 = sphi 0, %s84
    %s104 = sphi 0, %s104
    %s106 = sphi 0, %s104
    %s107 = sphi 0, %s106
    %s121 = sphi 0, %s107
    %s129 = sphi 0, %s131
    %s132 = sphi 0, %s129
    %s133 = sphi 0, %s132
    %s149 = sphi 0, %s133
    %s153 = sphi 0, %s153
    %s155 = sphi 0, %s153
    %s156 = sphi 0, %s155
    %s170 = sphi 0, %s156
    %s174 = sphi 0, %s174
    %s176 = sphi 0, %s174
    %s177 = sphi 0, %s176
    %s191 = sphi 0, %s177
    %s197 = sphi 0, %s199
    %s200 = sphi 0, %s197
    %s201 = sphi 0, %s200
    %s217 = sphi 0, %s201
    %s225 = sphi 0, %s227
    %s228 = sphi 0, %s225
    %s229 = sphi 0, %s228
    %s245 = sphi 0, %s229
  $region4: #{residual_block_forward.3} parent=0 // loop_header_branch
    %17 = sbr.rel (%p15) target = $region8
  $region5: #{residual_block_forward.3} parent=0 // loop_body
    %s19 = ssub.s32 %s14, 1
    %s20 = ssub.s32 %s14, 2
    %s21 = sadd.s32 %s14, 1
    %s22 = ssub.s32 %s14, %s21
    %p23 = scmp.eq.s32.totalorder %s22, 0
    %s25 = sadd.s32 %s24, 1
    %s26 = scalar_select %p23, %s24, %s25
    %p29 = pneg %p23
    %p30 = scmp.eq.s32.totalorder %s14, 1
    %p31 = por %p29, %p30
    %p32 = scmp.ne.s32.totalorder %s24, %s27
    %p33 = scmp.eq.s32.totalorder %s14, 0
    %p34 = por %p32, %p33
    %p35 = scmp.ne.s32.totalorder %s24, %s27
    %p36 = scmp.eq.s32.totalorder %s19, 1
    %p37 = por %p35, %p36
    %p38 = scmp.ne.s32.totalorder %s27, %s28
    %p39 = scmp.eq.s32.totalorder %s19, 0
    %p40 = por %p38, %p39
    %p41 = scmp.ne.s32.totalorder %s27, %s28
    %p42 = scmp.eq.s32.totalorder %s20, 1
    %p43 = por %p41, %p42
    %p45 = scmp.ne.s32.totalorder %s28, %s44
    %p46 = scmp.eq.s32.totalorder %s20, 0
    %p47 = por %p45, %p46
    %s48 = sadd.s32 %s14, 1
    %s49 = sadd.s32 %s21, 1
    %s50 = ssub.s32 %s48, %s49
    %p51 = scmp.eq.s32.totalorder %s50, 0
    %s53 = sadd.s32 %s52, 1
    %s54 = scalar_select %p51, %s52, %s53
    %p57 = pneg %p51
    %p58 = scmp.eq.s32.totalorder %s14, 1
    %p59 = por %p57, %p58
    %p60 = scmp.ne.s32.totalorder %s52, %s55
    %p61 = scmp.eq.s32.totalorder %s14, 0
    %p62 = por %p60, %p61
    %p63 = scmp.ne.s32.totalorder %s52, %s55
    %p64 = scmp.eq.s32.totalorder %s19, 1
    %p65 = por %p63, %p64
    %p66 = scmp.ne.s32.totalorder %s55, %s56
    %p67 = scmp.eq.s32.totalorder %s19, 0
    %p68 = por %p66, %p67
    %p69 = scmp.ne.s32.totalorder %s55, %s56
    %p70 = scmp.eq.s32.totalorder %s20, 1
    %p71 = por %p69, %p70
    %p73 = scmp.ne.s32.totalorder %s56, %s72
    %p74 = scmp.eq.s32.totalorder %s20, 0
    %p75 = por %p73, %p74
    %s76 = sadd.s32 %s14, 2
    %s77 = sadd.s32 %s21, 2
    %s78 = ssub.s32 %s76, %s77
    %p79 = scmp.eq.s32.totalorder %s78, 0
    %s81 = sadd.s32 %s80, 1
    %s82 = scalar_select %p79, %s80, %s81
    %p85 = pneg %p79
    %p86 = scmp.eq.s32.totalorder %s14, 1
    %p87 = por %p85, %p86
    %p88 = scmp.ne.s32.totalorder %s80, %s83
    %p89 = scmp.eq.s32.totalorder %s14, 0
    %p90 = por %p88, %p89
    %p91 = scmp.ne.s32.totalorder %s80, %s83
    %p92 = scmp.eq.s32.totalorder %s19, 1
    %p93 = por %p91, %p92
    %p94 = scmp.ne.s32.totalorder %s83, %s84
    %p95 = scmp.eq.s32.totalorder %s19, 0
    %p96 = por %p94, %p95
    %p97 = scmp.ne.s32.totalorder %s83, %s84
    %p98 = scmp.eq.s32.totalorder %s20, 1
    %p99 = por %p97, %p98
    %p101 = scmp.ne.s32.totalorder %s84, %s100
    %p102 = scmp.eq.s32.totalorder %s20, 0
    %p103 = por %p101, %p102
    %s105 = sadd.s32 %s104, 1
    %p108 = scmp.eq.s32.totalorder %s14, 1
    %p109 = scmp.ne.s32.totalorder %s104, %s106
    %p110 = scmp.eq.s32.totalorder %s14, 0
    %p111 = por %p109, %p110
    %p112 = scmp.ne.s32.totalorder %s104, %s106
    %p113 = scmp.eq.s32.totalorder %s19, 1
    %p114 = por %p112, %p113
    %p115 = scmp.ne.s32.totalorder %s106, %s107
    %p116 = scmp.eq.s32.totalorder %s19, 0
    %p117 = por %p115, %p116
    %p118 = scmp.ne.s32.totalorder %s106, %s107
    %p119 = scmp.eq.s32.totalorder %s20, 1
    %p120 = por %p118, %p119
    %p122 = scmp.ne.s32.totalorder %s107, %s121
    %p123 = scmp.eq.s32.totalorder %s20, 0
    %p124 = por %p122, %p123
    %s125 = sadd.s32 %s14, 1
    %s126 = sadd.s32 %s21, 1
    %s127 = ssub.s32 %s125, %s126
    %p128 = scmp.eq.s32.totalorder %s127, 0
    %s130 = sadd.s32 %s129, 1
    %s131 = scalar_select %p128, %s129, %s130
    %p134 = pneg %p128
    %p135 = scmp.eq.s32.totalorder %s14, 1
    %p136 = por %p134, %p135
    %p137 = scmp.ne.s32.totalorder %s129, %s132
    %p138 = scmp.eq.s32.totalorder %s14, 0
    %p139 = por %p137, %p138
    %p140 = scmp.ne.s32.totalorder %s129, %s132
    %p141 = scmp.eq.s32.totalorder %s19, 1
    %p142 = por %p140, %p141
    %p143 = scmp.ne.s32.totalorder %s132, %s133
    %p144 = scmp.eq.s32.totalorder %s19, 0
    %p145 = por %p143, %p144
    %p146 = scmp.ne.s32.totalorder %s132, %s133
    %p147 = scmp.eq.s32.totalorder %s20, 1
    %p148 = por %p146, %p147
    %p150 = scmp.ne.s32.totalorder %s133, %s149
    %p151 = scmp.eq.s32.totalorder %s20, 0
    %p152 = por %p150, %p151
    %s154 = sadd.s32 %s153, 1
    %p157 = scmp.eq.s32.totalorder %s14, 1
    %p158 = scmp.ne.s32.totalorder %s153, %s155
    %p159 = scmp.eq.s32.totalorder %s14, 0
    %p160 = por %p158, %p159
    %p161 = scmp.ne.s32.totalorder %s153, %s155
    %p162 = scmp.eq.s32.totalorder %s19, 1
    %p163 = por %p161, %p162
    %p164 = scmp.ne.s32.totalorder %s155, %s156
    %p165 = scmp.eq.s32.totalorder %s19, 0
    %p166 = por %p164, %p165
    %p167 = scmp.ne.s32.totalorder %s155, %s156
    %p168 = scmp.eq.s32.totalorder %s20, 1
    %p169 = por %p167, %p168
    %p171 = scmp.ne.s32.totalorder %s156, %s170
    %p172 = scmp.eq.s32.totalorder %s20, 0
    %p173 = por %p171, %p172
    %s175 = sadd.s32 %s174, 1
    %p178 = scmp.eq.s32.totalorder %s14, 1
    %p179 = scmp.ne.s32.totalorder %s174, %s176
    %p180 = scmp.eq.s32.totalorder %s14, 0
    %p181 = por %p179, %p180
    %p182 = scmp.ne.s32.totalorder %s174, %s176
    %p183 = scmp.eq.s32.totalorder %s19, 1
    %p184 = por %p182, %p183
    %p185 = scmp.ne.s32.totalorder %s176, %s177
    %p186 = scmp.eq.s32.totalorder %s19, 0
    %p187 = por %p185, %p186
    %p188 = scmp.ne.s32.totalorder %s176, %s177
    %p189 = scmp.eq.s32.totalorder %s20, 1
    %p190 = por %p188, %p189
    %p192 = scmp.ne.s32.totalorder %s177, %s191
    %p193 = scmp.eq.s32.totalorder %s20, 0
    %p194 = por %p192, %p193
    %s195 = ssub.s32 %s14, %s21
    %p196 = scmp.eq.s32.totalorder %s195, 0
    %s198 = sadd.s32 %s197, 1
    %s199 = scalar_select %p196, %s197, %s198
    %p202 = pneg %p196
    %p203 = scmp.eq.s32.totalorder %s14, 1
    %p204 = por %p202, %p203
    %p205 = scmp.ne.s32.totalorder %s197, %s200
    %p206 = scmp.eq.s32.totalorder %s14, 0
    %p207 = por %p205, %p206
    %p208 = scmp.ne.s32.totalorder %s197, %s200
    %p209 = scmp.eq.s32.totalorder %s19, 1
    %p210 = por %p208, %p209
    %p211 = scmp.ne.s32.totalorder %s200, %s201
    %p212 = scmp.eq.s32.totalorder %s19, 0
    %p213 = por %p211, %p212
    %p214 = scmp.ne.s32.totalorder %s200, %s201
    %p215 = scmp.eq.s32.totalorder %s20, 1
    %p216 = por %p214, %p215
    %p218 = scmp.ne.s32.totalorder %s201, %s217
    %p219 = scmp.eq.s32.totalorder %s20, 0
    %p220 = por %p218, %p219
    %s221 = sadd.s32 %s14, 1
    %s222 = sadd.s32 %s21, 1
    %s223 = ssub.s32 %s221, %s222
    %p224 = scmp.eq.s32.totalorder %s223, 0
    %s226 = sadd.s32 %s225, 1
    %s227 = scalar_select %p224, %s225, %s226
    %p230 = pneg %p224
    %p231 = scmp.eq.s32.totalorder %s14, 1
    %p232 = por %p230, %p231
    %p233 = scmp.ne.s32.totalorder %s225, %s228
    %p234 = scmp.eq.s32.totalorder %s14, 0
    %p235 = por %p233, %p234
    %p236 = scmp.ne.s32.totalorder %s225, %s228
    %p237 = scmp.eq.s32.totalorder %s19, 1
    %p238 = por %p236, %p237
    %p239 = scmp.ne.s32.totalorder %s228, %s229
    %p240 = scmp.eq.s32.totalorder %s19, 0
    %p241 = por %p239, %p240
    %p242 = scmp.ne.s32.totalorder %s228, %s229
    %p243 = scmp.eq.s32.totalorder %s20, 1
    %p244 = por %p242, %p243
    %p246 = scmp.ne.s32.totalorder %s229, %s245
    %p247 = scmp.eq.s32.totalorder %s20, 0
    %p248 = por %p246, %p247
    %p249 = scmp.le.s32.totalorder 1, %s14
    %p250 = scmp.lt.s32.totalorder %s14, 3
    %p251 = pnand %p249, %p250
    %p252 = pneg %p251
    // Predicated region
    $region9: #{residual_block_forward.3} parent=5 // pred_check
      _
    $region10: #{residual_block_forward.3} parent=5 // pred_check_branch
      %254 = sbr.rel (%p251) target = $region12
    $region11: #{residual_block_forward.3} parent=5 // pred_region
      %s255 = ssub.s32 %s14, 1
      // Predicated region
      $region13: #{residual_block_forward.3} parent=11 // pred_check
        %p256 = pneg %p117
      $region14: #{residual_block_forward.3} parent=11 // pred_check_branch
        %258 = sbr.rel (%p256) target = $region16
      $region15: #{residual_block_forward.3} parent=11 // pred_region
        _
      $region16: #{residual_block_forward.3} parent=11 // pred_fallthru
        _
      // Predicated region
      $region17: #{residual_block_forward.3} parent=11 // pred_check
        %p259 = pneg %p166
      $region18: #{residual_block_forward.3} parent=11 // pred_check_branch
        %261 = sbr.rel (%p259) target = $region20
      $region19: #{residual_block_forward.3} parent=11 // pred_region
        _
      $region20: #{residual_block_forward.3} parent=11 // pred_fallthru
        _
      // Predicated region
      $region21: #{residual_block_forward.3} parent=11 // pred_check
        %p262 = pneg %p187
      $region22: #{residual_block_forward.3} parent=11 // pred_check_branch
        %264 = sbr.rel (%p262) target = $region24
      $region23: #{residual_block_forward.3} parent=11 // pred_region
        _
      $region24: #{residual_block_forward.3} parent=11 // pred_fallthru
        _
    $region12: #{residual_block_forward.3} parent=5 // pred_fallthru
      _
    %p265 = scmp.lt.s32.totalorder %s14, 2
    // Predicated region
    $region25: #{residual_block_forward.3} parent=5 // pred_check
      %p266 = pneg %p265
    $region26: #{residual_block_forward.3} parent=5 // pred_check_branch
      %268 = sbr.rel (%p266) target = $region28
    $region27: #{residual_block_forward.3} parent=5 // pred_region
      // Predicated region
      $region29: #{residual_block_forward.3} parent=27 // pred_check
        %p269 = pneg %p34
      $region30: #{residual_block_forward.3} parent=27 // pred_check_branch
        %271 = sbr.rel (%p269) target = $region32
      $region31: #{residual_block_forward.3} parent=27 // pred_region
        %s272 = smul.u32 16, %s14
        %p273 = scmp.lt.s32.totalorder %s272, 63
        %s274 = scalar_select %p273, %s272, 63
        %s275 = smul.addr %s274, 4
        %s276 = scalar_lea.vmem %s0, %s275
        %s277 = smul.u32 16, %s14
      $region32: #{residual_block_forward.3} parent=27 // pred_fallthru
        _
      // Predicated region
      $region33: #{residual_block_forward.3} parent=27 // pred_check
        %p278 = pneg %p62
      $region34: #{residual_block_forward.3} parent=27 // pred_check_branch
        %280 = sbr.rel (%p278) target = $region36
      $region35: #{residual_block_forward.3} parent=27 // pred_region
        %s281 = sadd.s32 %s14, 1
        %s282 = smul.u32 16, %s281
        %p283 = scmp.lt.s32.totalorder %s282, 63
        %s284 = scalar_select %p283, %s282, 63
        %s285 = smul.addr %s284, 4
        %s286 = scalar_lea.vmem %s1, %s285
        %s287 = sadd.s32 %s14, 1
        %s288 = smul.u32 16, %s287
      $region36: #{residual_block_forward.3} parent=27 // pred_fallthru
        _
      // Predicated region
      $region37: #{residual_block_forward.3} parent=27 // pred_check
        %p289 = pneg %p90
      $region38: #{residual_block_forward.3} parent=27 // pred_check_branch
        %291 = sbr.rel (%p289) target = $region40
      $region39: #{residual_block_forward.3} parent=27 // pred_region
        %s292 = sadd.s32 %s14, 2
        %s293 = smul.u32 16, %s292
        %p294 = scmp.lt.s32.totalorder %s293, 63
        %s295 = scalar_select %p294, %s293, 63
        %s296 = smul.addr %s295, 4
        %s297 = scalar_lea.vmem %s2, %s296
        %s298 = sadd.s32 %s14, 2
        %s299 = smul.u32 16, %s298
      $region40: #{residual_block_forward.3} parent=27 // pred_fallthru
        _
      // Predicated region
      $region41: #{residual_block_forward.3} parent=27 // pred_check
        %p300 = pneg %p139
      $region42: #{residual_block_forward.3} parent=27 // pred_check_branch
        %302 = sbr.rel (%p300) target = $region44
      $region43: #{residual_block_forward.3} parent=27 // pred_region
        %s303 = sadd.s32 %s14, 1
        %s304 = smul.u32 16, %s303
        %p305 = scmp.lt.s32.totalorder %s304, 63
        %s306 = scalar_select %p305, %s304, 63
        %s307 = smul.addr %s306, 4
        %s308 = scalar_lea.vmem %s4, %s307
        %s309 = sadd.s32 %s14, 1
        %s310 = smul.u32 16, %s309
      $region44: #{residual_block_forward.3} parent=27 // pred_fallthru
        _
      // Predicated region
      $region45: #{residual_block_forward.3} parent=27 // pred_check
        %p311 = pneg %p207
      $region46: #{residual_block_forward.3} parent=27 // pred_check_branch
        %313 = sbr.rel (%p311) target = $region48
      $region47: #{residual_block_forward.3} parent=27 // pred_region
        %s314 = smul.u32 16, %s14
        %p315 = scmp.lt.s32.totalorder %s314, 31
        %s316 = scalar_select %p315, %s314, 31
        %s317 = smul.addr %s316, 8
        %s318 = scalar_lea.vmem %s7, %s317
        %s319 = smul.u32 16, %s14
      $region48: #{residual_block_forward.3} parent=27 // pred_fallthru
        _
    $region28: #{residual_block_forward.3} parent=5 // pred_fallthru
      _
    %p320 = scmp.le.s32.totalorder 1, %s14
    %p321 = scmp.lt.s32.totalorder %s14, 3
    %p322 = pnand %p320, %p321
    %p323 = pneg %p322
    // Predicated region
    $region49: #{residual_block_forward.3} parent=5 // pred_check
      _
    $region50: #{residual_block_forward.3} parent=5 // pred_check_branch
      %325 = sbr.rel (%p322) target = $region52
    $region51: #{residual_block_forward.3} parent=5 // pred_region
      %s326 = ssub.s32 %s14, 1
      %s327 = smul.u32 16, %s19
      %p328 = scmp.lt.s32.totalorder %s327, 63
      %s329 = scalar_select %p328, %s327, 63
      %s330 = smul.addr %s329, 4
      %s331 = scalar_lea.vmem %s0, %s330
      %p332 = pneg %p40
      %p333 = pneg %p37
      %s334 = sadd.s32 %s19, 1
      %s335 = smul.u32 16, %s334
      %p336 = scmp.lt.s32.totalorder %s335, 63
      %s337 = scalar_select %p336, %s335, 63
      %s338 = smul.addr %s337, 4
      %s339 = scalar_lea.vmem %s1, %s338
      %p340 = pneg %p68
      %p341 = pneg %p65
      %s342 = sadd.s32 %s19, 2
      %s343 = smul.u32 16, %s342
      %p344 = scmp.lt.s32.totalorder %s343, 63
      %s345 = scalar_select %p344, %s343, 63
      %s346 = smul.addr %s345, 4
      %s347 = scalar_lea.vmem %s2, %s346
      %p348 = pneg %p96
      %p349 = pneg %p93
      %p350 = pneg %p117
      %p351 = pneg %p114
      %s352 = sadd.s32 %s19, 1
      %s353 = smul.u32 16, %s352
      %p354 = scmp.lt.s32.totalorder %s353, 63
      %s355 = scalar_select %p354, %s353, 63
      %s356 = smul.addr %s355, 4
      %s357 = scalar_lea.vmem %s4, %s356
      %p358 = pneg %p145
      %p359 = pneg %p142
      %p360 = pneg %p166
      %p361 = pneg %p163
      %p362 = pneg %p187
      %p363 = pneg %p184
      %s364 = smul.u32 16, %s19
      %p365 = scmp.lt.s32.totalorder %s364, 31
      %s366 = scalar_select %p365, %s364, 31
      %s367 = smul.addr %s366, 8
      %s368 = scalar_lea.vmem %s7, %s367
      %p369 = pneg %p213
      %p370 = pneg %p210
      %p371 = pneg %p241
      %p372 = pneg %p238
      %s373 = sadd.s32 %s19, 1
      %s374 = smul.u32 16, %s373
      %p375 = scmp.lt.s32.totalorder %s374, 63
      %s376 = scalar_select %p375, %s374, 63
      %s377 = smul.addr %s376, 8
      %s378 = scalar_lea.vmem %s8, %s377
      %s379 = smul.u32 16, %s19
      %p380 = scmp.lt.s32.totalorder %s379, 63
      %s381 = scalar_select %p380, %s379, 63
      %s382 = smul.addr %s381, 4
      %s383 = scalar_lea.vmem %s0, %s382
      %s384 = smul.u32 16, %s19
      %s385 = sadd.s32 %s19, 1
      %s386 = smul.u32 16, %s385
      %p387 = scmp.lt.s32.totalorder %s386, 63
      %s388 = scalar_select %p387, %s386, 63
      %s389 = smul.addr %s388, 4
      %s390 = scalar_lea.vmem %s1, %s389
      %s391 = sadd.s32 %s19, 1
      %s392 = smul.u32 16, %s391
      %s393 = sadd.s32 %s19, 2
      %s394 = smul.u32 16, %s393
      %p395 = scmp.lt.s32.totalorder %s394, 63
      %s396 = scalar_select %p395, %s394, 63
      %s397 = smul.addr %s396, 4
      %s398 = scalar_lea.vmem %s2, %s397
      %s399 = sadd.s32 %s19, 2
      %s400 = smul.u32 16, %s399
      %s401 = sadd.s32 %s19, 1
      %s402 = smul.u32 16, %s401
      %p403 = scmp.lt.s32.totalorder %s402, 63
      %s404 = scalar_select %p403, %s402, 63
      %s405 = smul.addr %s404, 4
      %s406 = scalar_lea.vmem %s4, %s405
      %s407 = sadd.s32 %s19, 1
      %s408 = smul.u32 16, %s407
      %s409 = smul.u32 16, %s19
      %p410 = scmp.lt.s32.totalorder %s409, 31
      %s411 = scalar_select %p410, %s409, 31
      %s412 = smul.addr %s411, 8
      %s413 = scalar_lea.vmem %s7, %s412
      %s414 = smul.u32 16, %s19
      %s415 = sadd.s32 %s19, 1
      %s416 = smul.u32 16, %s415
      %p417 = scmp.lt.s32.totalorder %s416, 63
      %s418 = scalar_select %p417, %s416, 63
      %s419 = smul.addr %s418, 8
      %s420 = scalar_lea.vmem %s8, %s419
      %s421 = sadd.s32 %s19, 1
      %s422 = smul.u32 16, %s421
      %v424 = vld [vmem:[%s383 + $0x38] sm:$0xf]
      %v425 = vld [vmem:[%s383 + $0x3c] sm:$0xf]
      %v426 = vld [vmem:[%s390] sm:$0xf]
      %v427 = vld [vmem:[%s390 + $0x4] sm:$0xf]
      %v428 = vld [vmem:[%s390 + $0x8] sm:$0xf]
      %v429 = vld [vmem:[%s390 + $0xc] sm:$0xf]
      %v430 = vld [vmem:[%s390 + $0x10] sm:$0xf]
      %v431 = vld [vmem:[%s390 + $0x14] sm:$0xf]
      %v432 = vld [vmem:[%s390 + $0x18] sm:$0xf]
      %v433 = vld [vmem:[%s390 + $0x1c] sm:$0xf]
      %v434 = vld [vmem:[%s390 + $0x20] sm:$0xf]
      %v435 = vld [vmem:[%s390 + $0x24] sm:$0xf]
      %v436 = vld [vmem:[%s390 + $0x28] sm:$0xf]
      %v437 = vld [vmem:[%s390 + $0x2c] sm:$0xf]
      %v438 = vld [vmem:[%s390 + $0x30] sm:$0xf]
      %v439 = vld [vmem:[%s390 + $0x34] sm:$0xf]
      %v440 = vld [vmem:[%s390 + $0x38] sm:$0xf]
      %v441 = vld [vmem:[%s390 + $0x3c] sm:$0xf]
      %v442 = vld [vmem:[%s398] sm:$0xf]
      %v443 = vld [vmem:[%s398 + $0x4] sm:$0xf]
      %v446 = vunpack.c.l.b16 %v424
      %v447 = vunpack.c.l.b16 %v425
      %v448 = vpack.c.b16 %v447, %v446
      %v465 = vunpack.c.l.b16 %v426
      %v466 = vunpack.c.l.b16 %v427
      %v467 = vunpack.c.l.b16 %v428
      %v468 = vunpack.c.l.b16 %v429
      %v469 = vunpack.c.l.b16 %v430
      %v470 = vunpack.c.l.b16 %v431
      %v471 = vunpack.c.l.b16 %v432
      %v472 = vunpack.c.l.b16 %v433
      %v473 = vunpack.c.l.b16 %v434
      %v474 = vunpack.c.l.b16 %v435
      %v475 = vunpack.c.l.b16 %v436
      %v476 = vunpack.c.l.b16 %v437
      %v477 = vunpack.c.l.b16 %v438
      %v478 = vunpack.c.l.b16 %v439
      %v479 = vunpack.c.l.b16 %v440
      %v480 = vunpack.c.l.b16 %v441
      %v481 = vpack.c.b16 %v466, %v465
      %v482 = vpack.c.b16 %v468, %v467
      %v483 = vpack.c.b16 %v470, %v469
      %v484 = vpack.c.b16 %v472, %v471
      %v485 = vpack.c.b16 %v474, %v473
      %v486 = vpack.c.b16 %v476, %v475
      %v487 = vpack.c.b16 %v478, %v477
      %v488 = vpack.c.b16 %v480, %v479
      %v499 = vunpack.c.l.b16 %v442
      %v500 = vunpack.c.l.b16 %v443
      %v501 = vpack.c.b16 %v500, %v499
      %v502 = vld [vmem:[%s3] sm:$0xf]
      %v503 = vld [vmem:[%s3 + $0x4] sm:$0xf]
      %v504 = vld [vmem:[%s3 + $0x8] sm:$0xf]
      %v505 = vld [vmem:[%s3 + $0xc] sm:$0xf]
      %v506 = vld [vmem:[%s3 + $0x10] sm:$0xf]
      %v507 = vld [vmem:[%s3 + $0x14] sm:$0xf]
      %v508 = vld [vmem:[%s3 + $0x18] sm:$0xf]
      %v509 = vld [vmem:[%s3 + $0x1c] sm:$0xf]
      %v510 = vld [vmem:[%s3 + $0x20] sm:$0xf]
      %v511 = vld [vmem:[%s3 + $0x24] sm:$0xf]
      %v512 = vld [vmem:[%s3 + $0x28] sm:$0xf]
      %v513 = vld [vmem:[%s3 + $0x2c] sm:$0xf]
      %v514 = vld [vmem:[%s3 + $0x30] sm:$0xf]
      %v515 = vld [vmem:[%s3 + $0x34] sm:$0xf]
      %v516 = vld [vmem:[%s3 + $0x38] sm:$0xf]
      %v517 = vld [vmem:[%s3 + $0x3c] sm:$0xf]
      %s518 = scalar_lea.vmem %s3, 64
      %v519 = vld [vmem:[%s518] sm:$0xf]
      %v520 = vld [vmem:[%s518 + $0x4] sm:$0xf]
      %v521 = vld [vmem:[%s518 + $0x8] sm:$0xf]
      %v522 = vld [vmem:[%s518 + $0xc] sm:$0xf]
      %v523 = vld [vmem:[%s518 + $0x10] sm:$0xf]
      %v524 = vld [vmem:[%s518 + $0x14] sm:$0xf]
      %v525 = vld [vmem:[%s518 + $0x18] sm:$0xf]
      %v526 = vld [vmem:[%s518 + $0x1c] sm:$0xf]
      %v527 = vld [vmem:[%s518 + $0x20] sm:$0xf]
      %v528 = vld [vmem:[%s518 + $0x24] sm:$0xf]
      %v529 = vld [vmem:[%s518 + $0x28] sm:$0xf]
      %v530 = vld [vmem:[%s518 + $0x2c] sm:$0xf]
      %v531 = vld [vmem:[%s518 + $0x30] sm:$0xf]
      %v532 = vld [vmem:[%s518 + $0x34] sm:$0xf]
      %v533 = vld [vmem:[%s518 + $0x38] sm:$0xf]
      %v534 = vld [vmem:[%s518 + $0x3c] sm:$0xf]
      %vm535 = vcmask 1044480
      %v536 = vrot.slane %v448, 3
      %v537 = vrot.slane %v481, 3
      %v538 = vsel %vm535, %v536, %v537
      %v539 = vrot.slane %v482, 3
      %v540 = vsel %vm535, %v537, %v539
      %v541 = vrot.slane %v483, 3
      %v542 = vsel %vm535, %v539, %v541
      %v543 = vrot.slane %v484, 3
      %v544 = vsel %vm535, %v541, %v543
      %v545 = vrot.slane %v485, 3
      %v546 = vsel %vm535, %v543, %v545
      %v547 = vrot.slane %v486, 3
      %v548 = vsel %vm535, %v545, %v547
      %v549 = vrot.slane %v487, 3
      %v550 = vsel %vm535, %v547, %v549
      %v551 = vrot.slane %v488, 3
      %v552 = vsel %vm535, %v549, %v551
      %v577 = vunpack.c.l.b16 %v519
      %v578 = vunpack.c.l.b16 %v520
      %v579 = vunpack.c.l.b16 %v521
      %v580 = vunpack.c.l.b16 %v522
      %v581 = vunpack.c.l.b16 %v523
      %v582 = vunpack.c.l.b16 %v524
      %v583 = vunpack.c.l.b16 %v525
      %v584 = vunpack.c.l.b16 %v526
      %v585 = vunpack.c.l.b16 %v527
      %v586 = vunpack.c.l.b16 %v528
      %v587 = vunpack.c.l.b16 %v529
      %v588 = vunpack.c.l.b16 %v530
      %v589 = vunpack.c.l.b16 %v531
      %v590 = vunpack.c.l.b16 %v532
      %v591 = vunpack.c.l.b16 %v533
      %v592 = vunpack.c.l.b16 %v534
      %v593 = vpack.c.b16 %v578, %v577
      %v594 = vpack.c.b16 %v580, %v579
      %v595 = vpack.c.b16 %v582, %v581
      %v596 = vpack.c.b16 %v584, %v583
      %v597 = vpack.c.b16 %v586, %v585
      %v598 = vpack.c.b16 %v588, %v587
      %v599 = vpack.c.b16 %v590, %v589
      %v600 = vpack.c.b16 %v592, %v591
      %609 = vmatprep.subr.bf16.mxu0 0
      %610 = vmatpush1.bf16.msra.mxu0 %v593
      %611 = vmatprep.subr.bf16.mxu0 0
      %612 = vmatpush1.bf16.msra.mxu0 %v594
      %613 = vmatprep.subr.bf16.mxu0 0
      %614 = vmatpush1.bf16.msra.mxu0 %v595
      %615 = vmatprep.subr.bf16.mxu0 0
      %616 = vmatpush1.bf16.msra.mxu0 %v596
      %617 = vmatprep.subr.bf16.mxu0 0
      %618 = vmatpush1.bf16.msra.mxu0 %v597
      %619 = vmatprep.subr.bf16.mxu0 0
      %620 = vmatpush1.bf16.msra.mxu0 %v598
      %621 = vmatprep.subr.bf16.mxu0 0
      %622 = vmatpush1.bf16.msra.mxu0 %v599
      %623 = vmatprep.subr.bf16.mxu0 0
      %624 = vmatpush1.bf16.msra.mxu0 %v600
      %625 = vmatprep.subr.bf16.mxu0 0
      %626 = vmatpush1.bf16.msra.mxu0 0
      %627 = vmatprep.subr.bf16.mxu0 0
      %628 = vmatpush1.bf16.msra.mxu0 0
      %629 = vmatprep.subr.bf16.mxu0 0
      %630 = vmatpush1.bf16.msra.mxu0 0
      %631 = vmatprep.subr.bf16.mxu0 0
      %632 = vmatpush1.bf16.msra.mxu0 0
      %633 = vmatprep.subr.bf16.mxu0 0
      %634 = vmatpush1.bf16.msra.mxu0 0
      %635 = vmatprep.subr.bf16.mxu0 0
      %636 = vmatpush1.bf16.msra.mxu0 0
      %637 = vmatprep.subr.bf16.mxu0 0
      %638 = vmatpush1.bf16.msra.mxu0 0
      %639 = vmatprep.subr.bf16.mxu0 0
      %640 = vmatpush1.bf16.msra.mxu0 0
      %641 = vmatprep.mubr.bf16.mxu0 0
      %642 = vmatmul.mubr.bf16.gmra.mrb[0].mxu0 %v538
      %v643 = vpop.f32.mrb[0].mxu0
      %v644 = vadd.f32 0.0, %v643
      %v645 = vpop.f32.mrb[0].mxu0
      %v646 = vpop.f32.mrb[0].mxu0
      %v647 = vadd.f32 0.0, %v646
      %v648 = vpop.f32.mrb[0].mxu0
      %649 = vmatprep.mubr.bf16.mxu0 0
      %650 = vmatmul.mubr.bf16.gmra.mrb[0].mxu0 %v540
      %v651 = vpop.f32.mrb[0].mxu0
      %v652 = vadd.f32 0.0, %v651
      %v653 = vpop.f32.mrb[0].mxu0
      %v654 = vpop.f32.mrb[0].mxu0
      %v655 = vadd.f32 0.0, %v654
      %v656 = vpop.f32.mrb[0].mxu0
      %657 = vmatprep.mubr.bf16.mxu0 0
      %658 = vmatmul.mubr.bf16.gmra.mrb[0].mxu0 %v542
      %v659 = vpop.f32.mrb[0].mxu0
      %v660 = vadd.f32 0.0, %v659
      %v661 = vpop.f32.mrb[0].mxu0
      %v662 = vpop.f32.mrb[0].mxu0
      %v663 = vadd.f32 0.0, %v662
      %v664 = vpop.f32.mrb[0].mxu0
      %665 = vmatprep.mubr.bf16.mxu0 0
      %666 = vmatmul.mubr.bf16.gmra.mrb[0].mxu0 %v544
      %v667 = vpop.f32.mrb[0].mxu0
      %v668 = vadd.f32 0.0, %v667
      %v669 = vpop.f32.mrb[0].mxu0
      %v670 = vpop.f32.mrb[0].mxu0
      %v671 = vadd.f32 0.0, %v670
      %v672 = vpop.f32.mrb[0].mxu0
      %673 = vmatprep.mubr.bf16.mxu0 0
      %674 = vmatmul.mubr.bf16.gmra.mrb[0].mxu0 %v546
      %v675 = vpop.f32.mrb[0].mxu0
      %v676 = vadd.f32 0.0, %v675
      %v677 = vpop.f32.mrb[0].mxu0
      %v678 = vpop.f32.mrb[0].mxu0
      %v679 = vadd.f32 0.0, %v678
      %v680 = vpop.f32.mrb[0].mxu0
      %681 = vmatprep.mubr.bf16.mxu0 0
      %682 = vmatmul.mubr.bf16.gmra.mrb[0].mxu0 %v548
      %v683 = vpop.f32.mrb[0].mxu0
      %v684 = vadd.f32 0.0, %v683
      %v685 = vpop.f32.mrb[0].mxu0
      %v686 = vpop.f32.mrb[0].mxu0
      %v687 = vadd.f32 0.0, %v686
      %v688 = vpop.f32.mrb[0].mxu0
      %689 = vmatprep.mubr.bf16.mxu0 0
      %690 = vmatmul.mubr.bf16.gmra.mrb[0].mxu0 %v550
      %v691 = vpop.f32.mrb[0].mxu0
      %v692 = vadd.f32 0.0, %v691
      %v693 = vpop.f32.mrb[0].mxu0
      %v694 = vpop.f32.mrb[0].mxu0
      %v695 = vadd.f32 0.0, %v694
      %v696 = vpop.f32.mrb[0].mxu0
      %697 = vmatprep.mubr.bf16.mxu0 0
      %698 = vmatmul.mubr.bf16.gmra.mrb[0].mxu0 %v552
      %v699 = vpop.f32.mrb[0].mxu0
      %v700 = vadd.f32 0.0, %v699
      %v701 = vpop.f32.mrb[0].mxu0
      %v702 = vpop.f32.mrb[0].mxu0
      %v703 = vadd.f32 0.0, %v702
      %v704 = vpop.f32.mrb[0].mxu0
      %705 = vdwg.mxu0
      %vm706 = vsmask.f32 5376
      %v708 = vshrl.u32 %v448, 16
      %v710 = vrot.slane %v708, 2
      %v711 = vshll.u32 %v448, 16
      %v713 = vrot.slane %v711, 3
      %v714 = vor.u32 %v710, %v713
      %v716 = vshrl.u32 %v481, 16
      %v718 = vrot.slane %v716, 2
      %v719 = vshll.u32 %v481, 16
      %v721 = vrot.slane %v719, 3
      %v722 = vor.u32 %v718, %v721
      %v723 = vsel %vm706, %v714, %v722
      %v725 = vshrl.u32 %v482, 16
      %v727 = vrot.slane %v725, 2
      %v728 = vshll.u32 %v482, 16
      %v730 = vrot.slane %v728, 3
      %v731 = vor.u32 %v727, %v730
      %v732 = vsel %vm706, %v722, %v731
      %v734 = vshrl.u32 %v483, 16
      %v736 = vrot.slane %v734, 2
      %v737 = vshll.u32 %v483, 16
      %v739 = vrot.slane %v737, 3
      %v740 = vor.u32 %v736, %v739
      %v741 = vsel %vm706, %v731, %v740
      %v743 = vshrl.u32 %v484, 16
      %v745 = vrot.slane %v743, 2
      %v746 = vshll.u32 %v484, 16
      %v748 = vrot.slane %v746, 3
      %v749 = vor.u32 %v745, %v748
      %v750 = vsel %vm706, %v740, %v749
      %v752 = vshrl.u32 %v485, 16
      %v754 = vrot.slane %v752, 2
      %v755 = vshll.u32 %v485, 16
      %v757 = vrot.slane %v755, 3
      %v758 = vor.u32 %v754, %v757
      %v759 = vsel %vm706, %v749, %v758
      %v761 = vshrl.u32 %v486, 16
      %v763 = vrot.slane %v761, 2
      %v764 = vshll.u32 %v486, 16
      %v766 = vrot.slane %v764, 3
      %v767 = vor.u32 %v763, %v766
      %v768 = vsel %vm706, %v758, %v767
      %v770 = vshrl.u32 %v487, 16
      %v772 = vrot.slane %v770, 2
      %v773 = vshll.u32 %v487, 16
      %v775 = vrot.slane %v773, 3
      %v776 = vor.u32 %v772, %v775
      %v777 = vsel %vm706, %v767, %v776
      %v779 = vshrl.u32 %v488, 16
      %v781 = vrot.slane %v779, 2
      %v782 = vshll.u32 %v488, 16
      %v784 = vrot.slane %v782, 3
      %v785 = vor.u32 %v781, %v784
      %v786 = vsel %vm706, %v776, %v785
      %v811 = vunpack.c.l.b16 %v502
      %v812 = vunpack.c.l.b16 %v503
      %v813 = vunpack.c.l.b16 %v504
      %v814 = vunpack.c.l.b16 %v505
      %v815 = vunpack.c.l.b16 %v506
      %v816 = vunpack.c.l.b16 %v507
      %v817 = vunpack.c.l.b16 %v508
      %v818 = vunpack.c.l.b16 %v509
      %v819 = vunpack.c.l.b16 %v510
      %v820 = vunpack.c.l.b16 %v511
      %v821 = vunpack.c.l.b16 %v512
      %v822 = vunpack.c.l.b16 %v513
      %v823 = vunpack.c.l.b16 %v514
      %v824 = vunpack.c.l.b16 %v515
      %v825 = vunpack.c.l.b16 %v516
      %v826 = vunpack.c.l.b16 %v517
      %v827 = vpack.c.b16 %v812, %v811
      %v828 = vpack.c.b16 %v814, %v813
      %v829 = vpack.c.b16 %v816, %v815
      %v830 = vpack.c.b16 %v818, %v817
      %v831 = vpack.c.b16 %v820, %v819
      %v832 = vpack.c.b16 %v822, %v821
      %v833 = vpack.c.b16 %v824, %v823
      %v834 = vpack.c.b16 %v826, %v825
      %843 = vmatprep.subr.bf16.mxu0 0
      %844 = vmatpush1.bf16.msra.mxu0 %v827
      %845 = vmatprep.subr.bf16.mxu0 0
      %846 = vmatpush1.bf16.msra.mxu0 %v828
      %847 = vmatprep.subr.bf16.mxu0 0
      %848 = vmatpush1.bf16.msra.mxu0 %v829
      %849 = vmatprep.subr.bf16.mxu0 0
      %850 = vmatpush1.bf16.msra.mxu0 %v830
      %851 = vmatprep.subr.bf16.mxu0 0
      %852 = vmatpush1.bf16.msra.mxu0 %v831
      %853 = vmatprep.subr.bf16.mxu0 0
      %854 = vmatpush1.bf16.msra.mxu0 %v832
      %855 = vmatprep.subr.bf16.mxu0 0
      %856 = vmatpush1.bf16.msra.mxu0 %v833
      %857 = vmatprep.subr.bf16.mxu0 0
      %858 = vmatpush1.bf16.msra.mxu0 %v834
      %859 = vmatprep.subr.bf16.mxu0 0
      %860 = vmatpush1.bf16.msra.mxu0 0
      %861 = vmatprep.subr.bf16.mxu0 0
      %862 = vmatpush1.bf16.msra.mxu0 0
      %863 = vmatprep.subr.bf16.mxu0 0
      %864 = vmatpush1.bf16.msra.mxu0 0
      %865 = vmatprep.subr.bf16.mxu0 0
      %866 = vmatpush1.bf16.msra.mxu0 0
      %867 = vmatprep.subr.bf16.mxu0 0
      %868 = vmatpush1.bf16.msra.mxu0 0
      %869 = vmatprep.subr.bf16.mxu0 0
      %870 = vmatpush1.bf16.msra.mxu0 0
      %871 = vmatprep.subr.bf16.mxu0 0
      %872 = vmatpush1.bf16.msra.mxu0 0
      %873 = vmatprep.subr.bf16.mxu0 0
      %874 = vmatpush1.bf16.msra.mxu0 0
      %875 = vmatprep.mubr.bf16.mxu0 0
      %876 = vmatmul.mubr.bf16.gmra.mrb[0].mxu0 %v723
      %v877 = vpop.f32.mrb[0].mxu0
      %v878 = vadd.f32 %v644, %v877
      %v879 = vpop.f32.mrb[0].mxu0
      %v880 = vpop.f32.mrb[0].mxu0
      %v881 = vadd.f32 %v647, %v880
      %v882 = vpop.f32.mrb[0].mxu0
      %883 = vmatprep.mubr.bf16.mxu0 0
      %884 = vmatmul.mubr.bf16.gmra.mrb[0].mxu0 %v732
      %v885 = vpop.f32.mrb[0].mxu0
      %v886 = vadd.f32 %v652, %v885
      %v887 = vpop.f32.mrb[0].mxu0
      %v888 = vpop.f32.mrb[0].mxu0
      %v889 = vadd.f32 %v655, %v888
      %v890 = vpop.f32.mrb[0].mxu0
      %891 = vmatprep.mubr.bf16.mxu0 0
      %892 = vmatmul.mubr.bf16.gmra.mrb[0].mxu0 %v741
      %v893 = vpop.f32.mrb[0].mxu0
      %v894 = vadd.f32 %v660, %v893
      %v895 = vpop.f32.mrb[0].mxu0
      %v896 = vpop.f32.mrb[0].mxu0
      %v897 = vadd.f32 %v663, %v896
      %v898 = vpop.f32.mrb[0].mxu0
      %899 = vmatprep.mubr.bf16.mxu0 0
      %900 = vmatmul.mubr.bf16.gmra.mrb[0].mxu0 %v750
      %v901 = vpop.f32.mrb[0].mxu0
      %v902 = vadd.f32 %v668, %v901
      %v903 = vpop.f32.mrb[0].mxu0
      %v904 = vpop.f32.mrb[0].mxu0
      %v905 = vadd.f32 %v671, %v904
      %v906 = vpop.f32.mrb[0].mxu0
      %907 = vmatprep.mubr.bf16.mxu0 0
      %908 = vmatmul.mubr.bf16.gmra.mrb[0].mxu0 %v759
      %v909 = vpop.f32.mrb[0].mxu0
      %v910 = vadd.f32 %v676, %v909
      %v911 = vpop.f32.mrb[0].mxu0
      %v912 = vpop.f32.mrb[0].mxu0
      %v913 = vadd.f32 %v679, %v912
      %v914 = vpop.f32.mrb[0].mxu0
      %915 = vmatprep.mubr.bf16.mxu0 0
      %916 = vmatmul.mubr.bf16.gmra.mrb[0].mxu0 %v768
      %v917 = vpop.f32.mrb[0].mxu0
      %v918 = vadd.f32 %v684, %v917
      %v919 = vpop.f32.mrb[0].mxu0
      %v920 = vpop.f32.mrb[0].mxu0
      %v921 = vadd.f32 %v687, %v920
      %v922 = vpop.f32.mrb[0].mxu0
      %923 = vmatprep.mubr.bf16.mxu0 0
      %924 = vmatmul.mubr.bf16.gmra.mrb[0].mxu0 %v777
      %v925 = vpop.f32.mrb[0].mxu0
      %v926 = vadd.f32 %v692, %v925
      %v927 = vpop.f32.mrb[0].mxu0
      %v928 = vpop.f32.mrb[0].mxu0
      %v929 = vadd.f32 %v695, %v928
      %v930 = vpop.f32.mrb[0].mxu0
      %931 = vmatprep.mubr.bf16.mxu0 0
      %932 = vmatmul.mubr.bf16.gmra.mrb[0].mxu0 %v786
      %v933 = vpop.f32.mrb[0].mxu0
      %v934 = vadd.f32 %v700, %v933
      %v935 = vpop.f32.mrb[0].mxu0
      %v936 = vpop.f32.mrb[0].mxu0
      %v937 = vadd.f32 %v703, %v936
      %v938 = vpop.f32.mrb[0].mxu0
      %939 = vdwg.mxu0
      %s940 = scalar_lea.vmem %s3, 128
      %v941 = vld [vmem:[%s940] sm:$0xf]
      %v942 = vld [vmem:[%s940 + $0x4] sm:$0xf]
      %v943 = vld [vmem:[%s940 + $0x8] sm:$0xf]
      %v944 = vld [vmem:[%s940 + $0xc] sm:$0xf]
      %v945 = vld [vmem:[%s940 + $0x10] sm:$0xf]
      %v946 = vld [vmem:[%s940 + $0x14] sm:$0xf]
      %v947 = vld [vmem:[%s940 + $0x18] sm:$0xf]
      %v948 = vld [vmem:[%s940 + $0x1c] sm:$0xf]
      %v949 = vld [vmem:[%s940 + $0x20] sm:$0xf]
      %v950 = vld [vmem:[%s940 + $0x24] sm:$0xf]
      %v951 = vld [vmem:[%s940 + $0x28] sm:$0xf]
      %v952 = vld [vmem:[%s940 + $0x2c] sm:$0xf]
      %v953 = vld [vmem:[%s940 + $0x30] sm:$0xf]
      %v954 = vld [vmem:[%s940 + $0x34] sm:$0xf]
      %v955 = vld [vmem:[%s940 + $0x38] sm:$0xf]
      %v956 = vld [vmem:[%s940 + $0x3c] sm:$0xf]
      %vm957 = vsmask.f32 4352
      %v958 = vrot.slane %v708, 3
      %v959 = vrot.slane %v711, 4
      %v960 = vor.u32 %v958, %v959
      %v961 = vrot.slane %v716, 3
      %v962 = vrot.slane %v719, 4
      %v963 = vor.u32 %v961, %v962
      %v964 = vsel %vm957, %v960, %v963
      %v965 = vrot.slane %v725, 3
      %v966 = vrot.slane %v728, 4
      %v967 = vor.u32 %v965, %v966
      %v968 = vsel %vm957, %v963, %v967
      %v969 = vrot.slane %v734, 3
      %v970 = vrot.slane %v737, 4
      %v971 = vor.u32 %v969, %v970
      %v972 = vsel %vm957, %v967, %v971
      %v973 = vrot.slane %v743, 3
      %v974 = vrot.slane %v746, 4
      %v975 = vor.u32 %v973, %v974
      %v976 = vsel %vm957, %v971, %v975
      %v977 = vrot.slane %v752, 3
      %v978 = vrot.slane %v755, 4
      %v979 = vor.u32 %v977, %v978
      %v980 = vsel %vm957, %v975, %v979
      %v981 = vrot.slane %v761, 3
      %v982 = vrot.slane %v764, 4
      %v983 = vor.u32 %v981, %v982
      %v984 = vsel %vm957, %v979, %v983
      %v985 = vrot.slane %v770, 3
      %v986 = vrot.slane %v773, 4
      %v987 = vor.u32 %v985, %v986
      %v988 = vsel %vm957, %v983, %v987
      %v989 = vrot.slane %v779, 3
      %v990 = vrot.slane %v782, 4
      %v991 = vor.u32 %v989, %v990
      %v992 = vsel %vm957, %v987, %v991
      %v1017 = vunpack.c.l.b16 %v941
      %v1018 = vunpack.c.l.b16 %v942
      %v1019 = vunpack.c.l.b16 %v943
      %v1020 = vunpack.c.l.b16 %v944
      %v1021 = vunpack.c.l.b16 %v945
      %v1022 = vunpack.c.l.b16 %v946
      %v1023 = vunpack.c.l.b16 %v947
      %v1024 = vunpack.c.l.b16 %v948
      %v1025 = vunpack.c.l.b16 %v949
      %v1026 = vunpack.c.l.b16 %v950
      %v1027 = vunpack.c.l.b16 %v951
      %v1028 = vunpack.c.l.b16 %v952
      %v1029 = vunpack.c.l.b16 %v953
      %v1030 = vunpack.c.l.b16 %v954
      %v1031 = vunpack.c.l.b16 %v955
      %v1032 = vunpack.c.l.b16 %v956
      %v1033 = vpack.c.b16 %v1018, %v1017
      %v1034 = vpack.c.b16 %v1020, %v1019
      %v1035 = vpack.c.b16 %v1022, %v1021
      %v1036 = vpack.c.b16 %v1024, %v1023
      %v1037 = vpack.c.b16 %v1026, %v1025
      %v1038 = vpack.c.b16 %v1028, %v1027
      %v1039 = vpack.c.b16 %v1030, %v1029
      %v1040 = vpack.c.b16 %v1032, %v1031
      %1049 = vmatprep.subr.bf16.mxu0 0
      %1050 = vmatpush1.bf16.msra.mxu0 %v1033
      %1051 = vmatprep.subr.bf16.mxu0 0
      %1052 = vmatpush1.bf16.msra.mxu0 %v1034
      %1053 = vmatprep.subr.bf16.mxu0 0
      %1054 = vmatpush1.bf16.msra.mxu0 %v1035
      %1055 = vmatprep.subr.bf16.mxu0 0
      %1056 = vmatpush1.bf16.msra.mxu0 %v1036
      %1057 = vmatprep.subr.bf16.mxu0 0
      %1058 = vmatpush1.bf16.msra.mxu0 %v1037
      %1059 = vmatprep.subr.bf16.mxu0 0
      %1060 = vmatpush1.bf16.msra.mxu0 %v1038
      %1061 = vmatprep.subr.bf16.mxu0 0
      %1062 = vmatpush1.bf16.msra.mxu0 %v1039
      %1063 = vmatprep.subr.bf16.mxu0 0
      %1064 = vmatpush1.bf16.msra.mxu0 %v1040
      %1065 = vmatprep.subr.bf16.mxu0 0
      %1066 = vmatpush1.bf16.msra.mxu0 0
      %1067 = vmatprep.subr.bf16.mxu0 0
      %1068 = vmatpush1.bf16.msra.mxu0 0
      %1069 = vmatprep.subr.bf16.mxu0 0
      %1070 = vmatpush1.bf16.msra.mxu0 0
      %1071 = vmatprep.subr.bf16.mxu0 0
      %1072 = vmatpush1.bf16.msra.mxu0 0
      %1073 = vmatprep.subr.bf16.mxu0 0
      %1074 = vmatpush1.bf16.msra.mxu0 0
      %1075 = vmatprep.subr.bf16.mxu0 0
      %1076 = vmatpush1.bf16.msra.mxu0 0
      %1077 = vmatprep.subr.bf16.mxu0 0
      %1078 = vmatpush1.bf16.msra.mxu0 0
      %1079 = vmatprep.subr.bf16.mxu0 0
      %1080 = vmatpush1.bf16.msra.mxu0 0
      %1081 = vmatprep.mubr.bf16.mxu0 0
      %1082 = vmatmul.mubr.bf16.gmra.mrb[0].mxu0 %v964
      %v1083 = vpop.f32.mrb[0].mxu0
      %v1084 = vadd.f32 0.0, %v1083
      %v1085 = vpop.f32.mrb[0].mxu0
      %v1086 = vpop.f32.mrb[0].mxu0
      %v1087 = vadd.f32 0.0, %v1086
      %v1088 = vpop.f32.mrb[0].mxu0
      %1089 = vmatprep.mubr.bf16.mxu0 0
      %1090 = vmatmul.mubr.bf16.gmra.mrb[0].mxu0 %v968
      %v1091 = vpop.f32.mrb[0].mxu0
      %v1092 = vadd.f32 0.0, %v1091
      %v1093 = vpop.f32.mrb[0].mxu0
      %v1094 = vpop.f32.mrb[0].mxu0
      %v1095 = vadd.f32 0.0, %v1094
      %v1096 = vpop.f32.mrb[0].mxu0
      %1097 = vmatprep.mubr.bf16.mxu0 0
      %1098 = vmatmul.mubr.bf16.gmra.mrb[0].mxu0 %v972
      %v1099 = vpop.f32.mrb[0].mxu0
      %v1100 = vadd.f32 0.0, %v1099
      %v1101 = vpop.f32.mrb[0].mxu0
      %v1102 = vpop.f32.mrb[0].mxu0
      %v1103 = vadd.f32 0.0, %v1102
      %v1104 = vpop.f32.mrb[0].mxu0
      %1105 = vmatprep.mubr.bf16.mxu0 0
      %1106 = vmatmul.mubr.bf16.gmra.mrb[0].mxu0 %v976
      %v1107 = vpop.f32.mrb[0].mxu0
      %v1108 = vadd.f32 0.0, %v1107
      %v1109 = vpop.f32.mrb[0].mxu0
      %v1110 = vpop.f32.mrb[0].mxu0
      %v1111 = vadd.f32 0.0, %v1110
      %v1112 = vpop.f32.mrb[0].mxu0
      %1113 = vmatprep.mubr.bf16.mxu0 0
      %1114 = vmatmul.mubr.bf16.gmra.mrb[0].mxu0 %v980
      %v1115 = vpop.f32.mrb[0].mxu0
      %v1116 = vadd.f32 0.0, %v1115
      %v1117 = vpop.f32.mrb[0].mxu0
      %v1118 = vpop.f32.mrb[0].mxu0
      %v1119 = vadd.f32 0.0, %v1118
      %v1120 = vpop.f32.mrb[0].mxu0
      %1121 = vmatprep.mubr.bf16.mxu0 0
      %1122 = vmatmul.mubr.bf16.gmra.mrb[0].mxu0 %v984
      %v1123 = vpop.f32.mrb[0].mxu0
      %v1124 = vadd.f32 0.0, %v1123
      %v1125 = vpop.f32.mrb[0].mxu0
      %v1126 = vpop.f32.mrb[0].mxu0
      %v1127 = vadd.f32 0.0, %v1126
      %v1128 = vpop.f32.mrb[0].mxu0
      %1129 = vmatprep.mubr.bf16.mxu0 0
      %1130 = vmatmul.mubr.bf16.gmra.mrb[0].mxu0 %v988
      %v1131 = vpop.f32.mrb[0].mxu0
      %v1132 = vadd.f32 0.0, %v1131
      %v1133 = vpop.f32.mrb[0].mxu0
      %v1134 = vpop.f32.mrb[0].mxu0
      %v1135 = vadd.f32 0.0, %v1134
      %v1136 = vpop.f32.mrb[0].mxu0
      %1137 = vmatprep.mubr.bf16.mxu0 0
      %1138 = vmatmul.mubr.bf16.gmra.mrb[0].mxu0 %v992
      %v1139 = vpop.f32.mrb[0].mxu0
      %v1140 = vadd.f32 0.0, %v1139
      %v1141 = vpop.f32.mrb[0].mxu0
      %v1142 = vpop.f32.mrb[0].mxu0
      %v1143 = vadd.f32 0.0, %v1142
      %v1144 = vpop.f32.mrb[0].mxu0
      %1145 = vdwg.mxu0
      %v1146 = vadd.f32 %v878, %v1084
      %v1147 = vadd.f32 %v881, %v1087
      %v1148 = vadd.f32 %v886, %v1092
      %v1149 = vadd.f32 %v889, %v1095
      %v1150 = vadd.f32 %v894, %v1100
      %v1151 = vadd.f32 %v897, %v1103
      %v1152 = vadd.f32 %v902, %v1108
      %v1153 = vadd.f32 %v905, %v1111
      %v1154 = vadd.f32 %v910, %v1116
      %v1155 = vadd.f32 %v913, %v1119
      %v1156 = vadd.f32 %v918, %v1124
      %v1157 = vadd.f32 %v921, %v1127
      %v1158 = vadd.f32 %v926, %v1132
      %v1159 = vadd.f32 %v929, %v1135
      %v1160 = vadd.f32 %v934, %v1140
      %v1161 = vadd.f32 %v937, %v1143
      %s1162 = scalar_lea.vmem %s3, 192
      %v1163 = vld [vmem:[%s1162] sm:$0xf]
      %v1164 = vld [vmem:[%s1162 + $0x4] sm:$0xf]
      %v1165 = vld [vmem:[%s1162 + $0x8] sm:$0xf]
      %v1166 = vld [vmem:[%s1162 + $0xc] sm:$0xf]
      %v1167 = vld [vmem:[%s1162 + $0x10] sm:$0xf]
      %v1168 = vld [vmem:[%s1162 + $0x14] sm:$0xf]
      %v1169 = vld [vmem:[%s1162 + $0x18] sm:$0xf]
      %v1170 = vld [vmem:[%s1162 + $0x1c] sm:$0xf]
      %v1171 = vld [vmem:[%s1162 + $0x20] sm:$0xf]
      %v1172 = vld [vmem:[%s1162 + $0x24] sm:$0xf]
      %v1173 = vld [vmem:[%s1162 + $0x28] sm:$0xf]
      %v1174 = vld [vmem:[%s1162 + $0x2c] sm:$0xf]
      %v1175 = vld [vmem:[%s1162 + $0x30] sm:$0xf]
      %v1176 = vld [vmem:[%s1162 + $0x34] sm:$0xf]
      %v1177 = vld [vmem:[%s1162 + $0x38] sm:$0xf]
      %v1178 = vld [vmem:[%s1162 + $0x3c] sm:$0xf]
      %vm1179 = vsmask.f32 256
      %v1180 = vrot.slane %v708, 7
      %v1181 = vrot.slane %v716, 7
      %v1182 = vor.u32 %v1181, %v719
      %v1183 = vsel %vm1179, %v1180, %v1182
      %v1184 = vrot.slane %v725, 7
      %v1185 = vor.u32 %v1184, %v728
      %v1186 = vsel %vm1179, %v1181, %v1185
      %v1187 = vrot.slane %v734, 7
      %v1188 = vor.u32 %v1187, %v737
      %v1189 = vsel %vm1179, %v1184, %v1188
      %v1190 = vrot.slane %v743, 7
      %v1191 = vor.u32 %v1190, %v746
      %v1192 = vsel %vm1179, %v1187, %v1191
      %v1193 = vrot.slane %v752, 7
      %v1194 = vor.u32 %v1193, %v755
      %v1195 = vsel %vm1179, %v1190, %v1194
      %v1196 = vrot.slane %v761, 7
      %v1197 = vor.u32 %v1196, %v764
      %v1198 = vsel %vm1179, %v1193, %v1197
      %v1199 = vrot.slane %v770, 7
      %v1200 = vor.u32 %v1199, %v773
      %v1201 = vsel %vm1179, %v1196, %v1200
      %v1202 = vrot.slane %v779, 7
      %v1203 = vor.u32 %v1202, %v782
      %v1204 = vsel %vm1179, %v1199, %v1203
      %v1229 = vunpack.c.l.b16 %v1163
      %v1230 = vunpack.c.l.b16 %v1164
      %v1231 = vunpack.c.l.b16 %v1165
      %v1232 = vunpack.c.l.b16 %v1166
      %v1233 = vunpack.c.l.b16 %v1167
      %v1234 = vunpack.c.l.b16 %v1168
      %v1235 = vunpack.c.l.b16 %v1169
      %v1236 = vunpack.c.l.b16 %v1170
      %v1237 = vunpack.c.l.b16 %v1171
      %v1238 = vunpack.c.l.b16 %v1172
      %v1239 = vunpack.c.l.b16 %v1173
      %v1240 = vunpack.c.l.b16 %v1174
      %v1241 = vunpack.c.l.b16 %v1175
      %v1242 = vunpack.c.l.b16 %v1176
      %v1243 = vunpack.c.l.b16 %v1177
      %v1244 = vunpack.c.l.b16 %v1178
      %v1245 = vpack.c.b16 %v1230, %v1229
      %v1246 = vpack.c.b16 %v1232, %v1231
      %v1247 = vpack.c.b16 %v1234, %v1233
      %v1248 = vpack.c.b16 %v1236, %v1235
      %v1249 = vpack.c.b16 %v1238, %v1237
      %v1250 = vpack.c.b16 %v1240, %v1239
      %v1251 = vpack.c.b16 %v1242, %v1241
      %v1252 = vpack.c.b16 %v1244, %v1243
      %1261 = vmatprep.subr.bf16.mxu0 0
      %1262 = vmatpush1.bf16.msra.mxu0 %v1245
      %1263 = vmatprep.subr.bf16.mxu0 0
      %1264 = vmatpush1.bf16.msra.mxu0 %v1246
      %1265 = vmatprep.subr.bf16.mxu0 0
      %1266 = vmatpush1.bf16.msra.mxu0 %v1247
      %1267 = vmatprep.subr.bf16.mxu0 0
      %1268 = vmatpush1.bf16.msra.mxu0 %v1248
      %1269 = vmatprep.subr.bf16.mxu0 0
      %1270 = vmatpush1.bf16.msra.mxu0 %v1249
      %1271 = vmatprep.subr.bf16.mxu0 0
      %1272 = vmatpush1.bf16.msra.mxu0 %v1250
      %1273 = vmatprep.subr.bf16.mxu0 0
      %1274 = vmatpush1.bf16.msra.mxu0 %v1251
      %1275 = vmatprep.subr.bf16.mxu0 0
      %1276 = vmatpush1.bf16.msra.mxu0 %v1252
      %1277 = vmatprep.subr.bf16.mxu0 0
      %1278 = vmatpush1.bf16.msra.mxu0 0
      %1279 = vmatprep.subr.bf16.mxu0 0
      %1280 = vmatpush1.bf16.msra.mxu0 0
      %1281 = vmatprep.subr.bf16.mxu0 0
      %1282 = vmatpush1.bf16.msra.mxu0 0
      %1283 = vmatprep.subr.bf16.mxu0 0
      %1284 = vmatpush1.bf16.msra.mxu0 0
      %1285 = vmatprep.subr.bf16.mxu0 0
      %1286 = vmatpush1.bf16.msra.mxu0 0
      %1287 = vmatprep.subr.bf16.mxu0 0
      %1288 = vmatpush1.bf16.msra.mxu0 0
      %1289 = vmatprep.subr.bf16.mxu0 0
      %1290 = vmatpush1.bf16.msra.mxu0 0
      %1291 = vmatprep.subr.bf16.mxu0 0
      %1292 = vmatpush1.bf16.msra.mxu0 0
      %1293 = vmatprep.mubr.bf16.mxu0 0
      %1294 = vmatmul.mubr.bf16.gmra.mrb[0].mxu0 %v1183
      %v1295 = vpop.f32.mrb[0].mxu0
      %v1296 = vadd.f32 0.0, %v1295
      %v1297 = vpop.f32.mrb[0].mxu0
      %v1298 = vpop.f32.mrb[0].mxu0
      %v1299 = vadd.f32 0.0, %v1298
      %v1300 = vpop.f32.mrb[0].mxu0
      %1301 = vmatprep.mubr.bf16.mxu0 0
      %1302 = vmatmul.mubr.bf16.gmra.mrb[0].mxu0 %v1186
      %v1303 = vpop.f32.mrb[0].mxu0
      %v1304 = vadd.f32 0.0, %v1303
      %v1305 = vpop.f32.mrb[0].mxu0
      %v1306 = vpop.f32.mrb[0].mxu0
      %v1307 = vadd.f32 0.0, %v1306
      %v1308 = vpop.f32.mrb[0].mxu0
      %1309 = vmatprep.mubr.bf16.mxu0 0
      %1310 = vmatmul.mubr.bf16.gmra.mrb[0].mxu0 %v1189
      %v1311 = vpop.f32.mrb[0].mxu0
      %v1312 = vadd.f32 0.0, %v1311
      %v1313 = vpop.f32.mrb[0].mxu0
      %v1314 = vpop.f32.mrb[0].mxu0
      %v1315 = vadd.f32 0.0, %v1314
      %v1316 = vpop.f32.mrb[0].mxu0
      %1317 = vmatprep.mubr.bf16.mxu0 0
      %1318 = vmatmul.mubr.bf16.gmra.mrb[0].mxu0 %v1192
      %v1319 = vpop.f32.mrb[0].mxu0
      %v1320 = vadd.f32 0.0, %v1319
      %v1321 = vpop.f32.mrb[0].mxu0
      %v1322 = vpop.f32.mrb[0].mxu0
      %v1323 = vadd.f32 0.0, %v1322
      %v1324 = vpop.f32.mrb[0].mxu0
      %1325 = vmatprep.mubr.bf16.mxu0 0
      %1326 = vmatmul.mubr.bf16.gmra.mrb[0].mxu0 %v1195
      %v1327 = vpop.f32.mrb[0].mxu0
      %v1328 = vadd.f32 0.0, %v1327
      %v1329 = vpop.f32.mrb[0].mxu0
      %v1330 = vpop.f32.mrb[0].mxu0
      %v1331 = vadd.f32 0.0, %v1330
      %v1332 = vpop.f32.mrb[0].mxu0
      %1333 = vmatprep.mubr.bf16.mxu0 0
      %1334 = vmatmul.mubr.bf16.gmra.mrb[0].mxu0 %v1198
      %v1335 = vpop.f32.mrb[0].mxu0
      %v1336 = vadd.f32 0.0, %v1335
      %v1337 = vpop.f32.mrb[0].mxu0
      %v1338 = vpop.f32.mrb[0].mxu0
      %v1339 = vadd.f32 0.0, %v1338
      %v1340 = vpop.f32.mrb[0].mxu0
      %1341 = vmatprep.mubr.bf16.mxu0 0
      %1342 = vmatmul.mubr.bf16.gmra.mrb[0].mxu0 %v1201
      %v1343 = vpop.f32.mrb[0].mxu0
      %v1344 = vadd.f32 0.0, %v1343
      %v1345 = vpop.f32.mrb[0].mxu0
      %v1346 = vpop.f32.mrb[0].mxu0
      %v1347 = vadd.f32 0.0, %v1346
      %v1348 = vpop.f32.mrb[0].mxu0
      %1349 = vmatprep.mubr.bf16.mxu0 0
      %1350 = vmatmul.mubr.bf16.gmra.mrb[0].mxu0 %v1204
      %v1351 = vpop.f32.mrb[0].mxu0
      %v1352 = vadd.f32 0.0, %v1351
      %v1353 = vpop.f32.mrb[0].mxu0
      %v1354 = vpop.f32.mrb[0].mxu0
      %v1355 = vadd.f32 0.0, %v1354
      %v1356 = vpop.f32.mrb[0].mxu0
      %1357 = vdwg.mxu0
      %v1358 = vadd.f32 %v1146, %v1296
      %v1359 = vadd.f32 %v1147, %v1299
      %v1360 = vadd.f32 %v1148, %v1304
      %v1361 = vadd.f32 %v1149, %v1307
      %v1362 = vadd.f32 %v1150, %v1312
      %v1363 = vadd.f32 %v1151, %v1315
      %v1364 = vadd.f32 %v1152, %v1320
      %v1365 = vadd.f32 %v1153, %v1323
      %v1366 = vadd.f32 %v1154, %v1328
      %v1367 = vadd.f32 %v1155, %v1331
      %v1368 = vadd.f32 %v1156, %v1336
      %v1369 = vadd.f32 %v1157, %v1339
      %v1370 = vadd.f32 %v1158, %v1344
      %v1371 = vadd.f32 %v1159, %v1347
      %v1372 = vadd.f32 %v1160, %v1352
      %v1373 = vadd.f32 %v1161, %v1355
      %s1374 = scalar_lea.vmem %s3, 256
      %v1375 = vld [vmem:[%s1374] sm:$0xf]
      %v1376 = vld [vmem:[%s1374 + $0x4] sm:$0xf]
      %v1377 = vld [vmem:[%s1374 + $0x8] sm:$0xf]
      %v1378 = vld [vmem:[%s1374 + $0xc] sm:$0xf]
      %v1379 = vld [vmem:[%s1374 + $0x10] sm:$0xf]
      %v1380 = vld [vmem:[%s1374 + $0x14] sm:$0xf]
      %v1381 = vld [vmem:[%s1374 + $0x18] sm:$0xf]
      %v1382 = vld [vmem:[%s1374 + $0x1c] sm:$0xf]
      %v1383 = vld [vmem:[%s1374 + $0x20] sm:$0xf]
      %v1384 = vld [vmem:[%s1374 + $0x24] sm:$0xf]
      %v1385 = vld [vmem:[%s1374 + $0x28] sm:$0xf]
      %v1386 = vld [vmem:[%s1374 + $0x2c] sm:$0xf]
      %v1387 = vld [vmem:[%s1374 + $0x30] sm:$0xf]
      %v1388 = vld [vmem:[%s1374 + $0x34] sm:$0xf]
      %v1389 = vld [vmem:[%s1374 + $0x38] sm:$0xf]
      %v1390 = vld [vmem:[%s1374 + $0x3c] sm:$0xf]
      %v1407 = vunpack.c.l.b16 %v1375
      %v1408 = vunpack.c.l.b16 %v1376
      %v1409 = vunpack.c.l.b16 %v1377
      %v1410 = vunpack.c.l.b16 %v1378
      %v1411 = vunpack.c.l.b16 %v1379
      %v1412 = vunpack.c.l.b16 %v1380
      %v1413 = vunpack.c.l.b16 %v1381
      %v1414 = vunpack.c.l.b16 %v1382
      %v1415 = vunpack.c.l.b16 %v1383
      %v1416 = vunpack.c.l.b16 %v1384
      %v1417 = vunpack.c.l.b16 %v1385
      %v1418 = vunpack.c.l.b16 %v1386
      %v1419 = vunpack.c.l.b16 %v1387
      %v1420 = vunpack.c.l.b16 %v1388
      %v1421 = vunpack.c.l.b16 %v1389
      %v1422 = vunpack.c.l.b16 %v1390
      %v1423 = vpack.c.b16 %v1408, %v1407
      %v1424 = vpack.c.b16 %v1410, %v1409
      %v1425 = vpack.c.b16 %v1412, %v1411
      %v1426 = vpack.c.b16 %v1414, %v1413
      %v1427 = vpack.c.b16 %v1416, %v1415
      %v1428 = vpack.c.b16 %v1418, %v1417
      %v1429 = vpack.c.b16 %v1420, %v1419
      %v1430 = vpack.c.b16 %v1422, %v1421
      %1439 = vmatprep.subr.bf16.mxu0 0
      %1440 = vmatpush1.bf16.msra.mxu0 %v1423
      %1441 = vmatprep.subr.bf16.mxu0 0
      %1442 = vmatpush1.bf16.msra.mxu0 %v1424
      %1443 = vmatprep.subr.bf16.mxu0 0
      %1444 = vmatpush1.bf16.msra.mxu0 %v1425
      %1445 = vmatprep.subr.bf16.mxu0 0
      %1446 = vmatpush1.bf16.msra.mxu0 %v1426
      %1447 = vmatprep.subr.bf16.mxu0 0
      %1448 = vmatpush1.bf16.msra.mxu0 %v1427
      %1449 = vmatprep.subr.bf16.mxu0 0
      %1450 = vmatpush1.bf16.msra.mxu0 %v1428
      %1451 = vmatprep.subr.bf16.mxu0 0
      %1452 = vmatpush1.bf16.msra.mxu0 %v1429
      %1453 = vmatprep.subr.bf16.mxu0 0
      %1454 = vmatpush1.bf16.msra.mxu0 %v1430
      %1455 = vmatprep.subr.bf16.mxu0 0
      %1456 = vmatpush1.bf16.msra.mxu0 0
      %1457 = vmatprep.subr.bf16.mxu0 0
      %1458 = vmatpush1.bf16.msra.mxu0 0
      %1459 = vmatprep.subr.bf16.mxu0 0
      %1460 = vmatpush1.bf16.msra.mxu0 0
      %1461 = vmatprep.subr.bf16.mxu0 0
      %1462 = vmatpush1.bf16.msra.mxu0 0
      %1463 = vmatprep.subr.bf16.mxu0 0
      %1464 = vmatpush1.bf16.msra.mxu0 0
      %1465 = vmatprep.subr.bf16.mxu0 0
      %1466 = vmatpush1.bf16.msra.mxu0 0
      %1467 = vmatprep.subr.bf16.mxu0 0
      %1468 = vmatpush1.bf16.msra.mxu0 0
      %1469 = vmatprep.subr.bf16.mxu0 0
      %1470 = vmatpush1.bf16.msra.mxu0 0
      %1471 = vmatprep.mubr.bf16.mxu0 0
      %1472 = vmatmul.mubr.bf16.gmra.mrb[0].mxu0 %v481
      %v1473 = vpop.f32.mrb[0].mxu0
      %v1474 = vadd.f32 0.0, %v1473
      %v1475 = vpop.f32.mrb[0].mxu0
      %v1476 = vpop.f32.mrb[0].mxu0
      %v1477 = vadd.f32 0.0, %v1476
      %v1478 = vpop.f32.mrb[0].mxu0
      %1479 = vmatprep.mubr.bf16.mxu0 0
      %1480 = vmatmul.mubr.bf16.gmra.mrb[0].mxu0 %v482
      %v1481 = vpop.f32.mrb[0].mxu0
      %v1482 = vadd.f32 0.0, %v1481
      %v1483 = vpop.f32.mrb[0].mxu0
      %v1484 = vpop.f32.mrb[0].mxu0
      %v1485 = vadd.f32 0.0, %v1484
      %v1486 = vpop.f32.mrb[0].mxu0
      %1487 = vmatprep.mubr.bf16.mxu0 0
      %1488 = vmatmul.mubr.bf16.gmra.mrb[0].mxu0 %v483
      %v1489 = vpop.f32.mrb[0].mxu0
      %v1490 = vadd.f32 0.0, %v1489
      %v1491 = vpop.f32.mrb[0].mxu0
      %v1492 = vpop.f32.mrb[0].mxu0
      %v1493 = vadd.f32 0.0, %v1492
      %v1494 = vpop.f32.mrb[0].mxu0
      %1495 = vmatprep.mubr.bf16.mxu0 0
      %1496 = vmatmul.mubr.bf16.gmra.mrb[0].mxu0 %v484
      %v1497 = vpop.f32.mrb[0].mxu0
      %v1498 = vadd.f32 0.0, %v1497
      %v1499 = vpop.f32.mrb[0].mxu0
      %v1500 = vpop.f32.mrb[0].mxu0
      %v1501 = vadd.f32 0.0, %v1500
      %v1502 = vpop.f32.mrb[0].mxu0
      %1503 = vmatprep.mubr.bf16.mxu0 0
      %1504 = vmatmul.mubr.bf16.gmra.mrb[0].mxu0 %v485
      %v1505 = vpop.f32.mrb[0].mxu0
      %v1506 = vadd.f32 0.0, %v1505
      %v1507 = vpop.f32.mrb[0].mxu0
      %v1508 = vpop.f32.mrb[0].mxu0
      %v1509 = vadd.f32 0.0, %v1508
      %v1510 = vpop.f32.mrb[0].mxu0
      %1511 = vmatprep.mubr.bf16.mxu0 0
      %1512 = vmatmul.mubr.bf16.gmra.mrb[0].mxu0 %v486
      %v1513 = vpop.f32.mrb[0].mxu0
      %v1514 = vadd.f32 0.0, %v1513
      %v1515 = vpop.f32.mrb[0].mxu0
      %v1516 = vpop.f32.mrb[0].mxu0
      %v1517 = vadd.f32 0.0, %v1516
      %v1518 = vpop.f32.mrb[0].mxu0
      %1519 = vmatprep.mubr.bf16.mxu0 0
      %1520 = vmatmul.mubr.bf16.gmra.mrb[0].mxu0 %v487
      %v1521 = vpop.f32.mrb[0].mxu0
      %v1522 = vadd.f32 0.0, %v1521
      %v1523 = vpop.f32.mrb[0].mxu0
      %v1524 = vpop.f32.mrb[0].mxu0
      %v1525 = vadd.f32 0.0, %v1524
      %v1526 = vpop.f32.mrb[0].mxu0
      %1527 = vmatprep.mubr.bf16.mxu0 0
      %1528 = vmatmul.mubr.bf16.gmra.mrb[0].mxu0 %v488
      %v1529 = vpop.f32.mrb[0].mxu0
      %v1530 = vadd.f32 0.0, %v1529
      %v1531 = vpop.f32.mrb[0].mxu0
      %v1532 = vpop.f32.mrb[0].mxu0
      %v1533 = vadd.f32 0.0, %v1532
      %v1534 = vpop.f32.mrb[0].mxu0
      %1535 = vdwg.mxu0
      %v1536 = vadd.f32 %v1358, %v1474
      %v1537 = vadd.f32 %v1359, %v1477
      %v1538 = vadd.f32 %v1360, %v1482
      %v1539 = vadd.f32 %v1361, %v1485
      %v1540 = vadd.f32 %v1362, %v1490
      %v1541 = vadd.f32 %v1363, %v1493
      %v1542 = vadd.f32 %v1364, %v1498
      %v1543 = vadd.f32 %v1365, %v1501
      %v1544 = vadd.f32 %v1366, %v1506
      %v1545 = vadd.f32 %v1367, %v1509
      %v1546 = vadd.f32 %v1368, %v1514
      %v1547 = vadd.f32 %v1369, %v1517
      %v1548 = vadd.f32 %v1370, %v1522
      %v1549 = vadd.f32 %v1371, %v1525
      %v1550 = vadd.f32 %v1372, %v1530
      %v1551 = vadd.f32 %v1373, %v1533
      %s1552 = scalar_lea.vmem %s3, 320
      %v1553 = vld [vmem:[%s1552] sm:$0xf]
      %v1554 = vld [vmem:[%s1552 + $0x4] sm:$0xf]
      %v1555 = vld [vmem:[%s1552 + $0x8] sm:$0xf]
      %v1556 = vld [vmem:[%s1552 + $0xc] sm:$0xf]
      %v1557 = vld [vmem:[%s1552 + $0x10] sm:$0xf]
      %v1558 = vld [vmem:[%s1552 + $0x14] sm:$0xf]
      %v1559 = vld [vmem:[%s1552 + $0x18] sm:$0xf]
      %v1560 = vld [vmem:[%s1552 + $0x1c] sm:$0xf]
      %v1561 = vld [vmem:[%s1552 + $0x20] sm:$0xf]
      %v1562 = vld [vmem:[%s1552 + $0x24] sm:$0xf]
      %v1563 = vld [vmem:[%s1552 + $0x28] sm:$0xf]
      %v1564 = vld [vmem:[%s1552 + $0x2c] sm:$0xf]
      %v1565 = vld [vmem:[%s1552 + $0x30] sm:$0xf]
      %v1566 = vld [vmem:[%s1552 + $0x34] sm:$0xf]
      %v1567 = vld [vmem:[%s1552 + $0x38] sm:$0xf]
      %v1568 = vld [vmem:[%s1552 + $0x3c] sm:$0xf]
      %vm1569 = vsmask.f32 7424
      %v1570 = vrot.slane %v719, 1
      %v1571 = vor.u32 %v716, %v1570
      %v1572 = vrot.slane %v728, 1
      %v1573 = vsel %vm1569, %v1571, %v1572
      %v1574 = vor.u32 %v725, %v1572
      %v1575 = vrot.slane %v737, 1
      %v1576 = vsel %vm1569, %v1574, %v1575
      %v1577 = vor.u32 %v734, %v1575
      %v1578 = vrot.slane %v746, 1
      %v1579 = vsel %vm1569, %v1577, %v1578
      %v1580 = vor.u32 %v743, %v1578
      %v1581 = vrot.slane %v755, 1
      %v1582 = vsel %vm1569, %v1580, %v1581
      %v1583 = vor.u32 %v752, %v1581
      %v1584 = vrot.slane %v764, 1
      %v1585 = vsel %vm1569, %v1583, %v1584
      %v1586 = vor.u32 %v761, %v1584
      %v1587 = vrot.slane %v773, 1
      %v1588 = vsel %vm1569, %v1586, %v1587
      %v1589 = vor.u32 %v770, %v1587
      %v1590 = vrot.slane %v782, 1
      %v1591 = vsel %vm1569, %v1589, %v1590
      %v1592 = vor.u32 %v779, %v1590
      %v1594 = vshll.u32 %v501, 16
      %v1596 = vrot.slane %v1594, 1
      %v1597 = vsel %vm1569, %v1592, %v1596
      %v1622 = vunpack.c.l.b16 %v1553
      %v1623 = vunpack.c.l.b16 %v1554
      %v1624 = vunpack.c.l.b16 %v1555
      %v1625 = vunpack.c.l.b16 %v1556
      %v1626 = vunpack.c.l.b16 %v1557
      %v1627 = vunpack.c.l.b16 %v1558
      %v1628 = vunpack.c.l.b16 %v1559
      %v1629 = vunpack.c.l.b16 %v1560
      %v1630 = vunpack.c.l.b16 %v1561
      %v1631 = vunpack.c.l.b16 %v1562
      %v1632 = vunpack.c.l.b16 %v1563
      %v1633 = vunpack.c.l.b16 %v1564
      %v1634 = vunpack.c.l.b16 %v1565
      %v1635 = vunpack.c.l.b16 %v1566
      %v1636 = vunpack.c.l.b16 %v1567
      %v1637 = vunpack.c.l.b16 %v1568
      %v1638 = vpack.c.b16 %v1623, %v1622
      %v1639 = vpack.c.b16 %v1625, %v1624
      %v1640 = vpack.c.b16 %v1627, %v1626
      %v1641 = vpack.c.b16 %v1629, %v1628
      %v1642 = vpack.c.b16 %v1631, %v1630
      %v1643 = vpack.c.b16 %v1633, %v1632
      %v1644 = vpack.c.b16 %v1635, %v1634
      %v1645 = vpack.c.b16 %v1637, %v1636
      %1654 = vmatprep.subr.bf16.mxu0 0
      %1655 = vmatpush1.bf16.msra.mxu0 %v1638
      %1656 = vmatprep.subr.bf16.mxu0 0
      %1657 = vmatpush1.bf16.msra.mxu0 %v1639
      %1658 = vmatprep.subr.bf16.mxu0 0
      %1659 = vmatpush1.bf16.msra.mxu0 %v1640
      %1660 = vmatprep.subr.bf16.mxu0 0
      %1661 = vmatpush1.bf16.msra.mxu0 %v1641
      %1662 = vmatprep.subr.bf16.mxu0 0
      %1663 = vmatpush1.bf16.msra.mxu0 %v1642
      %1664 = vmatprep.subr.bf16.mxu0 0
      %1665 = vmatpush1.bf16.msra.mxu0 %v1643
      %1666 = vmatprep.subr.bf16.mxu0 0
      %1667 = vmatpush1.bf16.msra.mxu0 %v1644
      %1668 = vmatprep.subr.bf16.mxu0 0
      %1669 = vmatpush1.bf16.msra.mxu0 %v1645
      %1670 = vmatprep.subr.bf16.mxu0 0
      %1671 = vmatpush1.bf16.msra.mxu0 0
      %1672 = vmatprep.subr.bf16.mxu0 0
      %1673 = vmatpush1.bf16.msra.mxu0 0
      %1674 = vmatprep.subr.bf16.mxu0 0
      %1675 = vmatpush1.bf16.msra.mxu0 0
      %1676 = vmatprep.subr.bf16.mxu0 0
      %1677 = vmatpush1.bf16.msra.mxu0 0
      %1678 = vmatprep.subr.bf16.mxu0 0
      %1679 = vmatpush1.bf16.msra.mxu0 0
      %1680 = vmatprep.subr.bf16.mxu0 0
      %1681 = vmatpush1.bf16.msra.mxu0 0
      %1682 = vmatprep.subr.bf16.mxu0 0
      %1683 = vmatpush1.bf16.msra.mxu0 0
      %1684 = vmatprep.subr.bf16.mxu0 0
      %1685 = vmatpush1.bf16.msra.mxu0 0
      %1686 = vmatprep.mubr.bf16.mxu0 0
      %1687 = vmatmul.mubr.bf16.gmra.mrb[0].mxu0 %v1573
      %v1688 = vpop.f32.mrb[0].mxu0
      %v1689 = vadd.f32 0.0, %v1688
      %v1690 = vpop.f32.mrb[0].mxu0
      %v1691 = vpop.f32.mrb[0].mxu0
      %v1692 = vadd.f32 0.0, %v1691
      %v1693 = vpop.f32.mrb[0].mxu0
      %1694 = vmatprep.mubr.bf16.mxu0 0
      %1695 = vmatmul.mubr.bf16.gmra.mrb[0].mxu0 %v1576
      %v1696 = vpop.f32.mrb[0].mxu0
      %v1697 = vadd.f32 0.0, %v1696
      %v1698 = vpop.f32.mrb[0].mxu0
      %v1699 = vpop.f32.mrb[0].mxu0
      %v1700 = vadd.f32 0.0, %v1699
      %v1701 = vpop.f32.mrb[0].mxu0
      %1702 = vmatprep.mubr.bf16.mxu0 0
      %1703 = vmatmul.mubr.bf16.gmra.mrb[0].mxu0 %v1579
      %v1704 = vpop.f32.mrb[0].mxu0
      %v1705 = vadd.f32 0.0, %v1704
      %v1706 = vpop.f32.mrb[0].mxu0
      %v1707 = vpop.f32.mrb[0].mxu0
      %v1708 = vadd.f32 0.0, %v1707
      %v1709 = vpop.f32.mrb[0].mxu0
      %1710 = vmatprep.mubr.bf16.mxu0 0
      %1711 = vmatmul.mubr.bf16.gmra.mrb[0].mxu0 %v1582
      %v1712 = vpop.f32.mrb[0].mxu0
      %v1713 = vadd.f32 0.0, %v1712
      %v1714 = vpop.f32.mrb[0].mxu0
      %v1715 = vpop.f32.mrb[0].mxu0
      %v1716 = vadd.f32 0.0, %v1715
      %v1717 = vpop.f32.mrb[0].mxu0
      %1718 = vmatprep.mubr.bf16.mxu0 0
      %1719 = vmatmul.mubr.bf16.gmra.mrb[0].mxu0 %v1585
      %v1720 = vpop.f32.mrb[0].mxu0
      %v1721 = vadd.f32 0.0, %v1720
      %v1722 = vpop.f32.mrb[0].mxu0
      %v1723 = vpop.f32.mrb[0].mxu0
      %v1724 = vadd.f32 0.0, %v1723
      %v1725 = vpop.f32.mrb[0].mxu0
      %1726 = vmatprep.mubr.bf16.mxu0 0
      %1727 = vmatmul.mubr.bf16.gmra.mrb[0].mxu0 %v1588
      %v1728 = vpop.f32.mrb[0].mxu0
      %v1729 = vadd.f32 0.0, %v1728
      %v1730 = vpop.f32.mrb[0].mxu0
      %v1731 = vpop.f32.mrb[0].mxu0
      %v1732 = vadd.f32 0.0, %v1731
      %v1733 = vpop.f32.mrb[0].mxu0
      %1734 = vmatprep.mubr.bf16.mxu0 0
      %1735 = vmatmul.mubr.bf16.gmra.mrb[0].mxu0 %v1591
      %v1736 = vpop.f32.mrb[0].mxu0
      %v1737 = vadd.f32 0.0, %v1736
      %v1738 = vpop.f32.mrb[0].mxu0
      %v1739 = vpop.f32.mrb[0].mxu0
      %v1740 = vadd.f32 0.0, %v1739
      %v1741 = vpop.f32.mrb[0].mxu0
      %1742 = vmatprep.mubr.bf16.mxu0 0
      %1743 = vmatmul.mubr.bf16.gmra.mrb[0].mxu0 %v1597
      %v1744 = vpop.f32.mrb[0].mxu0
      %v1745 = vadd.f32 0.0, %v1744
      %v1746 = vpop.f32.mrb[0].mxu0
      %v1747 = vpop.f32.mrb[0].mxu0
      %v1748 = vadd.f32 0.0, %v1747
      %v1749 = vpop.f32.mrb[0].mxu0
      %1750 = vdwg.mxu0
      %v1751 = vadd.f32 %v1536, %v1689
      %v1752 = vadd.f32 %v1537, %v1692
      %v1753 = vadd.f32 %v1538, %v1697
      %v1754 = vadd.f32 %v1539, %v1700
      %v1755 = vadd.f32 %v1540, %v1705
      %v1756 = vadd.f32 %v1541, %v1708
      %v1757 = vadd.f32 %v1542, %v1713
      %v1758 = vadd.f32 %v1543, %v1716
      %v1759 = vadd.f32 %v1544, %v1721
      %v1760 = vadd.f32 %v1545, %v1724
      %v1761 = vadd.f32 %v1546, %v1729
      %v1762 = vadd.f32 %v1547, %v1732
      %v1763 = vadd.f32 %v1548, %v1737
      %v1764 = vadd.f32 %v1549, %v1740
      %v1765 = vadd.f32 %v1550, %v1745
      %v1766 = vadd.f32 %v1551, %v1748
      %s1767 = scalar_lea.vmem %s3, 384
      %v1768 = vld [vmem:[%s1767] sm:$0xf]
      %v1769 = vld [vmem:[%s1767 + $0x4] sm:$0xf]
      %v1770 = vld [vmem:[%s1767 + $0x8] sm:$0xf]
      %v1771 = vld [vmem:[%s1767 + $0xc] sm:$0xf]
      %v1772 = vld [vmem:[%s1767 + $0x10] sm:$0xf]
      %v1773 = vld [vmem:[%s1767 + $0x14] sm:$0xf]
      %v1774 = vld [vmem:[%s1767 + $0x18] sm:$0xf]
      %v1775 = vld [vmem:[%s1767 + $0x1c] sm:$0xf]
      %v1776 = vld [vmem:[%s1767 + $0x20] sm:$0xf]
      %v1777 = vld [vmem:[%s1767 + $0x24] sm:$0xf]
      %v1778 = vld [vmem:[%s1767 + $0x28] sm:$0xf]
      %v1779 = vld [vmem:[%s1767 + $0x2c] sm:$0xf]
      %v1780 = vld [vmem:[%s1767 + $0x30] sm:$0xf]
      %v1781 = vld [vmem:[%s1767 + $0x34] sm:$0xf]
      %v1782 = vld [vmem:[%s1767 + $0x38] sm:$0xf]
      %v1783 = vld [vmem:[%s1767 + $0x3c] sm:$0xf]
      %vm1784 = vsmask.f32 3328
      %v1785 = vrot.slane %v716, 4
      %v1786 = vrot.slane %v719, 5
      %v1787 = vor.u32 %v1785, %v1786
      %v1788 = vrot.slane %v725, 4
      %v1789 = vrot.slane %v728, 5
      %v1790 = vor.u32 %v1788, %v1789
      %v1791 = vsel %vm1784, %v1787, %v1790
      %v1792 = vrot.slane %v734, 4
      %v1793 = vrot.slane %v737, 5
      %v1794 = vor.u32 %v1792, %v1793
      %v1795 = vsel %vm1784, %v1790, %v1794
      %v1796 = vrot.slane %v743, 4
      %v1797 = vrot.slane %v746, 5
      %v1798 = vor.u32 %v1796, %v1797
      %v1799 = vsel %vm1784, %v1794, %v1798
      %v1800 = vrot.slane %v752, 4
      %v1801 = vrot.slane %v755, 5
      %v1802 = vor.u32 %v1800, %v1801
      %v1803 = vsel %vm1784, %v1798, %v1802
      %v1804 = vrot.slane %v761, 4
      %v1805 = vrot.slane %v764, 5
      %v1806 = vor.u32 %v1804, %v1805
      %v1807 = vsel %vm1784, %v1802, %v1806
      %v1808 = vrot.slane %v770, 4
      %v1809 = vrot.slane %v773, 5
      %v1810 = vor.u32 %v1808, %v1809
      %v1811 = vsel %vm1784, %v1806, %v1810
      %v1812 = vrot.slane %v779, 4
      %v1813 = vrot.slane %v782, 5
      %v1814 = vor.u32 %v1812, %v1813
      %v1815 = vsel %vm1784, %v1810, %v1814
      %v1816 = vshrl.u32 %v501, 16
      %v1818 = vrot.slane %v1816, 4
      %v1819 = vrot.slane %v1594, 5
      %v1820 = vor.u32 %v1818, %v1819
      %v1821 = vsel %vm1784, %v1814, %v1820
      %v1846 = vunpack.c.l.b16 %v1768
      %v1847 = vunpack.c.l.b16 %v1769
      %v1848 = vunpack.c.l.b16 %v1770
      %v1849 = vunpack.c.l.b16 %v1771
      %v1850 = vunpack.c.l.b16 %v1772
      %v1851 = vunpack.c.l.b16 %v1773
      %v1852 = vunpack.c.l.b16 %v1774
      %v1853 = vunpack.c.l.b16 %v1775
      %v1854 = vunpack.c.l.b16 %v1776
      %v1855 = vunpack.c.l.b16 %v1777
      %v1856 = vunpack.c.l.b16 %v1778
      %v1857 = vunpack.c.l.b16 %v1779
      %v1858 = vunpack.c.l.b16 %v1780
      %v1859 = vunpack.c.l.b16 %v1781
      %v1860 = vunpack.c.l.b16 %v1782
      %v1861 = vunpack.c.l.b16 %v1783
      %v1862 = vpack.c.b16 %v1847, %v1846
      %v1863 = vpack.c.b16 %v1849, %v1848
      %v1864 = vpack.c.b16 %v1851, %v1850
      %v1865 = vpack.c.b16 %v1853, %v1852
      %v1866 = vpack.c.b16 %v1855, %v1854
      %v1867 = vpack.c.b16 %v1857, %v1856
      %v1868 = vpack.c.b16 %v1859, %v1858
      %v1869 = vpack.c.b16 %v1861, %v1860
      %1878 = vmatprep.subr.bf16.mxu0 0
      %1879 = vmatpush1.bf16.msra.mxu0 %v1862
      %1880 = vmatprep.subr.bf16.mxu0 0
      %1881 = vmatpush1.bf16.msra.mxu0 %v1863
      %1882 = vmatprep.subr.bf16.mxu0 0
      %1883 = vmatpush1.bf16.msra.mxu0 %v1864
      %1884 = vmatprep.subr.bf16.mxu0 0
      %1885 = vmatpush1.bf16.msra.mxu0 %v1865
      %1886 = vmatprep.subr.bf16.mxu0 0
      %1887 = vmatpush1.bf16.msra.mxu0 %v1866
      %1888 = vmatprep.subr.bf16.mxu0 0
      %1889 = vmatpush1.bf16.msra.mxu0 %v1867
      %1890 = vmatprep.subr.bf16.mxu0 0
      %1891 = vmatpush1.bf16.msra.mxu0 %v1868
      %1892 = vmatprep.subr.bf16.mxu0 0
      %1893 = vmatpush1.bf16.msra.mxu0 %v1869
      %1894 = vmatprep.subr.bf16.mxu0 0
      %1895 = vmatpush1.bf16.msra.mxu0 0
      %1896 = vmatprep.subr.bf16.mxu0 0
      %1897 = vmatpush1.bf16.msra.mxu0 0
      %1898 = vmatprep.subr.bf16.mxu0 0
      %1899 = vmatpush1.bf16.msra.mxu0 0
      %1900 = vmatprep.subr.bf16.mxu0 0
      %1901 = vmatpush1.bf16.msra.mxu0 0
      %1902 = vmatprep.subr.bf16.mxu0 0
      %1903 = vmatpush1.bf16.msra.mxu0 0
      %1904 = vmatprep.subr.bf16.mxu0 0
      %1905 = vmatpush1.bf16.msra.mxu0 0
      %1906 = vmatprep.subr.bf16.mxu0 0
      %1907 = vmatpush1.bf16.msra.mxu0 0
      %1908 = vmatprep.subr.bf16.mxu0 0
      %1909 = vmatpush1.bf16.msra.mxu0 0
      %1910 = vmatprep.mubr.bf16.mxu0 0
      %1911 = vmatmul.mubr.bf16.gmra.mrb[0].mxu0 %v1791
      %v1912 = vpop.f32.mrb[0].mxu0
      %v1913 = vadd.f32 0.0, %v1912
      %v1914 = vpop.f32.mrb[0].mxu0
      %v1915 = vpop.f32.mrb[0].mxu0
      %v1916 = vadd.f32 0.0, %v1915
      %v1917 = vpop.f32.mrb[0].mxu0
      %1918 = vmatprep.mubr.bf16.mxu0 0
      %1919 = vmatmul.mubr.bf16.gmra.mrb[0].mxu0 %v1795
      %v1920 = vpop.f32.mrb[0].mxu0
      %v1921 = vadd.f32 0.0, %v1920
      %v1922 = vpop.f32.mrb[0].mxu0
      %v1923 = vpop.f32.mrb[0].mxu0
      %v1924 = vadd.f32 0.0, %v1923
      %v1925 = vpop.f32.mrb[0].mxu0
      %1926 = vmatprep.mubr.bf16.mxu0 0
      %1927 = vmatmul.mubr.bf16.gmra.mrb[0].mxu0 %v1799
      %v1928 = vpop.f32.mrb[0].mxu0
      %v1929 = vadd.f32 0.0, %v1928
      %v1930 = vpop.f32.mrb[0].mxu0
      %v1931 = vpop.f32.mrb[0].mxu0
      %v1932 = vadd.f32 0.0, %v1931
      %v1933 = vpop.f32.mrb[0].mxu0
      %1934 = vmatprep.mubr.bf16.mxu0 0
      %1935 = vmatmul.mubr.bf16.gmra.mrb[0].mxu0 %v1803
      %v1936 = vpop.f32.mrb[0].mxu0
      %v1937 = vadd.f32 0.0, %v1936
      %v1938 = vpop.f32.mrb[0].mxu0
      %v1939 = vpop.f32.mrb[0].mxu0
      %v1940 = vadd.f32 0.0, %v1939
      %v1941 = vpop.f32.mrb[0].mxu0
      %1942 = vmatprep.mubr.bf16.mxu0 0
      %1943 = vmatmul.mubr.bf16.gmra.mrb[0].mxu0 %v1807
      %v1944 = vpop.f32.mrb[0].mxu0
      %v1945 = vadd.f32 0.0, %v1944
      %v1946 = vpop.f32.mrb[0].mxu0
      %v1947 = vpop.f32.mrb[0].mxu0
      %v1948 = vadd.f32 0.0, %v1947
      %v1949 = vpop.f32.mrb[0].mxu0
      %1950 = vmatprep.mubr.bf16.mxu0 0
      %1951 = vmatmul.mubr.bf16.gmra.mrb[0].mxu0 %v1811
      %v1952 = vpop.f32.mrb[0].mxu0
      %v1953 = vadd.f32 0.0, %v1952
      %v1954 = vpop.f32.mrb[0].mxu0
      %v1955 = vpop.f32.mrb[0].mxu0
      %v1956 = vadd.f32 0.0, %v1955
      %v1957 = vpop.f32.mrb[0].mxu0
      %1958 = vmatprep.mubr.bf16.mxu0 0
      %1959 = vmatmul.mubr.bf16.gmra.mrb[0].mxu0 %v1815
      %v1960 = vpop.f32.mrb[0].mxu0
      %v1961 = vadd.f32 0.0, %v1960
      %v1962 = vpop.f32.mrb[0].mxu0
      %v1963 = vpop.f32.mrb[0].mxu0
      %v1964 = vadd.f32 0.0, %v1963
      %v1965 = vpop.f32.mrb[0].mxu0
      %1966 = vmatprep.mubr.bf16.mxu0 0
      %1967 = vmatmul.mubr.bf16.gmra.mrb[0].mxu0 %v1821
      %v1968 = vpop.f32.mrb[0].mxu0
      %v1969 = vadd.f32 0.0, %v1968
      %v1970 = vpop.f32.mrb[0].mxu0
      %v1971 = vpop.f32.mrb[0].mxu0
      %v1972 = vadd.f32 0.0, %v1971
      %v1973 = vpop.f32.mrb[0].mxu0
      %1974 = vdwg.mxu0
      %v1975 = vadd.f32 %v1751, %v1913
      %v1976 = vadd.f32 %v1752, %v1916
      %v1977 = vadd.f32 %v1753, %v1921
      %v1978 = vadd.f32 %v1754, %v1924
      %v1979 = vadd.f32 %v1755, %v1929
      %v1980 = vadd.f32 %v1756, %v1932
      %v1981 = vadd.f32 %v1757, %v1937
      %v1982 = vadd.f32 %v1758, %v1940
      %v1983 = vadd.f32 %v1759, %v1945
      %v1984 = vadd.f32 %v1760, %v1948
      %v1985 = vadd.f32 %v1761, %v1953
      %v1986 = vadd.f32 %v1762, %v1956
      %v1987 = vadd.f32 %v1763, %v1961
      %v1988 = vadd.f32 %v1764, %v1964
      %v1989 = vadd.f32 %v1765, %v1969
      %v1990 = vadd.f32 %v1766, %v1972
      %s1991 = scalar_lea.vmem %s3, 448
      %v1992 = vld [vmem:[%s1991] sm:$0xf]
      %v1993 = vld [vmem:[%s1991 + $0x4] sm:$0xf]
      %v1994 = vld [vmem:[%s1991 + $0x8] sm:$0xf]
      %v1995 = vld [vmem:[%s1991 + $0xc] sm:$0xf]
      %v1996 = vld [vmem:[%s1991 + $0x10] sm:$0xf]
      %v1997 = vld [vmem:[%s1991 + $0x14] sm:$0xf]
      %v1998 = vld [vmem:[%s1991 + $0x18] sm:$0xf]
      %v1999 = vld [vmem:[%s1991 + $0x1c] sm:$0xf]
      %v2000 = vld [vmem:[%s1991 + $0x20] sm:$0xf]
      %v2001 = vld [vmem:[%s1991 + $0x24] sm:$0xf]
      %v2002 = vld [vmem:[%s1991 + $0x28] sm:$0xf]
      %v2003 = vld [vmem:[%s1991 + $0x2c] sm:$0xf]
      %v2004 = vld [vmem:[%s1991 + $0x30] sm:$0xf]
      %v2005 = vld [vmem:[%s1991 + $0x34] sm:$0xf]
      %v2006 = vld [vmem:[%s1991 + $0x38] sm:$0xf]
      %v2007 = vld [vmem:[%s1991 + $0x3c] sm:$0xf]
      %vm2008 = vcmask 1042432
      %v2009 = vrot.slane %v481, 5
      %v2010 = vrot.slane %v482, 5
      %v2011 = vsel %vm2008, %v2009, %v2010
      %v2012 = vrot.slane %v483, 5
      %v2013 = vsel %vm2008, %v2010, %v2012
      %v2014 = vrot.slane %v484, 5
      %v2015 = vsel %vm2008, %v2012, %v2014
      %v2016 = vrot.slane %v485, 5
      %v2017 = vsel %vm2008, %v2014, %v2016
      %v2018 = vrot.slane %v486, 5
      %v2019 = vsel %vm2008, %v2016, %v2018
      %v2020 = vrot.slane %v487, 5
      %v2021 = vsel %vm2008, %v2018, %v2020
      %v2022 = vrot.slane %v488, 5
      %v2023 = vsel %vm2008, %v2020, %v2022
      %v2024 = vrot.slane %v501, 5
      %v2025 = vsel %vm2008, %v2022, %v2024
      %v2050 = vunpack.c.l.b16 %v1992
      %v2051 = vunpack.c.l.b16 %v1993
      %v2052 = vunpack.c.l.b16 %v1994
      %v2053 = vunpack.c.l.b16 %v1995
      %v2054 = vunpack.c.l.b16 %v1996
      %v2055 = vunpack.c.l.b16 %v1997
      %v2056 = vunpack.c.l.b16 %v1998
      %v2057 = vunpack.c.l.b16 %v1999
      %v2058 = vunpack.c.l.b16 %v2000
      %v2059 = vunpack.c.l.b16 %v2001
      %v2060 = vunpack.c.l.b16 %v2002
      %v2061 = vunpack.c.l.b16 %v2003
      %v2062 = vunpack.c.l.b16 %v2004
      %v2063 = vunpack.c.l.b16 %v2005
      %v2064 = vunpack.c.l.b16 %v2006
      %v2065 = vunpack.c.l.b16 %v2007
      %v2066 = vpack.c.b16 %v2051, %v2050
      %v2067 = vpack.c.b16 %v2053, %v2052
      %v2068 = vpack.c.b16 %v2055, %v2054
      %v2069 = vpack.c.b16 %v2057, %v2056
      %v2070 = vpack.c.b16 %v2059, %v2058
      %v2071 = vpack.c.b16 %v2061, %v2060
      %v2072 = vpack.c.b16 %v2063, %v2062
      %v2073 = vpack.c.b16 %v2065, %v2064
      %2082 = vmatprep.subr.bf16.mxu0 0
      %2083 = vmatpush1.bf16.msra.mxu0 %v2066
      %2084 = vmatprep.subr.bf16.mxu0 0
      %2085 = vmatpush1.bf16.msra.mxu0 %v2067
      %2086 = vmatprep.subr.bf16.mxu0 0
      %2087 = vmatpush1.bf16.msra.mxu0 %v2068
      %2088 = vmatprep.subr.bf16.mxu0 0
      %2089 = vmatpush1.bf16.msra.mxu0 %v2069
      %2090 = vmatprep.subr.bf16.mxu0 0
      %2091 = vmatpush1.bf16.msra.mxu0 %v2070
      %2092 = vmatprep.subr.bf16.mxu0 0
      %2093 = vmatpush1.bf16.msra.mxu0 %v2071
      %2094 = vmatprep.subr.bf16.mxu0 0
      %2095 = vmatpush1.bf16.msra.mxu0 %v2072
      %2096 = vmatprep.subr.bf16.mxu0 0
      %2097 = vmatpush1.bf16.msra.mxu0 %v2073
      %2098 = vmatprep.subr.bf16.mxu0 0
      %2099 = vmatpush1.bf16.msra.mxu0 0
      %2100 = vmatprep.subr.bf16.mxu0 0
      %2101 = vmatpush1.bf16.msra.mxu0 0
      %2102 = vmatprep.subr.bf16.mxu0 0
      %2103 = vmatpush1.bf16.msra.mxu0 0
      %2104 = vmatprep.subr.bf16.mxu0 0
      %2105 = vmatpush1.bf16.msra.mxu0 0
      %2106 = vmatprep.subr.bf16.mxu0 0
      %2107 = vmatpush1.bf16.msra.mxu0 0
      %2108 = vmatprep.subr.bf16.mxu0 0
      %2109 = vmatpush1.bf16.msra.mxu0 0
      %2110 = vmatprep.subr.bf16.mxu0 0
      %2111 = vmatpush1.bf16.msra.mxu0 0
      %2112 = vmatprep.subr.bf16.mxu0 0
      %2113 = vmatpush1.bf16.msra.mxu0 0
      %2114 = vmatprep.mubr.bf16.mxu0 0
      %2115 = vmatmul.mubr.bf16.gmra.mrb[0].mxu0 %v2011
      %v2116 = vpop.f32.mrb[0].mxu0
      %v2117 = vadd.f32 0.0, %v2116
      %v2118 = vpop.f32.mrb[0].mxu0
      %v2119 = vpop.f32.mrb[0].mxu0
      %v2120 = vadd.f32 0.0, %v2119
      %v2121 = vpop.f32.mrb[0].mxu0
      %2122 = vmatprep.mubr.bf16.mxu0 0
      %2123 = vmatmul.mubr.bf16.gmra.mrb[0].mxu0 %v2013
      %v2124 = vpop.f32.mrb[0].mxu0
      %v2125 = vadd.f32 0.0, %v2124
      %v2126 = vpop.f32.mrb[0].mxu0
      %v2127 = vpop.f32.mrb[0].mxu0
      %v2128 = vadd.f32 0.0, %v2127
      %v2129 = vpop.f32.mrb[0].mxu0
      %2130 = vmatprep.mubr.bf16.mxu0 0
      %2131 = vmatmul.mubr.bf16.gmra.mrb[0].mxu0 %v2015
      %v2132 = vpop.f32.mrb[0].mxu0
      %v2133 = vadd.f32 0.0, %v2132
      %v2134 = vpop.f32.mrb[0].mxu0
      %v2135 = vpop.f32.mrb[0].mxu0
      %v2136 = vadd.f32 0.0, %v2135
      %v2137 = vpop.f32.mrb[0].mxu0
      %2138 = vmatprep.mubr.bf16.mxu0 0
      %2139 = vmatmul.mubr.bf16.gmra.mrb[0].mxu0 %v2017
      %v2140 = vpop.f32.mrb[0].mxu0
      %v2141 = vadd.f32 0.0, %v2140
      %v2142 = vpop.f32.mrb[0].mxu0
      %v2143 = vpop.f32.mrb[0].mxu0
      %v2144 = vadd.f32 0.0, %v2143
      %v2145 = vpop.f32.mrb[0].mxu0
      %2146 = vmatprep.mubr.bf16.mxu0 0
      %2147 = vmatmul.mubr.bf16.gmra.mrb[0].mxu0 %v2019
      %v2148 = vpop.f32.mrb[0].mxu0
      %v2149 = vadd.f32 0.0, %v2148
      %v2150 = vpop.f32.mrb[0].mxu0
      %v2151 = vpop.f32.mrb[0].mxu0
      %v2152 = vadd.f32 0.0, %v2151
      %v2153 = vpop.f32.mrb[0].mxu0
      %2154 = vmatprep.mubr.bf16.mxu0 0
      %2155 = vmatmul.mubr.bf16.gmra.mrb[0].mxu0 %v2021
      %v2156 = vpop.f32.mrb[0].mxu0
      %v2157 = vadd.f32 0.0, %v2156
      %v2158 = vpop.f32.mrb[0].mxu0
      %v2159 = vpop.f32.mrb[0].mxu0
      %v2160 = vadd.f32 0.0, %v2159
      %v2161 = vpop.f32.mrb[0].mxu0
      %2162 = vmatprep.mubr.bf16.mxu0 0
      %2163 = vmatmul.mubr.bf16.gmra.mrb[0].mxu0 %v2023
      %v2164 = vpop.f32.mrb[0].mxu0
      %v2165 = vadd.f32 0.0, %v2164
      %v2166 = vpop.f32.mrb[0].mxu0
      %v2167 = vpop.f32.mrb[0].mxu0
      %v2168 = vadd.f32 0.0, %v2167
      %v2169 = vpop.f32.mrb[0].mxu0
      %2170 = vmatprep.mubr.bf16.mxu0 0
      %2171 = vmatmul.mubr.bf16.gmra.mrb[0].mxu0 %v2025
      %v2172 = vpop.f32.mrb[0].mxu0
      %v2173 = vadd.f32 0.0, %v2172
      %v2174 = vpop.f32.mrb[0].mxu0
      %v2175 = vpop.f32.mrb[0].mxu0
      %v2176 = vadd.f32 0.0, %v2175
      %v2177 = vpop.f32.mrb[0].mxu0
      %2178 = vdwg.mxu0
      %v2179 = vadd.f32 %v1975, %v2117
      %v2180 = vadd.f32 %v1976, %v2120
      %v2181 = vadd.f32 %v1977, %v2125
      %v2182 = vadd.f32 %v1978, %v2128
      %v2183 = vadd.f32 %v1979, %v2133
      %v2184 = vadd.f32 %v1980, %v2136
      %v2185 = vadd.f32 %v1981, %v2141
      %v2186 = vadd.f32 %v1982, %v2144
      %v2187 = vadd.f32 %v1983, %v2149
      %v2188 = vadd.f32 %v1984, %v2152
      %v2189 = vadd.f32 %v1985, %v2157
      %v2190 = vadd.f32 %v1986, %v2160
      %v2191 = vadd.f32 %v1987, %v2165
      %v2192 = vadd.f32 %v1988, %v2168
      %v2193 = vadd.f32 %v1989, %v2173
      %v2194 = vadd.f32 %v1990, %v2176
      %s2195 = scalar_lea.vmem %s3, 512
      %v2196 = vld [vmem:[%s2195] sm:$0xf]
      %v2197 = vld [vmem:[%s2195 + $0x4] sm:$0xf]
      %v2198 = vld [vmem:[%s2195 + $0x8] sm:$0xf]
      %v2199 = vld [vmem:[%s2195 + $0xc] sm:$0xf]
      %v2200 = vld [vmem:[%s2195 + $0x10] sm:$0xf]
      %v2201 = vld [vmem:[%s2195 + $0x14] sm:$0xf]
      %v2202 = vld [vmem:[%s2195 + $0x18] sm:$0xf]
      %v2203 = vld [vmem:[%s2195 + $0x1c] sm:$0xf]
      %v2204 = vld [vmem:[%s2195 + $0x20] sm:$0xf]
      %v2205 = vld [vmem:[%s2195 + $0x24] sm:$0xf]
      %v2206 = vld [vmem:[%s2195 + $0x28] sm:$0xf]
      %v2207 = vld [vmem:[%s2195 + $0x2c] sm:$0xf]
      %v2208 = vld [vmem:[%s2195 + $0x30] sm:$0xf]
      %v2209 = vld [vmem:[%s2195 + $0x34] sm:$0xf]
      %v2210 = vld [vmem:[%s2195 + $0x38] sm:$0xf]
      %v2211 = vld [vmem:[%s2195 + $0x3c] sm:$0xf]
      %vm2212 = vsmask.f32 2304
      %v2213 = vrot.slane %v716, 5
      %v2214 = vrot.slane %v719, 6
      %v2215 = vor.u32 %v2213, %v2214
      %v2216 = vrot.slane %v725, 5
      %v2217 = vrot.slane %v728, 6
      %v2218 = vor.u32 %v2216, %v2217
      %v2219 = vsel %vm2212, %v2215, %v2218
      %v2220 = vrot.slane %v734, 5
      %v2221 = vrot.slane %v737, 6
      %v2222 = vor.u32 %v2220, %v2221
      %v2223 = vsel %vm2212, %v2218, %v2222
      %v2224 = vrot.slane %v743, 5
      %v2225 = vrot.slane %v746, 6
      %v2226 = vor.u32 %v2224, %v2225
      %v2227 = vsel %vm2212, %v2222, %v2226
      %v2228 = vrot.slane %v752, 5
      %v2229 = vrot.slane %v755, 6
      %v2230 = vor.u32 %v2228, %v2229
      %v2231 = vsel %vm2212, %v2226, %v2230
      %v2232 = vrot.slane %v761, 5
      %v2233 = vrot.slane %v764, 6
      %v2234 = vor.u32 %v2232, %v2233
      %v2235 = vsel %vm2212, %v2230, %v2234
      %v2236 = vrot.slane %v770, 5
      %v2237 = vrot.slane %v773, 6
      %v2238 = vor.u32 %v2236, %v2237
      %v2239 = vsel %vm2212, %v2234, %v2238
      %v2240 = vrot.slane %v779, 5
      %v2241 = vrot.slane %v782, 6
      %v2242 = vor.u32 %v2240, %v2241
      %v2243 = vsel %vm2212, %v2238, %v2242
      %v2244 = vrot.slane %v1816, 5
      %v2245 = vrot.slane %v1594, 6
      %v2246 = vor.u32 %v2244, %v2245
      %v2247 = vsel %vm2212, %v2242, %v2246
      %v2272 = vunpack.c.l.b16 %v2196
      %v2273 = vunpack.c.l.b16 %v2197
      %v2274 = vunpack.c.l.b16 %v2198
      %v2275 = vunpack.c.l.b16 %v2199
      %v2276 = vunpack.c.l.b16 %v2200
      %v2277 = vunpack.c.l.b16 %v2201
      %v2278 = vunpack.c.l.b16 %v2202
      %v2279 = vunpack.c.l.b16 %v2203
      %v2280 = vunpack.c.l.b16 %v2204
      %v2281 = vunpack.c.l.b16 %v2205
      %v2282 = vunpack.c.l.b16 %v2206
      %v2283 = vunpack.c.l.b16 %v2207
      %v2284 = vunpack.c.l.b16 %v2208
      %v2285 = vunpack.c.l.b16 %v2209
      %v2286 = vunpack.c.l.b16 %v2210
      %v2287 = vunpack.c.l.b16 %v2211
      %v2288 = vpack.c.b16 %v2273, %v2272
      %v2289 = vpack.c.b16 %v2275, %v2274
      %v2290 = vpack.c.b16 %v2277, %v2276
      %v2291 = vpack.c.b16 %v2279, %v2278
      %v2292 = vpack.c.b16 %v2281, %v2280
      %v2293 = vpack.c.b16 %v2283, %v2282
      %v2294 = vpack.c.b16 %v2285, %v2284
      %v2295 = vpack.c.b16 %v2287, %v2286
      %2304 = vmatprep.subr.bf16.mxu0 0
      %2305 = vmatpush1.bf16.msra.mxu0 %v2288
      %2306 = vmatprep.subr.bf16.mxu0 0
      %2307 = vmatpush1.bf16.msra.mxu0 %v2289
      %2308 = vmatprep.subr.bf16.mxu0 0
      %2309 = vmatpush1.bf16.msra.mxu0 %v2290
      %2310 = vmatprep.subr.bf16.mxu0 0
      %2311 = vmatpush1.bf16.msra.mxu0 %v2291
      %2312 = vmatprep.subr.bf16.mxu0 0
      %2313 = vmatpush1.bf16.msra.mxu0 %v2292
      %2314 = vmatprep.subr.bf16.mxu0 0
      %2315 = vmatpush1.bf16.msra.mxu0 %v2293
      %2316 = vmatprep.subr.bf16.mxu0 0
      %2317 = vmatpush1.bf16.msra.mxu0 %v2294
      %2318 = vmatprep.subr.bf16.mxu0 0
      %2319 = vmatpush1.bf16.msra.mxu0 %v2295
      %2320 = vmatprep.subr.bf16.mxu0 0
      %2321 = vmatpush1.bf16.msra.mxu0 0
      %2322 = vmatprep.subr.bf16.mxu0 0
      %2323 = vmatpush1.bf16.msra.mxu0 0
      %2324 = vmatprep.subr.bf16.mxu0 0
      %2325 = vmatpush1.bf16.msra.mxu0 0
      %2326 = vmatprep.subr.bf16.mxu0 0
      %2327 = vmatpush1.bf16.msra.mxu0 0
      %2328 = vmatprep.subr.bf16.mxu0 0
      %2329 = vmatpush1.bf16.msra.mxu0 0
      %2330 = vmatprep.subr.bf16.mxu0 0
      %2331 = vmatpush1.bf16.msra.mxu0 0
      %2332 = vmatprep.subr.bf16.mxu0 0
      %2333 = vmatpush1.bf16.msra.mxu0 0
      %2334 = vmatprep.subr.bf16.mxu0 0
      %2335 = vmatpush1.bf16.msra.mxu0 0
      %2336 = vmatprep.mubr.bf16.mxu0 0
      %2337 = vmatmul.mubr.bf16.gmra.mrb[0].mxu0 %v2219
      %v2338 = vpop.f32.mrb[0].mxu0
      %v2339 = vadd.f32 0.0, %v2338
      %v2340 = vpop.f32.mrb[0].mxu0
      %v2341 = vpop.f32.mrb[0].mxu0
      %v2342 = vadd.f32 0.0, %v2341
      %v2343 = vpop.f32.mrb[0].mxu0
      %2344 = vmatprep.mubr.bf16.mxu0 0
      %2345 = vmatmul.mubr.bf16.gmra.mrb[0].mxu0 %v2223
      %v2346 = vpop.f32.mrb[0].mxu0
      %v2347 = vadd.f32 0.0, %v2346
      %v2348 = vpop.f32.mrb[0].mxu0
      %v2349 = vpop.f32.mrb[0].mxu0
      %v2350 = vadd.f32 0.0, %v2349
      %v2351 = vpop.f32.mrb[0].mxu0
      %2352 = vmatprep.mubr.bf16.mxu0 0
      %2353 = vmatmul.mubr.bf16.gmra.mrb[0].mxu0 %v2227
      %v2354 = vpop.f32.mrb[0].mxu0
      %v2355 = vadd.f32 0.0, %v2354
      %v2356 = vpop.f32.mrb[0].mxu0
      %v2357 = vpop.f32.mrb[0].mxu0
      %v2358 = vadd.f32 0.0, %v2357
      %v2359 = vpop.f32.mrb[0].mxu0
      %2360 = vmatprep.mubr.bf16.mxu0 0
      %2361 = vmatmul.mubr.bf16.gmra.mrb[0].mxu0 %v2231
      %v2362 = vpop.f32.mrb[0].mxu0
      %v2363 = vadd.f32 0.0, %v2362
      %v2364 = vpop.f32.mrb[0].mxu0
      %v2365 = vpop.f32.mrb[0].mxu0
      %v2366 = vadd.f32 0.0, %v2365
      %v2367 = vpop.f32.mrb[0].mxu0
      %2368 = vmatprep.mubr.bf16.mxu0 0
      %2369 = vmatmul.mubr.bf16.gmra.mrb[0].mxu0 %v2235
      %v2370 = vpop.f32.mrb[0].mxu0
      %v2371 = vadd.f32 0.0, %v2370
      %v2372 = vpop.f32.mrb[0].mxu0
      %v2373 = vpop.f32.mrb[0].mxu0
      %v2374 = vadd.f32 0.0, %v2373
      %v2375 = vpop.f32.mrb[0].mxu0
      %2376 = vmatprep.mubr.bf16.mxu0 0
      %2377 = vmatmul.mubr.bf16.gmra.mrb[0].mxu0 %v2239
      %v2378 = vpop.f32.mrb[0].mxu0
      %v2379 = vadd.f32 0.0, %v2378
      %v2380 = vpop.f32.mrb[0].mxu0
      %v2381 = vpop.f32.mrb[0].mxu0
      %v2382 = vadd.f32 0.0, %v2381
      %v2383 = vpop.f32.mrb[0].mxu0
      %2384 = vmatprep.mubr.bf16.mxu0 0
      %2385 = vmatmul.mubr.bf16.gmra.mrb[0].mxu0 %v2243
      %v2386 = vpop.f32.mrb[0].mxu0
      %v2387 = vadd.f32 0.0, %v2386
      %v2388 = vpop.f32.mrb[0].mxu0
      %v2389 = vpop.f32.mrb[0].mxu0
      %v2390 = vadd.f32 0.0, %v2389
      %v2391 = vpop.f32.mrb[0].mxu0
      %2392 = vmatprep.mubr.bf16.mxu0 0
      %2393 = vmatmul.mubr.bf16.gmra.mrb[0].mxu0 %v2247
      %v2394 = vpop.f32.mrb[0].mxu0
      %v2395 = vadd.f32 0.0, %v2394
      %v2396 = vpop.f32.mrb[0].mxu0
      %v2397 = vpop.f32.mrb[0].mxu0
      %v2398 = vadd.f32 0.0, %v2397
      %v2399 = vpop.f32.mrb[0].mxu0
      %2400 = vdwg.mxu0
      %v2401 = vadd.f32 %v2179, %v2339
      %v2402 = vadd.f32 %v2180, %v2342
      %v2403 = vadd.f32 %v2181, %v2347
      %v2404 = vadd.f32 %v2182, %v2350
      %v2405 = vadd.f32 %v2183, %v2355
      %v2406 = vadd.f32 %v2184, %v2358
      %v2407 = vadd.f32 %v2185, %v2363
      %v2408 = vadd.f32 %v2186, %v2366
      %v2409 = vadd.f32 %v2187, %v2371
      %v2410 = vadd.f32 %v2188, %v2374
      %v2411 = vadd.f32 %v2189, %v2379
      %v2412 = vadd.f32 %v2190, %v2382
      %v2413 = vadd.f32 %v2191, %v2387
      %v2414 = vadd.f32 %v2192, %v2390
      %v2415 = vadd.f32 %v2193, %v2395
      %v2416 = vadd.f32 %v2194, %v2398
      %v2417 = vld [vmem:[%s406] sm:$0xf]
      %v2418 = vld [vmem:[%s406 + $0x4] sm:$0xf]
      %v2419 = vld [vmem:[%s406 + $0x8] sm:$0xf]
      %v2420 = vld [vmem:[%s406 + $0xc] sm:$0xf]
      %v2421 = vld [vmem:[%s406 + $0x10] sm:$0xf]
      %v2422 = vld [vmem:[%s406 + $0x14] sm:$0xf]
      %v2423 = vld [vmem:[%s406 + $0x18] sm:$0xf]
      %v2424 = vld [vmem:[%s406 + $0x1c] sm:$0xf]
      %v2425 = vld [vmem:[%s406 + $0x20] sm:$0xf]
      %v2426 = vld [vmem:[%s406 + $0x24] sm:$0xf]
      %v2427 = vld [vmem:[%s406 + $0x28] sm:$0xf]
      %v2428 = vld [vmem:[%s406 + $0x2c] sm:$0xf]
      %v2429 = vld [vmem:[%s406 + $0x30] sm:$0xf]
      %v2430 = vld [vmem:[%s406 + $0x34] sm:$0xf]
      %v2431 = vld [vmem:[%s406 + $0x38] sm:$0xf]
      %v2432 = vld [vmem:[%s406 + $0x3c] sm:$0xf]
      %v2433 = vld [vmem:[%s5] sm:$0xf]
      %v2434 = vld [vmem:[%s5 + $0x4] sm:$0xf]
      %v2435 = vld [vmem:[%s5 + $0x8] sm:$0xf]
      %v2436 = vld [vmem:[%s5 + $0xc] sm:$0xf]
      %v2437 = vld [vmem:[%s5 + $0x10] sm:$0xf]
      %v2438 = vld [vmem:[%s5 + $0x14] sm:$0xf]
      %v2439 = vld [vmem:[%s5 + $0x18] sm:$0xf]
      %v2440 = vld [vmem:[%s5 + $0x1c] sm:$0xf]
      %v2441 = vld [vmem:[%s5 + $0x20] sm:$0xf]
      %v2442 = vld [vmem:[%s5 + $0x24] sm:$0xf]
      %v2443 = vld [vmem:[%s5 + $0x28] sm:$0xf]
      %v2444 = vld [vmem:[%s5 + $0x2c] sm:$0xf]
      %v2445 = vld [vmem:[%s5 + $0x30] sm:$0xf]
      %v2446 = vld [vmem:[%s5 + $0x34] sm:$0xf]
      %v2447 = vld [vmem:[%s5 + $0x38] sm:$0xf]
      %v2448 = vld [vmem:[%s5 + $0x3c] sm:$0xf]
      %v2465 = vunpack.c.l.b16 %v2417
      %v2466 = vunpack.c.l.b16 %v2418
      %v2467 = vunpack.c.l.b16 %v2419
      %v2468 = vunpack.c.l.b16 %v2420
      %v2469 = vunpack.c.l.b16 %v2421
      %v2470 = vunpack.c.l.b16 %v2422
      %v2471 = vunpack.c.l.b16 %v2423
      %v2472 = vunpack.c.l.b16 %v2424
      %v2473 = vunpack.c.l.b16 %v2425
      %v2474 = vunpack.c.l.b16 %v2426
      %v2475 = vunpack.c.l.b16 %v2427
      %v2476 = vunpack.c.l.b16 %v2428
      %v2477 = vunpack.c.l.b16 %v2429
      %v2478 = vunpack.c.l.b16 %v2430
      %v2479 = vunpack.c.l.b16 %v2431
      %v2480 = vunpack.c.l.b16 %v2432
      %v2481 = vpack.c.b16 %v2466, %v2465
      %v2482 = vpack.c.b16 %v2468, %v2467
      %v2483 = vpack.c.b16 %v2470, %v2469
      %v2484 = vpack.c.b16 %v2472, %v2471
      %v2485 = vpack.c.b16 %v2474, %v2473
      %v2486 = vpack.c.b16 %v2476, %v2475
      %v2487 = vpack.c.b16 %v2478, %v2477
      %v2488 = vpack.c.b16 %v2480, %v2479
      %v2513 = vunpack.c.l.b16 %v2433
      %v2514 = vunpack.c.l.b16 %v2434
      %v2515 = vunpack.c.l.b16 %v2435
      %v2516 = vunpack.c.l.b16 %v2436
      %v2517 = vunpack.c.l.b16 %v2437
      %v2518 = vunpack.c.l.b16 %v2438
      %v2519 = vunpack.c.l.b16 %v2439
      %v2520 = vunpack.c.l.b16 %v2440
      %v2521 = vunpack.c.l.b16 %v2441
      %v2522 = vunpack.c.l.b16 %v2442
      %v2523 = vunpack.c.l.b16 %v2443
      %v2524 = vunpack.c.l.b16 %v2444
      %v2525 = vunpack.c.l.b16 %v2445
      %v2526 = vunpack.c.l.b16 %v2446
      %v2527 = vunpack.c.l.b16 %v2447
      %v2528 = vunpack.c.l.b16 %v2448
      %v2529 = vpack.c.b16 %v2514, %v2513
      %v2530 = vpack.c.b16 %v2516, %v2515
      %v2531 = vpack.c.b16 %v2518, %v2517
      %v2532 = vpack.c.b16 %v2520, %v2519
      %v2533 = vpack.c.b16 %v2522, %v2521
      %v2534 = vpack.c.b16 %v2524, %v2523
      %v2535 = vpack.c.b16 %v2526, %v2525
      %v2536 = vpack.c.b16 %v2528, %v2527
      %2545 = vmatprep.subr.bf16.mxu0 0
      %2546 = vmatpush1.bf16.msra.mxu0 %v2529
      %2547 = vmatprep.subr.bf16.mxu0 0
      %2548 = vmatpush1.bf16.msra.mxu0 %v2530
      %2549 = vmatprep.subr.bf16.mxu0 0
      %2550 = vmatpush1.bf16.msra.mxu0 %v2531
      %2551 = vmatprep.subr.bf16.mxu0 0
      %2552 = vmatpush1.bf16.msra.mxu0 %v2532
      %2553 = vmatprep.subr.bf16.mxu0 0
      %2554 = vmatpush1.bf16.msra.mxu0 %v2533
      %2555 = vmatprep.subr.bf16.mxu0 0
      %2556 = vmatpush1.bf16.msra.mxu0 %v2534
      %2557 = vmatprep.subr.bf16.mxu0 0
      %2558 = vmatpush1.bf16.msra.mxu0 %v2535
      %2559 = vmatprep.subr.bf16.mxu0 0
      %2560 = vmatpush1.bf16.msra.mxu0 %v2536
      %2561 = vmatprep.subr.bf16.mxu0 0
      %2562 = vmatpush1.bf16.msra.mxu0 0
      %2563 = vmatprep.subr.bf16.mxu0 0
      %2564 = vmatpush1.bf16.msra.mxu0 0
      %2565 = vmatprep.subr.bf16.mxu0 0
      %2566 = vmatpush1.bf16.msra.mxu0 0
      %2567 = vmatprep.subr.bf16.mxu0 0
      %2568 = vmatpush1.bf16.msra.mxu0 0
      %2569 = vmatprep.subr.bf16.mxu0 0
      %2570 = vmatpush1.bf16.msra.mxu0 0
      %2571 = vmatprep.subr.bf16.mxu0 0
      %2572 = vmatpush1.bf16.msra.mxu0 0
      %2573 = vmatprep.subr.bf16.mxu0 0
      %2574 = vmatpush1.bf16.msra.mxu0 0
      %2575 = vmatprep.subr.bf16.mxu0 0
      %2576 = vmatpush1.bf16.msra.mxu0 0
      %2577 = vmatprep.mubr.bf16.mxu0 0
      %2578 = vmatmul.mubr.bf16.gmra.mrb[0].mxu0 %v2481
      %v2579 = vpop.f32.mrb[0].mxu0
      %v2580 = vadd.f32 0.0, %v2579
      %v2581 = vpop.f32.mrb[0].mxu0
      %v2582 = vpop.f32.mrb[0].mxu0
      %v2583 = vadd.f32 0.0, %v2582
      %v2584 = vpop.f32.mrb[0].mxu0
      %2585 = vmatprep.mubr.bf16.mxu0 0
      %2586 = vmatmul.mubr.bf16.gmra.mrb[0].mxu0 %v2482
      %v2587 = vpop.f32.mrb[0].mxu0
      %v2588 = vadd.f32 0.0, %v2587
      %v2589 = vpop.f32.mrb[0].mxu0
      %v2590 = vpop.f32.mrb[0].mxu0
      %v2591 = vadd.f32 0.0, %v2590
      %v2592 = vpop.f32.mrb[0].mxu0
      %2593 = vmatprep.mubr.bf16.mxu0 0
      %2594 = vmatmul.mubr.bf16.gmra.mrb[0].mxu0 %v2483
      %v2595 = vpop.f32.mrb[0].mxu0
      %v2596 = vadd.f32 0.0, %v2595
      %v2597 = vpop.f32.mrb[0].mxu0
      %v2598 = vpop.f32.mrb[0].mxu0
      %v2599 = vadd.f32 0.0, %v2598
      %v2600 = vpop.f32.mrb[0].mxu0
      %2601 = vmatprep.mubr.bf16.mxu0 0
      %2602 = vmatmul.mubr.bf16.gmra.mrb[0].mxu0 %v2484
      %v2603 = vpop.f32.mrb[0].mxu0
      %v2604 = vadd.f32 0.0, %v2603
      %v2605 = vpop.f32.mrb[0].mxu0
      %v2606 = vpop.f32.mrb[0].mxu0
      %v2607 = vadd.f32 0.0, %v2606
      %v2608 = vpop.f32.mrb[0].mxu0
      %2609 = vmatprep.mubr.bf16.mxu0 0
      %2610 = vmatmul.mubr.bf16.gmra.mrb[0].mxu0 %v2485
      %v2611 = vpop.f32.mrb[0].mxu0
      %v2612 = vadd.f32 0.0, %v2611
      %v2613 = vpop.f32.mrb[0].mxu0
      %v2614 = vpop.f32.mrb[0].mxu0
      %v2615 = vadd.f32 0.0, %v2614
      %v2616 = vpop.f32.mrb[0].mxu0
      %2617 = vmatprep.mubr.bf16.mxu0 0
      %2618 = vmatmul.mubr.bf16.gmra.mrb[0].mxu0 %v2486
      %v2619 = vpop.f32.mrb[0].mxu0
      %v2620 = vadd.f32 0.0, %v2619
      %v2621 = vpop.f32.mrb[0].mxu0
      %v2622 = vpop.f32.mrb[0].mxu0
      %v2623 = vadd.f32 0.0, %v2622
      %v2624 = vpop.f32.mrb[0].mxu0
      %2625 = vmatprep.mubr.bf16.mxu0 0
      %2626 = vmatmul.mubr.bf16.gmra.mrb[0].mxu0 %v2487
      %v2627 = vpop.f32.mrb[0].mxu0
      %v2628 = vadd.f32 0.0, %v2627
      %v2629 = vpop.f32.mrb[0].mxu0
      %v2630 = vpop.f32.mrb[0].mxu0
      %v2631 = vadd.f32 0.0, %v2630
      %v2632 = vpop.f32.mrb[0].mxu0
      %2633 = vmatprep.mubr.bf16.mxu0 0
      %2634 = vmatmul.mubr.bf16.gmra.mrb[0].mxu0 %v2488
      %v2635 = vpop.f32.mrb[0].mxu0
      %v2636 = vadd.f32 0.0, %v2635
      %v2637 = vpop.f32.mrb[0].mxu0
      %v2638 = vpop.f32.mrb[0].mxu0
      %v2639 = vadd.f32 0.0, %v2638
      %v2640 = vpop.f32.mrb[0].mxu0
      %2641 = vdwg.mxu0
      %v2642 = vadd.f32 %v2401, %v2580
      %v2643 = vadd.f32 %v2402, %v2583
      %v2644 = vadd.f32 %v2403, %v2588
      %v2645 = vadd.f32 %v2404, %v2591
      %v2646 = vadd.f32 %v2405, %v2596
      %v2647 = vadd.f32 %v2406, %v2599
      %v2648 = vadd.f32 %v2407, %v2604
      %v2649 = vadd.f32 %v2408, %v2607
      %v2650 = vadd.f32 %v2409, %v2612
      %v2651 = vadd.f32 %v2410, %v2615
      %v2652 = vadd.f32 %v2411, %v2620
      %v2653 = vadd.f32 %v2412, %v2623
      %v2654 = vadd.f32 %v2413, %v2628
      %v2655 = vadd.f32 %v2414, %v2631
      %v2656 = vadd.f32 %v2415, %v2636
      %v2657 = vadd.f32 %v2416, %v2639
      %v2658 = vld [vmem:[%s6] sm:$0x1]
      %v2660 = vlaneseq
      %v2661 = vshrl.u32 %v2660, 7
      %v2662 = vsub.s32 0, %v2661
      %v2663 = vrot.slane %v2658, %v2662
      %v2665 = vadd.f32 %v2642, %v2663
      %v2666 = vadd.f32 %v2643, %v2663
      %v2667 = vadd.f32 %v2644, %v2663
      %v2668 = vadd.f32 %v2645, %v2663
      %v2669 = vadd.f32 %v2646, %v2663
      %v2670 = vadd.f32 %v2647, %v2663
      %v2671 = vadd.f32 %v2648, %v2663
      %v2672 = vadd.f32 %v2649, %v2663
      %v2673 = vadd.f32 %v2650, %v2663
      %v2674 = vadd.f32 %v2651, %v2663
      %v2675 = vadd.f32 %v2652, %v2663
      %v2676 = vadd.f32 %v2653, %v2663
      %v2677 = vadd.f32 %v2654, %v2663
      %v2678 = vadd.f32 %v2655, %v2663
      %v2679 = vadd.f32 %v2656, %v2663
      %v2680 = vadd.f32 %v2657, %v2663
      %v2681 = vmax.f32 %v2665, 0.0
      %v2682 = vmax.f32 %v2666, 0.0
      %v2683 = vmax.f32 %v2667, 0.0
      %v2684 = vmax.f32 %v2668, 0.0
      %v2685 = vmax.f32 %v2669, 0.0
      %v2686 = vmax.f32 %v2670, 0.0
      %v2687 = vmax.f32 %v2671, 0.0
      %v2688 = vmax.f32 %v2672, 0.0
      %v2689 = vmax.f32 %v2673, 0.0
      %v2690 = vmax.f32 %v2674, 0.0
      %v2691 = vmax.f32 %v2675, 0.0
      %v2692 = vmax.f32 %v2676, 0.0
      %v2693 = vmax.f32 %v2677, 0.0
      %v2694 = vmax.f32 %v2678, 0.0
      %v2695 = vmax.f32 %v2679, 0.0
      %v2696 = vmax.f32 %v2680, 0.0
      %v2697 = vld [vmem:[%s413] sm:$0xff]
      %v2698 = vld [vmem:[%s413 + $0x8] sm:$0xff]
      %v2699 = vld [vmem:[%s413 + $0x10] sm:$0xff]
      %v2700 = vld [vmem:[%s413 + $0x18] sm:$0xff]
      %v2701 = vld [vmem:[%s413 + $0x20] sm:$0xff]
      %v2702 = vld [vmem:[%s413 + $0x28] sm:$0xff]
      %v2703 = vld [vmem:[%s413 + $0x30] sm:$0xff]
      %v2704 = vld [vmem:[%s413 + $0x38] sm:$0xff]
      %v2705 = vld [vmem:[%s413 + $0x40] sm:$0xff]
      %v2706 = vld [vmem:[%s413 + $0x48] sm:$0xff]
      %v2707 = vld [vmem:[%s413 + $0x50] sm:$0xff]
      %v2708 = vld [vmem:[%s413 + $0x58] sm:$0xff]
      %v2709 = vld [vmem:[%s413 + $0x60] sm:$0xff]
      %v2710 = vld [vmem:[%s413 + $0x68] sm:$0xff]
      %v2711 = vld [vmem:[%s413 + $0x70] sm:$0xff]
      %v2712 = vld [vmem:[%s413 + $0x78] sm:$0xff]
      %2714 = vset.pattern.permute.xlu0 0
      %2715 = vperm.xlu0 %2714, %v2697
      %v2716 = vpop.permute.xlu0 %2715
      %2719 = vset.pattern.permute.xlu0 0
      %2720 = vperm.xlu0 %2719, %v2698
      %v2721 = vpop.permute.xlu0 %2720
      %2724 = vset.pattern.permute.xlu0 0
      %2725 = vperm.xlu0 %2724, %v2699
      %v2726 = vpop.permute.xlu0 %2725
      %2729 = vset.pattern.permute.xlu0 0
      %2730 = vperm.xlu0 %2729, %v2700
      %v2731 = vpop.permute.xlu0 %2730
      %2734 = vset.pattern.permute.xlu0 0
      %2735 = vperm.xlu0 %2734, %v2701
      %v2736 = vpop.permute.xlu0 %2735
      %2739 = vset.pattern.permute.xlu0 0
      %2740 = vperm.xlu0 %2739, %v2702
      %v2741 = vpop.permute.xlu0 %2740
      %2744 = vset.pattern.permute.xlu0 0
      %2745 = vperm.xlu0 %2744, %v2703
      %v2746 = vpop.permute.xlu0 %2745
      %2749 = vset.pattern.permute.xlu0 0
      %2750 = vperm.xlu0 %2749, %v2704
      %v2751 = vpop.permute.xlu0 %2750
      %2754 = vset.pattern.permute.xlu0 0
      %2755 = vperm.xlu0 %2754, %v2705
      %v2756 = vpop.permute.xlu0 %2755
      %2759 = vset.pattern.permute.xlu0 0
      %2760 = vperm.xlu0 %2759, %v2706
      %v2761 = vpop.permute.xlu0 %2760
      %2764 = vset.pattern.permute.xlu0 0
      %2765 = vperm.xlu0 %2764, %v2707
      %v2766 = vpop.permute.xlu0 %2765
      %2769 = vset.pattern.permute.xlu0 0
      %2770 = vperm.xlu0 %2769, %v2708
      %v2771 = vpop.permute.xlu0 %2770
      %2774 = vset.pattern.permute.xlu0 0
      %2775 = vperm.xlu0 %2774, %v2709
      %v2776 = vpop.permute.xlu0 %2775
      %2779 = vset.pattern.permute.xlu0 0
      %2780 = vperm.xlu0 %2779, %v2710
      %v2781 = vpop.permute.xlu0 %2780
      %2784 = vset.pattern.permute.xlu0 0
      %2785 = vperm.xlu0 %2784, %v2711
      %v2786 = vpop.permute.xlu0 %2785
      %2789 = vset.pattern.permute.xlu0 0
      %2790 = vperm.xlu0 %2789, %v2712
      %v2791 = vpop.permute.xlu0 %2790
      %v2793 = vmul.f32 %v2681, %v2716
      %v2794 = vmul.f32 %v2682, %v2721
      %v2795 = vmul.f32 %v2683, %v2726
      %v2796 = vmul.f32 %v2684, %v2731
      %v2797 = vmul.f32 %v2685, %v2736
      %v2798 = vmul.f32 %v2686, %v2741
      %v2799 = vmul.f32 %v2687, %v2746
      %v2800 = vmul.f32 %v2688, %v2751
      %v2801 = vmul.f32 %v2689, %v2756
      %v2802 = vmul.f32 %v2690, %v2761
      %v2803 = vmul.f32 %v2691, %v2766
      %v2804 = vmul.f32 %v2692, %v2771
      %v2805 = vmul.f32 %v2693, %v2776
      %v2806 = vmul.f32 %v2694, %v2781
      %v2807 = vmul.f32 %v2695, %v2786
      %v2808 = vmul.f32 %v2696, %v2791
      %2809 = vst [vmem:[%s420] sm:$0xff] %v2793
      %2810 = vst [vmem:[%s420 + $0x8] sm:$0xff] %v2794
      %2811 = vst [vmem:[%s420 + $0x10] sm:$0xff] %v2795
      %2812 = vst [vmem:[%s420 + $0x18] sm:$0xff] %v2796
      %2813 = vst [vmem:[%s420 + $0x20] sm:$0xff] %v2797
      %2814 = vst [vmem:[%s420 + $0x28] sm:$0xff] %v2798
      %2815 = vst [vmem:[%s420 + $0x30] sm:$0xff] %v2799
      %2816 = vst [vmem:[%s420 + $0x38] sm:$0xff] %v2800
      %2817 = vst [vmem:[%s420 + $0x40] sm:$0xff] %v2801
      %2818 = vst [vmem:[%s420 + $0x48] sm:$0xff] %v2802
      %2819 = vst [vmem:[%s420 + $0x50] sm:$0xff] %v2803
      %2820 = vst [vmem:[%s420 + $0x58] sm:$0xff] %v2804
      %2821 = vst [vmem:[%s420 + $0x60] sm:$0xff] %v2805
      %2822 = vst [vmem:[%s420 + $0x68] sm:$0xff] %v2806
      %2823 = vst [vmem:[%s420 + $0x70] sm:$0xff] %v2807
      %2824 = vst [vmem:[%s420 + $0x78] sm:$0xff] %v2808
      %s2825 = sadd.s32 %s19, 1
      %s2826 = smul.u32 16, %s2825
      %p2827 = scmp.lt.s32.totalorder %s2826, 63
      %s2828 = scalar_select %p2827, %s2826, 63
      %s2829 = smul.addr %s2828, 8
      %s2830 = scalar_lea.vmem %s8, %s2829
      // Predicated region
      $region53: #{residual_block_forward.3} parent=51 // pred_check
        %p2831 = pneg %p238
      $region54: #{residual_block_forward.3} parent=51 // pred_check_branch
        %2833 = sbr.rel (%p2831) target = $region56
      $region55: #{residual_block_forward.3} parent=51 // pred_region
        %s2834 = sadd.s32 %s19, 1
        %s2835 = smul.u32 16, %s2834
      $region56: #{residual_block_forward.3} parent=51 // pred_fallthru
        _
    $region52: #{residual_block_forward.3} parent=5 // pred_fallthru
      _
    %p2836 = scmp.le.s32.totalorder 2, %s14
    // Predicated region
    $region57: #{residual_block_forward.3} parent=5 // pred_check
      %p2837 = pneg %p2836
    $region58: #{residual_block_forward.3} parent=5 // pred_check_branch
      %2839 = sbr.rel (%p2837) target = $region60
    $region59: #{residual_block_forward.3} parent=5 // pred_region
      %s2840 = ssub.s32 %s14, 2
      // Predicated region
      $region61: #{residual_block_forward.3} parent=59 // pred_check
        %p2841 = pneg %p244
      $region62: #{residual_block_forward.3} parent=59 // pred_check_branch
        %2843 = sbr.rel (%p2841) target = $region64
      $region63: #{residual_block_forward.3} parent=59 // pred_region
        %s2844 = sadd.s32 %s20, 1
        %s2845 = smul.u32 16, %s2844
        %p2846 = scmp.lt.s32.totalorder %s2845, 63
        %s2847 = scalar_select %p2846, %s2845, 63
        %s2848 = smul.addr %s2847, 8
        %s2849 = scalar_lea.vmem %s8, %s2848
      $region64: #{residual_block_forward.3} parent=59 // pred_fallthru
        _
    $region60: #{residual_block_forward.3} parent=5 // pred_fallthru
      _
  $region6: #{residual_block_forward.3} parent=0 // loop_footer
    %s18 = sadd.s32 1, %s14
  $region7: #{residual_block_forward.3} parent=0 // loop_footer_branch
    %13 = sbr.rel target = $region3
  $region8: #{residual_block_forward.3} parent=0 // loop_exit
    _

</llo_original>
